<compile_context>
chip_gen: v5e
topology: v5e:2x2
jax: 0.10.0
libtpu: 0.0.40
codegen_flags: <defaults>
</compile_context>

<pallas_src>
import math

import jax
import jax.numpy as jnp
from jax import lax
from jax.experimental import pallas as pl
from jax.experimental.pallas import tpu as pltpu

_PAD = 8  # sublane-aligned conv-tail carry rows (supports d_conv <= 9)


def _sigmoid_ref(x):
    return 1.0 / (1.0 + jnp.exp(-x))


def _ksigmoid(x):
    # kernel-side sigmoid: approx reciprocal runs on the EUP slot
    return pl.reciprocal(1.0 + jnp.exp(-x), approx=True)


def _softplus(x):
    return jnp.where(x > 20.0, x, jnp.log1p(jnp.exp(x)))


def _make_kernel(d_inner, d_state, dt_rank, K, d_tile):
    n_tiles = d_inner // d_tile
    f32, bf16 = jnp.float32, jnp.bfloat16

    def kernel(h_ref, w_in_ref, convw_ref, convb_ref, w_xp_ref, wdtp_ref,
               dtb_ref, alogT_ref, d_ref, wout_ref,
               out_ref,
               hstate_s, xbuf_s, dA_s, dBx_s, hall_s):
        TL = h_ref.shape[0]
        lchunk = pl.program_id(1)

        # ---- reset carried state at the start of every batch element --------
        @pl.when(lchunk == 0)
        def _():
            hstate_s[...] = jnp.zeros_like(hstate_s)
            xbuf_s[0:_PAD, :] = jnp.zeros((_PAD, d_inner), f32)

        # ---- fused in_proj: (TL, d_model) x (d_model, 2*d_inner) on the MXU --
        xz = jnp.dot(h_ref[...].astype(bf16), w_in_ref[...],
                     preferred_element_type=f32)
        x = xz[:, :d_inner]
        z = xz[:, d_inner:]

        # ---- causal depthwise conv1d (+bias) + SiLU --------------------------
        # stage x into the persistent buffer (rows 0:_PAD hold the previous
        # chunk's tail); read the K shifted windows straight from it.
        xbuf_s[_PAD:_PAD + TL, :] = x
        base = _PAD - (K - 1)
        xc = convb_ref[...] + xbuf_s[base:base + TL, :] * convw_ref[0:1, :]
        for k in range(1, K):
            xc = xc + xbuf_s[base + k:base + k + TL, :] * convw_ref[k:k + 1, :]
        xconv = xc * _ksigmoid(xc)                               # SiLU
        xbuf_s[0:_PAD, :] = xbuf_s[TL:TL + _PAD, :]              # carry tail

        # ---- fused x_proj -> (dt_lowrank | B | C); dt_proj + softplus -------
        xdbl = jnp.dot(xconv.astype(bf16), w_xp_ref[...],
                       preferred_element_type=f32)
        dt_lr = xdbl[:, :dt_rank]
        Bmat = xdbl[:, dt_rank:dt_rank + d_state]                # (TL, n)
        Cmat = xdbl[:, dt_rank + d_state:dt_rank + 2 * d_state]  # (TL, n)
        delta = _softplus(jnp.dot(dt_lr.astype(bf16), wdtp_ref[...],
                                  preferred_element_type=f32) + dtb_ref[...])
        a_t = -jnp.exp(alogT_ref[...])                           # (n, d_inner)
        dxd = delta * xconv                                      # (TL, d_inner)

        # ---- selective scan, tiled over d_inner (scratch is one tile wide) --
        for j in range(n_tiles):
            sl = slice(j * d_tile, (j + 1) * d_tile)

            # vectorized precompute for the whole chunk, off the serial path
            dA_s[...] = jnp.exp(delta[:, None, sl] * a_t[None, :, sl])
            dBx_s[...] = (Bmat[:, :, None] * dxd[:, None, sl]).astype(bf16)

            # serial recurrence: f32 accumulator + FMA, bf16 scratch traffic
            def step(t, h):
                h = dA_s[t] * h + dBx_s[t].astype(f32)
                hall_s[t] = h.astype(bf16)
                return h

            hstate_s[:, sl] = lax.fori_loop(0, TL, step, hstate_s[:, sl],
                                            unroll=8)

            # y_t = sum_n C[t,n] * h_t[n,:]  -- d_state plain VPU FMAs
            y = Cmat[:, 0:1] * hall_s[:, 0, :].astype(f32)
            for n in range(1, d_state):
                y = y + Cmat[:, n:n + 1] * hall_s[:, n, :].astype(f32)

            # D skip, SiLU(z) gating, out_proj partial sum for this tile
            y = y + d_ref[:, sl] * xconv[:, sl]
            zt = z[:, sl]
            y = y * (zt * _ksigmoid(zt))
            contrib = jnp.dot(y.astype(bf16), wout_ref[sl, :],
                              preferred_element_type=f32)
            if j == 0:
                out_ref[...] = contrib.astype(out_ref.dtype)
            else:
                out_ref[...] = out_ref[...] + contrib.astype(out_ref.dtype)

    return kernel


def _prefers_256_mxu():
    try:
        kind = jax.devices()[0].device_kind.lower()
    except Exception:
        return False
    return any(t in kind for t in ("v6", "v7", "7x", "trillium", "ironwood"))


def _pick_chunk(L, pref):
    tl = max(8, min(pref, L) - (min(pref, L) % 8))
    while tl > 8 and L % tl != 0:
        tl -= 8
    return tl


def _pick_dtile(d_inner, TL, d_state, budget_bytes=8 << 20):
    # cap the scan scratch (dA f32 + dBx/hall bf16) at ~budget_bytes
    per_lane = TL * d_state * (4 + 2 + 2)
    cap = max(1, budget_bytes // per_lane)
    if d_inner <= 128 or cap >= d_inner:
        return d_inner
    dt = max(128, (min(cap, d_inner) // 128) * 128)
    while dt > 128 and d_inner % dt != 0:
        dt -= 128
    return dt if d_inner % dt == 0 else d_inner


def mamba_forward(hidden, params, *, chunk=None, d_tile=None):
    B, L, d_model = hidden.shape
    (w_in_t, conv_w, conv_b, w_xp_t, wdtp_t, dtb, a_log_t, d_vec, wout_t) = params
    d_inner = wdtp_t.shape[1]
    d_state = a_log_t.shape[0]
    dt_rank = wdtp_t.shape[0]
    d_conv = conv_w.shape[0]

    TL = chunk if chunk is not None else _pick_chunk(
        L, 256 if _prefers_256_mxu() else 128)
    assert TL >= 8 and TL % 8 == 0 and L % TL == 0, \
        "seqlen must split into 8-aligned chunks"
    assert d_conv <= _PAD + 1, "conv tail carry holds 8 rows"
    n_chunks = L // TL

    d_tile = d_tile if d_tile is not None else _pick_dtile(d_inner, TL, d_state)
    assert d_inner % d_tile == 0

    weights = (w_in_t, conv_w, conv_b, w_xp_t, wdtp_t, dtb, a_log_t, d_vec, wout_t)

    # constant weights: index_map never changes -> single-buffer them in VMEM
    def const_spec(arr):
        nd = arr.ndim
        return pl.BlockSpec(arr.shape, lambda b, l, _nd=nd: (0,) * _nd,
                            pipeline_mode=pl.Buffered(1))

    grid_spec = pltpu.PrefetchScalarGridSpec(
        num_scalar_prefetch=0,
        grid=(B, n_chunks),
        in_specs=[pl.BlockSpec((None, TL, d_model), lambda b, l: (b, l, 0))]
                 + [const_spec(p) for p in weights],
        out_specs=pl.BlockSpec((None, TL, d_model), lambda b, l: (b, l, 0)),
        scratch_shapes=[
            pltpu.VMEM((d_state, d_inner), jnp.float32),      # carried SSM state h
            pltpu.VMEM((_PAD + TL, d_inner), jnp.float32),    # staged x + conv tail
            pltpu.VMEM((TL, d_state, d_tile), jnp.float32),   # dA   (one d_inner tile)
            pltpu.VMEM((TL, d_state, d_tile), jnp.bfloat16),  # dBx  (one d_inner tile)
            pltpu.VMEM((TL, d_state, d_tile), jnp.bfloat16),  # h_t  (one d_inner tile)
        ],
    )

    # ---- VMEM budget from actual footprint (weights single-buffered) --------
    bytes_weights = sum(int(p.size) * p.dtype.itemsize for p in weights)
    bytes_io = 2 * 2 * TL * d_model * 4                       # in+out blocks, 2x buffered
    bytes_scratch = (d_state * d_inner * 4 + (_PAD + TL) * d_inner * 4
                     + TL * d_state * d_tile * (4 + 2 + 2))
    bytes_tmp = 8 * TL * d_inner * 4                          # xz/xconv/delta/z temporaries
    vmem_need = bytes_weights + bytes_io + bytes_scratch + bytes_tmp + (4 << 20)
    try:
        vmem_cap = int(pltpu.get_tpu_info().vmem_capacity_bytes)
    except Exception:
        vmem_cap = 128 << 20
    vmem_limit = int(max(min(vmem_need, (vmem_cap * 3) // 4), 32 << 20))

    flops_per_token = (2 * d_model * 2 * d_inner                   # in_proj
                       + 2 * d_conv * d_inner                      # conv
                       + 2 * d_inner * (dt_rank + 2 * d_state)     # x_proj
                       + 2 * dt_rank * d_inner                     # dt_proj
                       + 8 * d_state * d_inner                     # selective scan
                       + 10 * d_inner                              # gating / skip
                       + 2 * d_inner * d_model)                    # out_proj
    transc_per_token = d_state * d_inner + 8 * d_inner             # dA exp, softplus, sigmoids
    cost = pl.CostEstimate(
        flops=int(B * L * flops_per_token),
        transcendentals=int(B * L * transc_per_token),
        bytes_accessed=int(hidden.size * hidden.dtype.itemsize
                           + B * L * d_model * 4
                           + sum(int(p.size) * p.dtype.itemsize for p in weights)),
    )

    kernel = _make_kernel(d_inner, d_state, dt_rank, d_conv, d_tile)

    return pl.pallas_call(
        kernel,
        out_shape=jax.ShapeDtypeStruct((B, L, d_model), jnp.float32),
        grid_spec=grid_spec,
        compiler_params=pltpu.CompilerParams(
            dimension_semantics=("parallel", "arbitrary"),
            vmem_limit_bytes=vmem_limit),
        cost_estimate=cost,
    )(hidden, *weights)


def mamba_reference(hidden, params):
    """Pure-JAX f32 (HIGHEST precision) reference of the same math."""
    (w_in_t, conv_w, conv_b, w_xp_t, wdtp_t, dtb, a_log_t, d_vec, wout_t) = params
    f32 = jnp.float32
    hp = lax.Precision.HIGHEST
    B, L, _ = hidden.shape
    d_conv = conv_w.shape[0]
    d_inner = wdtp_t.shape[1]
    d_state = a_log_t.shape[0]
    dt_rank = wdtp_t.shape[0]

    w_in = w_in_t.astype(f32)
    w_xp = w_xp_t.astype(f32)
    wdtp = wdtp_t.astype(f32)
    wout = wout_t.astype(f32)

    xz = jnp.dot(hidden, w_in, precision=hp)
    x = xz[..., :d_inner]
    z = xz[..., d_inner:]
    xp = jnp.pad(x, ((0, 0), (d_conv - 1, 0), (0, 0)))
    xconv = sum(xp[:, k:k + L, :] * conv_w[k][None, None, :] for k in range(d_conv))
    xconv = xconv + conv_b[None]
    xconv = xconv * _sigmoid_ref(xconv)
    xdbl = jnp.dot(xconv, w_xp, precision=hp)
    dt_lr = xdbl[..., :dt_rank]
    Bc = xdbl[..., dt_rank:dt_rank + d_state]
    Cc = xdbl[..., dt_rank + d_state:]
    delta = _softplus(jnp.dot(dt_lr, wdtp, precision=hp) + dtb[None])
    A_t = -jnp.exp(a_log_t)                                        # (n, e)
    dA = jnp.exp(delta[:, :, None, :] * A_t[None, None])           # (B, L, n, e)
    dBx = Bc[:, :, :, None] * (delta * xconv)[:, :, None, :]       # (B, L, n, e)

    def step(h, inp):
        dA_t, dBx_t, c_t = inp
        h = dA_t * h + dBx_t
        y_t = jnp.einsum('bn,bne->be', c_t, h, precision=hp)
        return h, y_t

    h0 = jnp.zeros((B, d_state, d_inner), f32)
    _, ys = lax.scan(step, h0, (dA.transpose(1, 0, 2, 3),
                                dBx.transpose(1, 0, 2, 3),
                                Cc.transpose(1, 0, 2)))
    y = ys.transpose(1, 0, 2)
    y = y + d_vec[None] * xconv
    y = y * (z * _sigmoid_ref(z))
    return jnp.dot(y, wout, precision=hp)


def init_params(key, d_model, d_state=16, d_conv=4, expand=2,
                dt_min=0.001, dt_max=0.1, dt_init_floor=1e-4):
    """Deterministic synthetic parameters matching the module's shapes/init style."""
    d_inner = int(expand * d_model)
    dt_rank = math.ceil(d_model / 16)
    ks = jax.random.split(key, 7)

    k_in = 1.0 / math.sqrt(d_model)
    w_in = jax.random.uniform(ks[0], (2 * d_inner, d_model), jnp.float32, -k_in, k_in)

    k_conv = 1.0 / math.sqrt(d_conv)
    conv_weight = jax.random.uniform(ks[1], (d_inner, 1, d_conv), jnp.float32,
                                     -k_conv, k_conv)
    conv_bias = jax.random.uniform(ks[2], (d_inner,), jnp.float32, -k_conv, k_conv)

    k_x = 1.0 / math.sqrt(d_inner)
    w_xproj = jax.random.uniform(ks[3], (dt_rank + 2 * d_state, d_inner), jnp.float32,
                                 -k_x, k_x)

    dt_init_std = dt_rank ** -0.5
    w_dtproj = jax.random.uniform(ks[4], (d_inner, dt_rank), jnp.float32,
                                  -dt_init_std, dt_init_std)
    dt = jnp.exp(jax.random.uniform(ks[5], (d_inner,), jnp.float32)
                 * (math.log(dt_max) - math.log(dt_min)) + math.log(dt_min))
    dt = jnp.maximum(dt, dt_init_floor)
    inv_dt = dt + jnp.log(-jnp.expm1(-dt))                         # dt_proj.bias

    a_log = jnp.log(jnp.tile(jnp.arange(1, d_state + 1, dtype=jnp.float32)[None, :],
                             (d_inner, 1)))                        # (d_inner, d_state)
    d_param = jnp.ones((d_inner,), jnp.float32)

    k_out = 1.0 / math.sqrt(d_inner)
    w_out = jax.random.uniform(ks[6], (d_model, d_inner), jnp.float32, -k_out, k_out)

    # kernel-friendly pack: pre-transposed, projections fused, matmul weights bf16
    params = (
        jnp.asarray(w_in.T, jnp.bfloat16),             # w_in_t  (d_model, 2*d_inner) [x | z]
        jnp.asarray(conv_weight[:, 0, :].T),           # conv_w  (d_conv, d_inner)
        conv_bias[None, :],                            # conv_b  (1, d_inner)
        jnp.asarray(w_xproj.T, jnp.bfloat16),          # w_xp_t  (d_inner, dt_rank+2*d_state)
        jnp.asarray(w_dtproj.T, jnp.bfloat16),         # wdtp_t  (dt_rank, d_inner)
        inv_dt[None, :],                               # dt bias (1, d_inner)
        jnp.asarray(a_log.T),                          # A_log^T (d_state, d_inner)
        d_param[None, :],                              # D       (1, d_inner)
        jnp.asarray(w_out.T, jnp.bfloat16),            # wout_t  (d_inner, d_model)
    )
    return params


if __name__ == "__main__":
    # d_inner = 256 with d_tile = 128 -> exercises the in-kernel d_inner tiling
    # (2 tiles, lane-aligned) and chunk = 8 < L -> exercises the carried state.
    d_model, d_state, d_conv, expand = 128, 16, 4, 2
    batch, seqlen, chunk = 2, 16, 8

    key = jax.random.PRNGKey(0)
    k_param, k_inp = jax.random.split(key)
    params = init_params(k_param, d_model, d_state, d_conv, expand)
    hidden = jax.random.normal(k_inp, (batch, seqlen, d_model), jnp.float32)

    out = jax.block_until_ready(mamba_forward(hidden, params, chunk=chunk, d_tile=128))
    assert out.shape == (batch, seqlen, d_model)

    ref = mamba_reference(hidden, params)
    max_err = float(jnp.max(jnp.abs(out - ref)))
    rel_err = float(jnp.linalg.norm(out - ref) / (jnp.linalg.norm(ref) + 1e-12))
    if not (rel_err < 3e-2 and max_err < 1e-1):
        raise AssertionError(
            f"kernel/reference mismatch: rel={rel_err:.3e} max_abs={max_err:.3e}")

    print("KERNEL_OK")
</pallas_src>

<mosaic_0001>
module attributes {stable_mosaic.version = 11 : i64} {
  func.func @kernel(%arg0: i32, %arg1: i32, %arg2: memref<1x8x128xf32, #tpu.memory_space<vmem>>, %arg3: memref<128x512xbf16, #tpu.memory_space<vmem>>, %arg4: memref<4x256xf32, #tpu.memory_space<vmem>>, %arg5: memref<1x256xf32, #tpu.memory_space<vmem>>, %arg6: memref<256x40xbf16, #tpu.memory_space<vmem>>, %arg7: memref<8x256xbf16, #tpu.memory_space<vmem>>, %arg8: memref<1x256xf32, #tpu.memory_space<vmem>>, %arg9: memref<16x256xf32, #tpu.memory_space<vmem>>, %arg10: memref<1x256xf32, #tpu.memory_space<vmem>>, %arg11: memref<256x128xbf16, #tpu.memory_space<vmem>>, %arg12: memref<1x8x128xf32, #tpu.memory_space<vmem>>, %arg13: memref<16x256xf32, #tpu.memory_space<vmem>>, %arg14: memref<16x256xf32, #tpu.memory_space<vmem>>, %arg15: memref<8x16x128xf32, #tpu.memory_space<vmem>>, %arg16: memref<8x16x128xbf16, #tpu.memory_space<vmem>>, %arg17: memref<8x16x128xbf16, #tpu.memory_space<vmem>>) attributes {dimension_semantics = [#tpu.dimension_semantics<parallel>, #tpu.dimension_semantics<arbitrary>], iteration_bounds = array<i64: 2, 2>, scalar_prefetch = 0 : i64, scratch_operands = 5 : i64, tpu.core_type = #tpu.core_type<tc>, window_params = [{transform_indices = @transform_0, window_bounds = array<i64: 1, 8, 128>}, {pipeline_mode = #tpu.pipeline_mode<synchronous>, transform_indices = @transform_1, window_bounds = array<i64: 128, 512>}, {pipeline_mode = #tpu.pipeline_mode<synchronous>, transform_indices = @transform_2, window_bounds = array<i64: 4, 256>}, {pipeline_mode = #tpu.pipeline_mode<synchronous>, transform_indices = @transform_3, window_bounds = array<i64: 1, 256>}, {pipeline_mode = #tpu.pipeline_mode<synchronous>, transform_indices = @transform_4, window_bounds = array<i64: 256, 40>}, {pipeline_mode = #tpu.pipeline_mode<synchronous>, transform_indices = @transform_5, window_bounds = array<i64: 8, 256>}, {pipeline_mode = #tpu.pipeline_mode<synchronous>, transform_indices = @transform_6, window_bounds = array<i64: 1, 256>}, {pipeline_mode = #tpu.pipeline_mode<synchronous>, transform_indices = @transform_7, window_bounds = array<i64: 16, 256>}, {pipeline_mode = #tpu.pipeline_mode<synchronous>, transform_indices = @transform_8, window_bounds = array<i64: 1, 256>}, {pipeline_mode = #tpu.pipeline_mode<synchronous>, transform_indices = @transform_9, window_bounds = array<i64: 256, 128>}, {transform_indices = @transform_10, window_bounds = array<i64: 1, 8, 128>}]} {
    %c0_i32 = arith.constant 0 : i32
    %0 = arith.cmpi eq, %arg1, %c0_i32 : i32
    %1 = arith.extui %0 : i1 to i32
    %c0_i32_0 = arith.constant 0 : i32
    %2 = arith.cmpi ne, %1, %c0_i32_0 : i32
    scf.if %2 {
      %cst_272 = arith.constant 0.000000e+00 : f32
      %591 = vector.broadcast %cst_272 : f32 to vector<16x256xf32>
      %c0_273 = arith.constant 0 : index
      %c0_274 = arith.constant 0 : index
      %592 = vector.load %arg13[%c0_273, %c0_274] : memref<16x256xf32, #tpu.memory_space<vmem>>, vector<16x256xf32>
      tpu.vector_store %arg13[%c0_273, %c0_274], %591 {strides = array<i32>} : memref<16x256xf32, #tpu.memory_space<vmem>>, vector<16x256xf32>,
      %cst_275 = arith.constant 0.000000e+00 : f32
      %593 = vector.broadcast %cst_275 : f32 to vector<8x256xf32>
      %c0_276 = arith.constant 0 : index
      %c0_277 = arith.constant 0 : index
      %594 = vector.load %arg14[%c0_276, %c0_277] : memref<16x256xf32, #tpu.memory_space<vmem>>, vector<8x256xf32>
      tpu.vector_store %arg14[%c0_276, %c0_277], %593 {strides = array<i32>} : memref<16x256xf32, #tpu.memory_space<vmem>>, vector<8x256xf32>,
    } else {
    }
    %c0 = arith.constant 0 : index
    %c0_1 = arith.constant 0 : index
    %c0_2 = arith.constant 0 : index
    %3 = vector.load %arg2[%c0, %c0_1, %c0_2] : memref<1x8x128xf32, #tpu.memory_space<vmem>>, vector<1x8x128xf32>
    %4 = vector.shape_cast %3 : vector<1x8x128xf32> to vector<8x128xf32>
    %5 = arith.truncf %4 : vector<8x128xf32> to vector<8x128xbf16>
    %c0_3 = arith.constant 0 : index
    %c0_4 = arith.constant 0 : index
    %6 = vector.load %arg3[%c0_3, %c0_4] : memref<128x512xbf16, #tpu.memory_space<vmem>>, vector<128x512xbf16>
    %cst = arith.constant dense<0.000000e+00> : vector<8x512xf32>
    %7 = tpu.matmul %5, %6, %cst {dimension_numbers = #tpu.dot_dimension_numbers<[1], [0], [0], [1], [0, 0, 1, 1], [], []>} : vector<8x128xbf16>, vector<128x512xbf16>, vector<8x512xf32> -> vector<8x512xf32>
    %8 = vector.extract_strided_slice %7 {offsets = [0, 0], sizes = [8, 256], strides = [1, 1]} : vector<8x512xf32> to vector<8x256xf32>
    %9 = vector.extract_strided_slice %7 {offsets = [0, 256], sizes = [8, 256], strides = [1, 1]} : vector<8x512xf32> to vector<8x256xf32>
    %c8 = arith.constant 8 : index
    %c0_5 = arith.constant 0 : index
    %10 = vector.load %arg14[%c8, %c0_5] : memref<16x256xf32, #tpu.memory_space<vmem>>, vector<8x256xf32>
    tpu.vector_store %arg14[%c8, %c0_5], %8 {strides = array<i32>} : memref<16x256xf32, #tpu.memory_space<vmem>>, vector<8x256xf32>,
    %c0_6 = arith.constant 0 : index
    %c0_7 = arith.constant 0 : index
    %11 = vector.load %arg5[%c0_6, %c0_7] : memref<1x256xf32, #tpu.memory_space<vmem>>, vector<1x256xf32>
    %c5 = arith.constant 5 : index
    %c0_8 = arith.constant 0 : index
    %12 = vector.load %arg14[%c5, %c0_8] : memref<16x256xf32, #tpu.memory_space<vmem>>, vector<8x256xf32>
    %c0_9 = arith.constant 0 : index
    %c0_10 = arith.constant 0 : index
    %13 = vector.load %arg4[%c0_9, %c0_10] : memref<4x256xf32, #tpu.memory_space<vmem>>, vector<1x256xf32>
    %14 = vector.broadcast %13 : vector<1x256xf32> to vector<8x256xf32>
    %15 = arith.mulf %12, %14 : vector<8x256xf32>
    %16 = vector.broadcast %11 : vector<1x256xf32> to vector<8x256xf32>
    %17 = arith.addf %16, %15 : vector<8x256xf32>
    %c6 = arith.constant 6 : index
    %c0_11 = arith.constant 0 : index
    %18 = vector.load %arg14[%c6, %c0_11] : memref<16x256xf32, #tpu.memory_space<vmem>>, vector<8x256xf32>
    %c1 = arith.constant 1 : index
    %c0_12 = arith.constant 0 : index
    %19 = vector.load %arg4[%c1, %c0_12] : memref<4x256xf32, #tpu.memory_space<vmem>>, vector<1x256xf32>
    %20 = vector.broadcast %19 : vector<1x256xf32> to vector<8x256xf32>
    %21 = arith.mulf %18, %20 : vector<8x256xf32>
    %22 = arith.addf %17, %21 : vector<8x256xf32>
    %c7 = arith.constant 7 : index
    %c0_13 = arith.constant 0 : index
    %23 = vector.load %arg14[%c7, %c0_13] : memref<16x256xf32, #tpu.memory_space<vmem>>, vector<8x256xf32>
    %c2 = arith.constant 2 : index
    %c0_14 = arith.constant 0 : index
    %24 = vector.load %arg4[%c2, %c0_14] : memref<4x256xf32, #tpu.memory_space<vmem>>, vector<1x256xf32>
    %25 = vector.broadcast %24 : vector<1x256xf32> to vector<8x256xf32>
    %26 = arith.mulf %23, %25 : vector<8x256xf32>
    %27 = arith.addf %22, %26 : vector<8x256xf32>
    %c8_15 = arith.constant 8 : index
    %c0_16 = arith.constant 0 : index
    %28 = vector.load %arg14[%c8_15, %c0_16] : memref<16x256xf32, #tpu.memory_space<vmem>>, vector<8x256xf32>
    %c3 = arith.constant 3 : index
    %c0_17 = arith.constant 0 : index
    %29 = vector.load %arg4[%c3, %c0_17] : memref<4x256xf32, #tpu.memory_space<vmem>>, vector<1x256xf32>
    %30 = vector.broadcast %29 : vector<1x256xf32> to vector<8x256xf32>
    %31 = arith.mulf %28, %30 : vector<8x256xf32>
    %32 = arith.addf %27, %31 : vector<8x256xf32>
    %cst_18 = arith.constant 0.000000e+00 : f32
    %33 = vector.broadcast %cst_18 : f32 to vector<8x256xf32>
    %34 = arith.subf %33, %32 : vector<8x256xf32>
    %35 = math.exp %34 : vector<8x256xf32>
    %cst_19 = arith.constant 1.000000e+00 : f32
    %36 = vector.broadcast %cst_19 : f32 to vector<8x256xf32>
    %37 = arith.addf %36, %35 : vector<8x256xf32>
    %38 = tpu.reciprocal %37 {approx = true} : vector<8x256xf32> -> vector<8x256xf32>
    %39 = arith.mulf %32, %38 : vector<8x256xf32>
    %c8_20 = arith.constant 8 : index
    %c0_21 = arith.constant 0 : index
    %40 = vector.load %arg14[%c8_20, %c0_21] : memref<16x256xf32, #tpu.memory_space<vmem>>, vector<8x256xf32>
    %c0_22 = arith.constant 0 : index
    %c0_23 = arith.constant 0 : index
    %41 = vector.load %arg14[%c0_22, %c0_23] : memref<16x256xf32, #tpu.memory_space<vmem>>, vector<8x256xf32>
    tpu.vector_store %arg14[%c0_22, %c0_23], %40 {strides = array<i32>} : memref<16x256xf32, #tpu.memory_space<vmem>>, vector<8x256xf32>,
    %42 = arith.truncf %39 : vector<8x256xf32> to vector<8x256xbf16>
    %c0_24 = arith.constant 0 : index
    %c0_25 = arith.constant 0 : index
    %43 = vector.load %arg6[%c0_24, %c0_25] : memref<256x40xbf16, #tpu.memory_space<vmem>>, vector<256x40xbf16>
    %cst_26 = arith.constant dense<0.000000e+00> : vector<8x40xf32>
    %44 = tpu.matmul %42, %43, %cst_26 {dimension_numbers = #tpu.dot_dimension_numbers<[1], [0], [0], [1], [0, 0, 1, 1], [], []>} : vector<8x256xbf16>, vector<256x40xbf16>, vector<8x40xf32> -> vector<8x40xf32>
    %45 = vector.extract_strided_slice %44 {offsets = [0, 0], sizes = [8, 8], strides = [1, 1]} : vector<8x40xf32> to vector<8x8xf32>
    %46 = vector.extract_strided_slice %44 {offsets = [0, 8], sizes = [8, 16], strides = [1, 1]} : vector<8x40xf32> to vector<8x16xf32>
    %47 = vector.extract_strided_slice %44 {offsets = [0, 24], sizes = [8, 16], strides = [1, 1]} : vector<8x40xf32> to vector<8x16xf32>
    %48 = arith.truncf %45 : vector<8x8xf32> to vector<8x8xbf16>
    %c0_27 = arith.constant 0 : index
    %c0_28 = arith.constant 0 : index
    %49 = vector.load %arg7[%c0_27, %c0_28] : memref<8x256xbf16, #tpu.memory_space<vmem>>, vector<8x256xbf16>
    %cst_29 = arith.constant dense<0.000000e+00> : vector<8x256xf32>
    %50 = tpu.matmul %48, %49, %cst_29 {dimension_numbers = #tpu.dot_dimension_numbers<[1], [0], [0], [1], [0, 0, 1, 1], [], []>} : vector<8x8xbf16>, vector<8x256xbf16>, vector<8x256xf32> -> vector<8x256xf32>
    %c0_30 = arith.constant 0 : index
    %c0_31 = arith.constant 0 : index
    %51 = vector.load %arg8[%c0_30, %c0_31] : memref<1x256xf32, #tpu.memory_space<vmem>>, vector<1x256xf32>
    %52 = vector.broadcast %51 : vector<1x256xf32> to vector<8x256xf32>
    %53 = arith.addf %50, %52 : vector<8x256xf32>
    %cst_32 = arith.constant 2.000000e+01 : f32
    %54 = vector.broadcast %cst_32 : f32 to vector<8x256xf32>
    %55 = arith.cmpf ogt, %53, %54 : vector<8x256xf32>
    %56 = math.exp %53 : vector<8x256xf32>
    %57 = math.log1p %56 : vector<8x256xf32>
    %58 = arith.select %55, %53, %57 : vector<8x256xi1>, vector<8x256xf32>
    %c0_33 = arith.constant 0 : index
    %c0_34 = arith.constant 0 : index
    %59 = vector.load %arg9[%c0_33, %c0_34] : memref<16x256xf32, #tpu.memory_space<vmem>>, vector<16x256xf32>
    %60 = math.exp %59 : vector<16x256xf32>
    %cst_35 = arith.constant 0.000000e+00 : f32
    %61 = vector.broadcast %cst_35 : f32 to vector<16x256xf32>
    %62 = arith.subf %61, %60 : vector<16x256xf32>
    %63 = arith.mulf %58, %39 : vector<8x256xf32>
    %64 = vector.extract_strided_slice %58 {offsets = [0, 0], sizes = [8, 128], strides = [1, 1]} : vector<8x256xf32> to vector<8x128xf32>
    %65 = vector.shape_cast %64 : vector<8x128xf32> to vector<8x1x128xf32>
    %66 = vector.extract_strided_slice %62 {offsets = [0, 0], sizes = [16, 128], strides = [1, 1]} : vector<16x256xf32> to vector<16x128xf32>
    %67 = vector.shape_cast %66 : vector<16x128xf32> to vector<1x16x128xf32>
    %68 = vector.broadcast %65 : vector<8x1x128xf32> to vector<8x16x128xf32>
    %69 = vector.broadcast %67 : vector<1x16x128xf32> to vector<8x16x128xf32>
    %70 = arith.mulf %68, %69 : vector<8x16x128xf32>
    %71 = math.exp %70 : vector<8x16x128xf32>
    %c0_36 = arith.constant 0 : index
    %c0_37 = arith.constant 0 : index
    %c0_38 = arith.constant 0 : index
    %72 = vector.load %arg15[%c0_36, %c0_37, %c0_38] : memref<8x16x128xf32, #tpu.memory_space<vmem>>, vector<8x16x128xf32>
    tpu.vector_store %arg15[%c0_36, %c0_37, %c0_38], %71 {strides = array<i32>} : memref<8x16x128xf32, #tpu.memory_space<vmem>>, vector<8x16x128xf32>,
    %73 = vector.shape_cast %46 : vector<8x16xf32> to vector<8x16x1xf32>
    %74 = vector.extract_strided_slice %63 {offsets = [0, 0], sizes = [8, 128], strides = [1, 1]} : vector<8x256xf32> to vector<8x128xf32>
    %75 = vector.shape_cast %74 : vector<8x128xf32> to vector<8x1x128xf32>
    %76 = vector.broadcast %73 : vector<8x16x1xf32> to vector<8x16x128xf32>
    %77 = vector.broadcast %75 : vector<8x1x128xf32> to vector<8x16x128xf32>
    %78 = arith.mulf %76, %77 : vector<8x16x128xf32>
    %79 = arith.truncf %78 : vector<8x16x128xf32> to vector<8x16x128xbf16>
    %c0_39 = arith.constant 0 : index
    %c0_40 = arith.constant 0 : index
    %c0_41 = arith.constant 0 : index
    %80 = vector.load %arg16[%c0_39, %c0_40, %c0_41] : memref<8x16x128xbf16, #tpu.memory_space<vmem>>, vector<8x16x128xbf16>
    tpu.vector_store %arg16[%c0_39, %c0_40, %c0_41], %79 {strides = array<i32>} : memref<8x16x128xbf16, #tpu.memory_space<vmem>>, vector<8x16x128xbf16>,
    %c0_42 = arith.constant 0 : index
    %c0_43 = arith.constant 0 : index
    %81 = vector.load %arg13[%c0_42, %c0_43] : memref<16x256xf32, #tpu.memory_space<vmem>>, vector<16x128xf32>
    %c0_i32_44 = arith.constant 0 : i32
    %82 = arith.index_cast %c0_i32_44 : i32 to index
    %c0_45 = arith.constant 0 : index
    %c0_46 = arith.constant 0 : index
    %83 = vector.load %arg15[%82, %c0_45, %c0_46] : memref<8x16x128xf32, #tpu.memory_space<vmem>>, vector<1x16x128xf32>
    %84 = vector.shape_cast %83 : vector<1x16x128xf32> to vector<16x128xf32>
    %85 = arith.mulf %84, %81 : vector<16x128xf32>
    %86 = arith.index_cast %c0_i32_44 : i32 to index
    %c0_47 = arith.constant 0 : index
    %c0_48 = arith.constant 0 : index
    %87 = vector.load %arg16[%86, %c0_47, %c0_48] : memref<8x16x128xbf16, #tpu.memory_space<vmem>>, vector<1x16x128xbf16>
    %88 = vector.shape_cast %87 : vector<1x16x128xbf16> to vector<16x128xbf16>
    %89 = arith.extf %88 : vector<16x128xbf16> to vector<16x128xf32>
    %90 = arith.addf %85, %89 : vector<16x128xf32>
    %91 = arith.truncf %90 : vector<16x128xf32> to vector<16x128xbf16>
    %92 = arith.index_cast %c0_i32_44 : i32 to index
    %c0_49 = arith.constant 0 : index
    %c0_50 = arith.constant 0 : index
    %93 = vector.load %arg17[%92, %c0_49, %c0_50] : memref<8x16x128xbf16, #tpu.memory_space<vmem>>, vector<1x16x128xbf16>
    %94 = vector.shape_cast %93 : vector<1x16x128xbf16> to vector<16x128xbf16>
    %95 = vector.shape_cast %91 : vector<16x128xbf16> to vector<1x16x128xbf16>
    tpu.vector_store %arg17[%92, %c0_49, %c0_50], %95 {strides = array<i32>} : memref<8x16x128xbf16, #tpu.memory_space<vmem>>, vector<1x16x128xbf16>,
    %c1_i32 = arith.constant 1 : i32
    %96 = arith.index_cast %c1_i32 : i32 to index
    %c0_51 = arith.constant 0 : index
    %c0_52 = arith.constant 0 : index
    %97 = vector.load %arg15[%96, %c0_51, %c0_52] : memref<8x16x128xf32, #tpu.memory_space<vmem>>, vector<1x16x128xf32>
    %98 = vector.shape_cast %97 : vector<1x16x128xf32> to vector<16x128xf32>
    %99 = arith.mulf %98, %90 : vector<16x128xf32>
    %100 = arith.index_cast %c1_i32 : i32 to index
    %c0_53 = arith.constant 0 : index
    %c0_54 = arith.constant 0 : index
    %101 = vector.load %arg16[%100, %c0_53, %c0_54] : memref<8x16x128xbf16, #tpu.memory_space<vmem>>, vector<1x16x128xbf16>
    %102 = vector.shape_cast %101 : vector<1x16x128xbf16> to vector<16x128xbf16>
    %103 = arith.extf %102 : vector<16x128xbf16> to vector<16x128xf32>
    %104 = arith.addf %99, %103 : vector<16x128xf32>
    %105 = arith.truncf %104 : vector<16x128xf32> to vector<16x128xbf16>
    %106 = arith.index_cast %c1_i32 : i32 to index
    %c0_55 = arith.constant 0 : index
    %c0_56 = arith.constant 0 : index
    %107 = vector.load %arg17[%106, %c0_55, %c0_56] : memref<8x16x128xbf16, #tpu.memory_space<vmem>>, vector<1x16x128xbf16>
    %108 = vector.shape_cast %107 : vector<1x16x128xbf16> to vector<16x128xbf16>
    %109 = vector.shape_cast %105 : vector<16x128xbf16> to vector<1x16x128xbf16>
    tpu.vector_store %arg17[%106, %c0_55, %c0_56], %109 {strides = array<i32>} : memref<8x16x128xbf16, #tpu.memory_space<vmem>>, vector<1x16x128xbf16>,
    %c2_i32 = arith.constant 2 : i32
    %110 = arith.index_cast %c2_i32 : i32 to index
    %c0_57 = arith.constant 0 : index
    %c0_58 = arith.constant 0 : index
    %111 = vector.load %arg15[%110, %c0_57, %c0_58] : memref<8x16x128xf32, #tpu.memory_space<vmem>>, vector<1x16x128xf32>
    %112 = vector.shape_cast %111 : vector<1x16x128xf32> to vector<16x128xf32>
    %113 = arith.mulf %112, %104 : vector<16x128xf32>
    %114 = arith.index_cast %c2_i32 : i32 to index
    %c0_59 = arith.constant 0 : index
    %c0_60 = arith.constant 0 : index
    %115 = vector.load %arg16[%114, %c0_59, %c0_60] : memref<8x16x128xbf16, #tpu.memory_space<vmem>>, vector<1x16x128xbf16>
    %116 = vector.shape_cast %115 : vector<1x16x128xbf16> to vector<16x128xbf16>
    %117 = arith.extf %116 : vector<16x128xbf16> to vector<16x128xf32>
    %118 = arith.addf %113, %117 : vector<16x128xf32>
    %119 = arith.truncf %118 : vector<16x128xf32> to vector<16x128xbf16>
    %120 = arith.index_cast %c2_i32 : i32 to index
    %c0_61 = arith.constant 0 : index
    %c0_62 = arith.constant 0 : index
    %121 = vector.load %arg17[%120, %c0_61, %c0_62] : memref<8x16x128xbf16, #tpu.memory_space<vmem>>, vector<1x16x128xbf16>
    %122 = vector.shape_cast %121 : vector<1x16x128xbf16> to vector<16x128xbf16>
    %123 = vector.shape_cast %119 : vector<16x128xbf16> to vector<1x16x128xbf16>
    tpu.vector_store %arg17[%120, %c0_61, %c0_62], %123 {strides = array<i32>} : memref<8x16x128xbf16, #tpu.memory_space<vmem>>, vector<1x16x128xbf16>,
    %c3_i32 = arith.constant 3 : i32
    %124 = arith.index_cast %c3_i32 : i32 to index
    %c0_63 = arith.constant 0 : index
    %c0_64 = arith.constant 0 : index
    %125 = vector.load %arg15[%124, %c0_63, %c0_64] : memref<8x16x128xf32, #tpu.memory_space<vmem>>, vector<1x16x128xf32>
    %126 = vector.shape_cast %125 : vector<1x16x128xf32> to vector<16x128xf32>
    %127 = arith.mulf %126, %118 : vector<16x128xf32>
    %128 = arith.index_cast %c3_i32 : i32 to index
    %c0_65 = arith.constant 0 : index
    %c0_66 = arith.constant 0 : index
    %129 = vector.load %arg16[%128, %c0_65, %c0_66] : memref<8x16x128xbf16, #tpu.memory_space<vmem>>, vector<1x16x128xbf16>
    %130 = vector.shape_cast %129 : vector<1x16x128xbf16> to vector<16x128xbf16>
    %131 = arith.extf %130 : vector<16x128xbf16> to vector<16x128xf32>
    %132 = arith.addf %127, %131 : vector<16x128xf32>
    %133 = arith.truncf %132 : vector<16x128xf32> to vector<16x128xbf16>
    %134 = arith.index_cast %c3_i32 : i32 to index
    %c0_67 = arith.constant 0 : index
    %c0_68 = arith.constant 0 : index
    %135 = vector.load %arg17[%134, %c0_67, %c0_68] : memref<8x16x128xbf16, #tpu.memory_space<vmem>>, vector<1x16x128xbf16>
    %136 = vector.shape_cast %135 : vector<1x16x128xbf16> to vector<16x128xbf16>
    %137 = vector.shape_cast %133 : vector<16x128xbf16> to vector<1x16x128xbf16>
    tpu.vector_store %arg17[%134, %c0_67, %c0_68], %137 {strides = array<i32>} : memref<8x16x128xbf16, #tpu.memory_space<vmem>>, vector<1x16x128xbf16>,
    %c4_i32 = arith.constant 4 : i32
    %138 = arith.index_cast %c4_i32 : i32 to index
    %c0_69 = arith.constant 0 : index
    %c0_70 = arith.constant 0 : index
    %139 = vector.load %arg15[%138, %c0_69, %c0_70] : memref<8x16x128xf32, #tpu.memory_space<vmem>>, vector<1x16x128xf32>
    %140 = vector.shape_cast %139 : vector<1x16x128xf32> to vector<16x128xf32>
    %141 = arith.mulf %140, %132 : vector<16x128xf32>
    %142 = arith.index_cast %c4_i32 : i32 to index
    %c0_71 = arith.constant 0 : index
    %c0_72 = arith.constant 0 : index
    %143 = vector.load %arg16[%142, %c0_71, %c0_72] : memref<8x16x128xbf16, #tpu.memory_space<vmem>>, vector<1x16x128xbf16>
    %144 = vector.shape_cast %143 : vector<1x16x128xbf16> to vector<16x128xbf16>
    %145 = arith.extf %144 : vector<16x128xbf16> to vector<16x128xf32>
    %146 = arith.addf %141, %145 : vector<16x128xf32>
    %147 = arith.truncf %146 : vector<16x128xf32> to vector<16x128xbf16>
    %148 = arith.index_cast %c4_i32 : i32 to index
    %c0_73 = arith.constant 0 : index
    %c0_74 = arith.constant 0 : index
    %149 = vector.load %arg17[%148, %c0_73, %c0_74] : memref<8x16x128xbf16, #tpu.memory_space<vmem>>, vector<1x16x128xbf16>
    %150 = vector.shape_cast %149 : vector<1x16x128xbf16> to vector<16x128xbf16>
    %151 = vector.shape_cast %147 : vector<16x128xbf16> to vector<1x16x128xbf16>
    tpu.vector_store %arg17[%148, %c0_73, %c0_74], %151 {strides = array<i32>} : memref<8x16x128xbf16, #tpu.memory_space<vmem>>, vector<1x16x128xbf16>,
    %c5_i32 = arith.constant 5 : i32
    %152 = arith.index_cast %c5_i32 : i32 to index
    %c0_75 = arith.constant 0 : index
    %c0_76 = arith.constant 0 : index
    %153 = vector.load %arg15[%152, %c0_75, %c0_76] : memref<8x16x128xf32, #tpu.memory_space<vmem>>, vector<1x16x128xf32>
    %154 = vector.shape_cast %153 : vector<1x16x128xf32> to vector<16x128xf32>
    %155 = arith.mulf %154, %146 : vector<16x128xf32>
    %156 = arith.index_cast %c5_i32 : i32 to index
    %c0_77 = arith.constant 0 : index
    %c0_78 = arith.constant 0 : index
    %157 = vector.load %arg16[%156, %c0_77, %c0_78] : memref<8x16x128xbf16, #tpu.memory_space<vmem>>, vector<1x16x128xbf16>
    %158 = vector.shape_cast %157 : vector<1x16x128xbf16> to vector<16x128xbf16>
    %159 = arith.extf %158 : vector<16x128xbf16> to vector<16x128xf32>
    %160 = arith.addf %155, %159 : vector<16x128xf32>
    %161 = arith.truncf %160 : vector<16x128xf32> to vector<16x128xbf16>
    %162 = arith.index_cast %c5_i32 : i32 to index
    %c0_79 = arith.constant 0 : index
    %c0_80 = arith.constant 0 : index
    %163 = vector.load %arg17[%162, %c0_79, %c0_80] : memref<8x16x128xbf16, #tpu.memory_space<vmem>>, vector<1x16x128xbf16>
    %164 = vector.shape_cast %163 : vector<1x16x128xbf16> to vector<16x128xbf16>
    %165 = vector.shape_cast %161 : vector<16x128xbf16> to vector<1x16x128xbf16>
    tpu.vector_store %arg17[%162, %c0_79, %c0_80], %165 {strides = array<i32>} : memref<8x16x128xbf16, #tpu.memory_space<vmem>>, vector<1x16x128xbf16>,
    %c6_i32 = arith.constant 6 : i32
    %166 = arith.index_cast %c6_i32 : i32 to index
    %c0_81 = arith.constant 0 : index
    %c0_82 = arith.constant 0 : index
    %167 = vector.load %arg15[%166, %c0_81, %c0_82] : memref<8x16x128xf32, #tpu.memory_space<vmem>>, vector<1x16x128xf32>
    %168 = vector.shape_cast %167 : vector<1x16x128xf32> to vector<16x128xf32>
    %169 = arith.mulf %168, %160 : vector<16x128xf32>
    %170 = arith.index_cast %c6_i32 : i32 to index
    %c0_83 = arith.constant 0 : index
    %c0_84 = arith.constant 0 : index
    %171 = vector.load %arg16[%170, %c0_83, %c0_84] : memref<8x16x128xbf16, #tpu.memory_space<vmem>>, vector<1x16x128xbf16>
    %172 = vector.shape_cast %171 : vector<1x16x128xbf16> to vector<16x128xbf16>
    %173 = arith.extf %172 : vector<16x128xbf16> to vector<16x128xf32>
    %174 = arith.addf %169, %173 : vector<16x128xf32>
    %175 = arith.truncf %174 : vector<16x128xf32> to vector<16x128xbf16>
    %176 = arith.index_cast %c6_i32 : i32 to index
    %c0_85 = arith.constant 0 : index
    %c0_86 = arith.constant 0 : index
    %177 = vector.load %arg17[%176, %c0_85, %c0_86] : memref<8x16x128xbf16, #tpu.memory_space<vmem>>, vector<1x16x128xbf16>
    %178 = vector.shape_cast %177 : vector<1x16x128xbf16> to vector<16x128xbf16>
    %179 = vector.shape_cast %175 : vector<16x128xbf16> to vector<1x16x128xbf16>
    tpu.vector_store %arg17[%176, %c0_85, %c0_86], %179 {strides = array<i32>} : memref<8x16x128xbf16, #tpu.memory_space<vmem>>, vector<1x16x128xbf16>,
    %c7_i32 = arith.constant 7 : i32
    %180 = arith.index_cast %c7_i32 : i32 to index
    %c0_87 = arith.constant 0 : index
    %c0_88 = arith.constant 0 : index
    %181 = vector.load %arg15[%180, %c0_87, %c0_88] : memref<8x16x128xf32, #tpu.memory_space<vmem>>, vector<1x16x128xf32>
    %182 = vector.shape_cast %181 : vector<1x16x128xf32> to vector<16x128xf32>
    %183 = arith.mulf %182, %174 : vector<16x128xf32>
    %184 = arith.index_cast %c7_i32 : i32 to index
    %c0_89 = arith.constant 0 : index
    %c0_90 = arith.constant 0 : index
    %185 = vector.load %arg16[%184, %c0_89, %c0_90] : memref<8x16x128xbf16, #tpu.memory_space<vmem>>, vector<1x16x128xbf16>
    %186 = vector.shape_cast %185 : vector<1x16x128xbf16> to vector<16x128xbf16>
    %187 = arith.extf %186 : vector<16x128xbf16> to vector<16x128xf32>
    %188 = arith.addf %183, %187 : vector<16x128xf32>
    %189 = arith.truncf %188 : vector<16x128xf32> to vector<16x128xbf16>
    %190 = arith.index_cast %c7_i32 : i32 to index
    %c0_91 = arith.constant 0 : index
    %c0_92 = arith.constant 0 : index
    %191 = vector.load %arg17[%190, %c0_91, %c0_92] : memref<8x16x128xbf16, #tpu.memory_space<vmem>>, vector<1x16x128xbf16>
    %192 = vector.shape_cast %191 : vector<1x16x128xbf16> to vector<16x128xbf16>
    %193 = vector.shape_cast %189 : vector<16x128xbf16> to vector<1x16x128xbf16>
    tpu.vector_store %arg17[%190, %c0_91, %c0_92], %193 {strides = array<i32>} : memref<8x16x128xbf16, #tpu.memory_space<vmem>>, vector<1x16x128xbf16>,
    %c8_i32 = arith.constant 8 : i32
    %c0_93 = arith.constant 0 : index
    %c0_94 = arith.constant 0 : index
    %194 = vector.load %arg13[%c0_93, %c0_94] : memref<16x256xf32, #tpu.memory_space<vmem>>, vector<16x128xf32>
    tpu.vector_store %arg13[%c0_93, %c0_94], %188 {strides = array<i32>} : memref<16x256xf32, #tpu.memory_space<vmem>>, vector<16x128xf32>,
    %195 = vector.extract_strided_slice %47 {offsets = [0, 0], sizes = [8, 1], strides = [1, 1]} : vector<8x16xf32> to vector<8x1xf32>
    %c0_95 = arith.constant 0 : index
    %c0_96 = arith.constant 0 : index
    %c0_97 = arith.constant 0 : index
    %196 = vector.load %arg17[%c0_95, %c0_96, %c0_97] : memref<8x16x128xbf16, #tpu.memory_space<vmem>>, vector<8x1x128xbf16>
    %197 = vector.shape_cast %196 : vector<8x1x128xbf16> to vector<8x128xbf16>
    %198 = arith.extf %197 : vector<8x128xbf16> to vector<8x128xf32>
    %199 = vector.broadcast %195 : vector<8x1xf32> to vector<8x128xf32>
    %200 = arith.mulf %199, %198 : vector<8x128xf32>
    %201 = vector.extract_strided_slice %47 {offsets = [0, 1], sizes = [8, 1], strides = [1, 1]} : vector<8x16xf32> to vector<8x1xf32>
    %c0_98 = arith.constant 0 : index
    %c1_99 = arith.constant 1 : index
    %c0_100 = arith.constant 0 : index
    %202 = vector.load %arg17[%c0_98, %c1_99, %c0_100] : memref<8x16x128xbf16, #tpu.memory_space<vmem>>, vector<8x1x128xbf16>
    %203 = vector.shape_cast %202 : vector<8x1x128xbf16> to vector<8x128xbf16>
    %204 = arith.extf %203 : vector<8x128xbf16> to vector<8x128xf32>
    %205 = vector.broadcast %201 : vector<8x1xf32> to vector<8x128xf32>
    %206 = arith.mulf %205, %204 : vector<8x128xf32>
    %207 = arith.addf %200, %206 : vector<8x128xf32>
    %208 = vector.extract_strided_slice %47 {offsets = [0, 2], sizes = [8, 1], strides = [1, 1]} : vector<8x16xf32> to vector<8x1xf32>
    %c0_101 = arith.constant 0 : index
    %c2_102 = arith.constant 2 : index
    %c0_103 = arith.constant 0 : index
    %209 = vector.load %arg17[%c0_101, %c2_102, %c0_103] : memref<8x16x128xbf16, #tpu.memory_space<vmem>>, vector<8x1x128xbf16>
    %210 = vector.shape_cast %209 : vector<8x1x128xbf16> to vector<8x128xbf16>
    %211 = arith.extf %210 : vector<8x128xbf16> to vector<8x128xf32>
    %212 = vector.broadcast %208 : vector<8x1xf32> to vector<8x128xf32>
    %213 = arith.mulf %212, %211 : vector<8x128xf32>
    %214 = arith.addf %207, %213 : vector<8x128xf32>
    %215 = vector.extract_strided_slice %47 {offsets = [0, 3], sizes = [8, 1], strides = [1, 1]} : vector<8x16xf32> to vector<8x1xf32>
    %c0_104 = arith.constant 0 : index
    %c3_105 = arith.constant 3 : index
    %c0_106 = arith.constant 0 : index
    %216 = vector.load %arg17[%c0_104, %c3_105, %c0_106] : memref<8x16x128xbf16, #tpu.memory_space<vmem>>, vector<8x1x128xbf16>
    %217 = vector.shape_cast %216 : vector<8x1x128xbf16> to vector<8x128xbf16>
    %218 = arith.extf %217 : vector<8x128xbf16> to vector<8x128xf32>
    %219 = vector.broadcast %215 : vector<8x1xf32> to vector<8x128xf32>
    %220 = arith.mulf %219, %218 : vector<8x128xf32>
    %221 = arith.addf %214, %220 : vector<8x128xf32>
    %222 = vector.extract_strided_slice %47 {offsets = [0, 4], sizes = [8, 1], strides = [1, 1]} : vector<8x16xf32> to vector<8x1xf32>
    %c0_107 = arith.constant 0 : index
    %c4 = arith.constant 4 : index
    %c0_108 = arith.constant 0 : index
    %223 = vector.load %arg17[%c0_107, %c4, %c0_108] : memref<8x16x128xbf16, #tpu.memory_space<vmem>>, vector<8x1x128xbf16>
    %224 = vector.shape_cast %223 : vector<8x1x128xbf16> to vector<8x128xbf16>
    %225 = arith.extf %224 : vector<8x128xbf16> to vector<8x128xf32>
    %226 = vector.broadcast %222 : vector<8x1xf32> to vector<8x128xf32>
    %227 = arith.mulf %226, %225 : vector<8x128xf32>
    %228 = arith.addf %221, %227 : vector<8x128xf32>
    %229 = vector.extract_strided_slice %47 {offsets = [0, 5], sizes = [8, 1], strides = [1, 1]} : vector<8x16xf32> to vector<8x1xf32>
    %c0_109 = arith.constant 0 : index
    %c5_110 = arith.constant 5 : index
    %c0_111 = arith.constant 0 : index
    %230 = vector.load %arg17[%c0_109, %c5_110, %c0_111] : memref<8x16x128xbf16, #tpu.memory_space<vmem>>, vector<8x1x128xbf16>
    %231 = vector.shape_cast %230 : vector<8x1x128xbf16> to vector<8x128xbf16>
    %232 = arith.extf %231 : vector<8x128xbf16> to vector<8x128xf32>
    %233 = vector.broadcast %229 : vector<8x1xf32> to vector<8x128xf32>
    %234 = arith.mulf %233, %232 : vector<8x128xf32>
    %235 = arith.addf %228, %234 : vector<8x128xf32>
    %236 = vector.extract_strided_slice %47 {offsets = [0, 6], sizes = [8, 1], strides = [1, 1]} : vector<8x16xf32> to vector<8x1xf32>
    %c0_112 = arith.constant 0 : index
    %c6_113 = arith.constant 6 : index
    %c0_114 = arith.constant 0 : index
    %237 = vector.load %arg17[%c0_112, %c6_113, %c0_114] : memref<8x16x128xbf16, #tpu.memory_space<vmem>>, vector<8x1x128xbf16>
    %238 = vector.shape_cast %237 : vector<8x1x128xbf16> to vector<8x128xbf16>
    %239 = arith.extf %238 : vector<8x128xbf16> to vector<8x128xf32>
    %240 = vector.broadcast %236 : vector<8x1xf32> to vector<8x128xf32>
    %241 = arith.mulf %240, %239 : vector<8x128xf32>
    %242 = arith.addf %235, %241 : vector<8x128xf32>
    %243 = vector.extract_strided_slice %47 {offsets = [0, 7], sizes = [8, 1], strides = [1, 1]} : vector<8x16xf32> to vector<8x1xf32>
    %c0_115 = arith.constant 0 : index
    %c7_116 = arith.constant 7 : index
    %c0_117 = arith.constant 0 : index
    %244 = vector.load %arg17[%c0_115, %c7_116, %c0_117] : memref<8x16x128xbf16, #tpu.memory_space<vmem>>, vector<8x1x128xbf16>
    %245 = vector.shape_cast %244 : vector<8x1x128xbf16> to vector<8x128xbf16>
    %246 = arith.extf %245 : vector<8x128xbf16> to vector<8x128xf32>
    %247 = vector.broadcast %243 : vector<8x1xf32> to vector<8x128xf32>
    %248 = arith.mulf %247, %246 : vector<8x128xf32>
    %249 = arith.addf %242, %248 : vector<8x128xf32>
    %250 = vector.extract_strided_slice %47 {offsets = [0, 8], sizes = [8, 1], strides = [1, 1]} : vector<8x16xf32> to vector<8x1xf32>
    %c0_118 = arith.constant 0 : index
    %c8_119 = arith.constant 8 : index
    %c0_120 = arith.constant 0 : index
    %251 = vector.load %arg17[%c0_118, %c8_119, %c0_120] : memref<8x16x128xbf16, #tpu.memory_space<vmem>>, vector<8x1x128xbf16>
    %252 = vector.shape_cast %251 : vector<8x1x128xbf16> to vector<8x128xbf16>
    %253 = arith.extf %252 : vector<8x128xbf16> to vector<8x128xf32>
    %254 = vector.broadcast %250 : vector<8x1xf32> to vector<8x128xf32>
    %255 = arith.mulf %254, %253 : vector<8x128xf32>
    %256 = arith.addf %249, %255 : vector<8x128xf32>
    %257 = vector.extract_strided_slice %47 {offsets = [0, 9], sizes = [8, 1], strides = [1, 1]} : vector<8x16xf32> to vector<8x1xf32>
    %c0_121 = arith.constant 0 : index
    %c9 = arith.constant 9 : index
    %c0_122 = arith.constant 0 : index
    %258 = vector.load %arg17[%c0_121, %c9, %c0_122] : memref<8x16x128xbf16, #tpu.memory_space<vmem>>, vector<8x1x128xbf16>
    %259 = vector.shape_cast %258 : vector<8x1x128xbf16> to vector<8x128xbf16>
    %260 = arith.extf %259 : vector<8x128xbf16> to vector<8x128xf32>
    %261 = vector.broadcast %257 : vector<8x1xf32> to vector<8x128xf32>
    %262 = arith.mulf %261, %260 : vector<8x128xf32>
    %263 = arith.addf %256, %262 : vector<8x128xf32>
    %264 = vector.extract_strided_slice %47 {offsets = [0, 10], sizes = [8, 1], strides = [1, 1]} : vector<8x16xf32> to vector<8x1xf32>
    %c0_123 = arith.constant 0 : index
    %c10 = arith.constant 10 : index
    %c0_124 = arith.constant 0 : index
    %265 = vector.load %arg17[%c0_123, %c10, %c0_124] : memref<8x16x128xbf16, #tpu.memory_space<vmem>>, vector<8x1x128xbf16>
    %266 = vector.shape_cast %265 : vector<8x1x128xbf16> to vector<8x128xbf16>
    %267 = arith.extf %266 : vector<8x128xbf16> to vector<8x128xf32>
    %268 = vector.broadcast %264 : vector<8x1xf32> to vector<8x128xf32>
    %269 = arith.mulf %268, %267 : vector<8x128xf32>
    %270 = arith.addf %263, %269 : vector<8x128xf32>
    %271 = vector.extract_strided_slice %47 {offsets = [0, 11], sizes = [8, 1], strides = [1, 1]} : vector<8x16xf32> to vector<8x1xf32>
    %c0_125 = arith.constant 0 : index
    %c11 = arith.constant 11 : index
    %c0_126 = arith.constant 0 : index
    %272 = vector.load %arg17[%c0_125, %c11, %c0_126] : memref<8x16x128xbf16, #tpu.memory_space<vmem>>, vector<8x1x128xbf16>
    %273 = vector.shape_cast %272 : vector<8x1x128xbf16> to vector<8x128xbf16>
    %274 = arith.extf %273 : vector<8x128xbf16> to vector<8x128xf32>
    %275 = vector.broadcast %271 : vector<8x1xf32> to vector<8x128xf32>
    %276 = arith.mulf %275, %274 : vector<8x128xf32>
    %277 = arith.addf %270, %276 : vector<8x128xf32>
    %278 = vector.extract_strided_slice %47 {offsets = [0, 12], sizes = [8, 1], strides = [1, 1]} : vector<8x16xf32> to vector<8x1xf32>
    %c0_127 = arith.constant 0 : index
    %c12 = arith.constant 12 : index
    %c0_128 = arith.constant 0 : index
    %279 = vector.load %arg17[%c0_127, %c12, %c0_128] : memref<8x16x128xbf16, #tpu.memory_space<vmem>>, vector<8x1x128xbf16>
    %280 = vector.shape_cast %279 : vector<8x1x128xbf16> to vector<8x128xbf16>
    %281 = arith.extf %280 : vector<8x128xbf16> to vector<8x128xf32>
    %282 = vector.broadcast %278 : vector<8x1xf32> to vector<8x128xf32>
    %283 = arith.mulf %282, %281 : vector<8x128xf32>
    %284 = arith.addf %277, %283 : vector<8x128xf32>
    %285 = vector.extract_strided_slice %47 {offsets = [0, 13], sizes = [8, 1], strides = [1, 1]} : vector<8x16xf32> to vector<8x1xf32>
    %c0_129 = arith.constant 0 : index
    %c13 = arith.constant 13 : index
    %c0_130 = arith.constant 0 : index
    %286 = vector.load %arg17[%c0_129, %c13, %c0_130] : memref<8x16x128xbf16, #tpu.memory_space<vmem>>, vector<8x1x128xbf16>
    %287 = vector.shape_cast %286 : vector<8x1x128xbf16> to vector<8x128xbf16>
    %288 = arith.extf %287 : vector<8x128xbf16> to vector<8x128xf32>
    %289 = vector.broadcast %285 : vector<8x1xf32> to vector<8x128xf32>
    %290 = arith.mulf %289, %288 : vector<8x128xf32>
    %291 = arith.addf %284, %290 : vector<8x128xf32>
    %292 = vector.extract_strided_slice %47 {offsets = [0, 14], sizes = [8, 1], strides = [1, 1]} : vector<8x16xf32> to vector<8x1xf32>
    %c0_131 = arith.constant 0 : index
    %c14 = arith.constant 14 : index
    %c0_132 = arith.constant 0 : index
    %293 = vector.load %arg17[%c0_131, %c14, %c0_132] : memref<8x16x128xbf16, #tpu.memory_space<vmem>>, vector<8x1x128xbf16>
    %294 = vector.shape_cast %293 : vector<8x1x128xbf16> to vector<8x128xbf16>
    %295 = arith.extf %294 : vector<8x128xbf16> to vector<8x128xf32>
    %296 = vector.broadcast %292 : vector<8x1xf32> to vector<8x128xf32>
    %297 = arith.mulf %296, %295 : vector<8x128xf32>
    %298 = arith.addf %291, %297 : vector<8x128xf32>
    %299 = vector.extract_strided_slice %47 {offsets = [0, 15], sizes = [8, 1], strides = [1, 1]} : vector<8x16xf32> to vector<8x1xf32>
    %c0_133 = arith.constant 0 : index
    %c15 = arith.constant 15 : index
    %c0_134 = arith.constant 0 : index
    %300 = vector.load %arg17[%c0_133, %c15, %c0_134] : memref<8x16x128xbf16, #tpu.memory_space<vmem>>, vector<8x1x128xbf16>
    %301 = vector.shape_cast %300 : vector<8x1x128xbf16> to vector<8x128xbf16>
    %302 = arith.extf %301 : vector<8x128xbf16> to vector<8x128xf32>
    %303 = vector.broadcast %299 : vector<8x1xf32> to vector<8x128xf32>
    %304 = arith.mulf %303, %302 : vector<8x128xf32>
    %305 = arith.addf %298, %304 : vector<8x128xf32>
    %c0_135 = arith.constant 0 : index
    %c0_136 = arith.constant 0 : index
    %306 = vector.load %arg10[%c0_135, %c0_136] : memref<1x256xf32, #tpu.memory_space<vmem>>, vector<1x128xf32>
    %307 = vector.extract_strided_slice %39 {offsets = [0, 0], sizes = [8, 128], strides = [1, 1]} : vector<8x256xf32> to vector<8x128xf32>
    %308 = vector.broadcast %306 : vector<1x128xf32> to vector<8x128xf32>
    %309 = arith.mulf %308, %307 : vector<8x128xf32>
    %310 = arith.addf %305, %309 : vector<8x128xf32>
    %311 = vector.extract_strided_slice %9 {offsets = [0, 0], sizes = [8, 128], strides = [1, 1]} : vector<8x256xf32> to vector<8x128xf32>
    %cst_137 = arith.constant 0.000000e+00 : f32
    %312 = vector.broadcast %cst_137 : f32 to vector<8x128xf32>
    %313 = arith.subf %312, %311 : vector<8x128xf32>
    %314 = math.exp %313 : vector<8x128xf32>
    %cst_138 = arith.constant 1.000000e+00 : f32
    %315 = vector.broadcast %cst_138 : f32 to vector<8x128xf32>
    %316 = arith.addf %315, %314 : vector<8x128xf32>
    %317 = tpu.reciprocal %316 {approx = true} : vector<8x128xf32> -> vector<8x128xf32>
    %318 = arith.mulf %311, %317 : vector<8x128xf32>
    %319 = arith.mulf %310, %318 : vector<8x128xf32>
    %320 = arith.truncf %319 : vector<8x128xf32> to vector<8x128xbf16>
    %c0_139 = arith.constant 0 : index
    %c0_140 = arith.constant 0 : index
    %321 = vector.load %arg11[%c0_139, %c0_140] : memref<256x128xbf16, #tpu.memory_space<vmem>>, vector<128x128xbf16>
    %cst_141 = arith.constant dense<0.000000e+00> : vector<8x128xf32>
    %322 = tpu.matmul %320, %321, %cst_141 {dimension_numbers = #tpu.dot_dimension_numbers<[1], [0], [0], [1], [0, 0, 1, 1], [], []>} : vector<8x128xbf16>, vector<128x128xbf16>, vector<8x128xf32> -> vector<8x128xf32>
    %c0_142 = arith.constant 0 : index
    %c0_143 = arith.constant 0 : index
    %c0_144 = arith.constant 0 : index
    %323 = vector.load %arg12[%c0_142, %c0_143, %c0_144] : memref<1x8x128xf32, #tpu.memory_space<vmem>>, vector<1x8x128xf32>
    %324 = vector.shape_cast %323 : vector<1x8x128xf32> to vector<8x128xf32>
    %325 = vector.shape_cast %322 : vector<8x128xf32> to vector<1x8x128xf32>
    tpu.vector_store %arg12[%c0_142, %c0_143, %c0_144], %325 {strides = array<i32>} : memref<1x8x128xf32, #tpu.memory_space<vmem>>, vector<1x8x128xf32>,
    %326 = vector.extract_strided_slice %58 {offsets = [0, 128], sizes = [8, 128], strides = [1, 1]} : vector<8x256xf32> to vector<8x128xf32>
    %327 = vector.shape_cast %326 : vector<8x128xf32> to vector<8x1x128xf32>
    %328 = vector.extract_strided_slice %62 {offsets = [0, 128], sizes = [16, 128], strides = [1, 1]} : vector<16x256xf32> to vector<16x128xf32>
    %329 = vector.shape_cast %328 : vector<16x128xf32> to vector<1x16x128xf32>
    %330 = vector.broadcast %327 : vector<8x1x128xf32> to vector<8x16x128xf32>
    %331 = vector.broadcast %329 : vector<1x16x128xf32> to vector<8x16x128xf32>
    %332 = arith.mulf %330, %331 : vector<8x16x128xf32>
    %333 = math.exp %332 : vector<8x16x128xf32>
    %c0_145 = arith.constant 0 : index
    %c0_146 = arith.constant 0 : index
    %c0_147 = arith.constant 0 : index
    %334 = vector.load %arg15[%c0_145, %c0_146, %c0_147] : memref<8x16x128xf32, #tpu.memory_space<vmem>>, vector<8x16x128xf32>
    tpu.vector_store %arg15[%c0_145, %c0_146, %c0_147], %333 {strides = array<i32>} : memref<8x16x128xf32, #tpu.memory_space<vmem>>, vector<8x16x128xf32>,
    %335 = vector.shape_cast %46 : vector<8x16xf32> to vector<8x16x1xf32>
    %336 = vector.extract_strided_slice %63 {offsets = [0, 128], sizes = [8, 128], strides = [1, 1]} : vector<8x256xf32> to vector<8x128xf32>
    %337 = vector.shape_cast %336 : vector<8x128xf32> to vector<8x1x128xf32>
    %338 = vector.broadcast %335 : vector<8x16x1xf32> to vector<8x16x128xf32>
    %339 = vector.broadcast %337 : vector<8x1x128xf32> to vector<8x16x128xf32>
    %340 = arith.mulf %338, %339 : vector<8x16x128xf32>
    %341 = arith.truncf %340 : vector<8x16x128xf32> to vector<8x16x128xbf16>
    %c0_148 = arith.constant 0 : index
    %c0_149 = arith.constant 0 : index
    %c0_150 = arith.constant 0 : index
    %342 = vector.load %arg16[%c0_148, %c0_149, %c0_150] : memref<8x16x128xbf16, #tpu.memory_space<vmem>>, vector<8x16x128xbf16>
    tpu.vector_store %arg16[%c0_148, %c0_149, %c0_150], %341 {strides = array<i32>} : memref<8x16x128xbf16, #tpu.memory_space<vmem>>, vector<8x16x128xbf16>,
    %c0_151 = arith.constant 0 : index
    %c128 = arith.constant 128 : index
    %343 = vector.load %arg13[%c0_151, %c128] : memref<16x256xf32, #tpu.memory_space<vmem>>, vector<16x128xf32>
    %c0_i32_152 = arith.constant 0 : i32
    %344 = arith.index_cast %c0_i32_152 : i32 to index
    %c0_153 = arith.constant 0 : index
    %c0_154 = arith.constant 0 : index
    %345 = vector.load %arg15[%344, %c0_153, %c0_154] : memref<8x16x128xf32, #tpu.memory_space<vmem>>, vector<1x16x128xf32>
    %346 = vector.shape_cast %345 : vector<1x16x128xf32> to vector<16x128xf32>
    %347 = arith.mulf %346, %343 : vector<16x128xf32>
    %348 = arith.index_cast %c0_i32_152 : i32 to index
    %c0_155 = arith.constant 0 : index
    %c0_156 = arith.constant 0 : index
    %349 = vector.load %arg16[%348, %c0_155, %c0_156] : memref<8x16x128xbf16, #tpu.memory_space<vmem>>, vector<1x16x128xbf16>
    %350 = vector.shape_cast %349 : vector<1x16x128xbf16> to vector<16x128xbf16>
    %351 = arith.extf %350 : vector<16x128xbf16> to vector<16x128xf32>
    %352 = arith.addf %347, %351 : vector<16x128xf32>
    %353 = arith.truncf %352 : vector<16x128xf32> to vector<16x128xbf16>
    %354 = arith.index_cast %c0_i32_152 : i32 to index
    %c0_157 = arith.constant 0 : index
    %c0_158 = arith.constant 0 : index
    %355 = vector.load %arg17[%354, %c0_157, %c0_158] : memref<8x16x128xbf16, #tpu.memory_space<vmem>>, vector<1x16x128xbf16>
    %356 = vector.shape_cast %355 : vector<1x16x128xbf16> to vector<16x128xbf16>
    %357 = vector.shape_cast %353 : vector<16x128xbf16> to vector<1x16x128xbf16>
    tpu.vector_store %arg17[%354, %c0_157, %c0_158], %357 {strides = array<i32>} : memref<8x16x128xbf16, #tpu.memory_space<vmem>>, vector<1x16x128xbf16>,
    %c1_i32_159 = arith.constant 1 : i32
    %358 = arith.index_cast %c1_i32_159 : i32 to index
    %c0_160 = arith.constant 0 : index
    %c0_161 = arith.constant 0 : index
    %359 = vector.load %arg15[%358, %c0_160, %c0_161] : memref<8x16x128xf32, #tpu.memory_space<vmem>>, vector<1x16x128xf32>
    %360 = vector.shape_cast %359 : vector<1x16x128xf32> to vector<16x128xf32>
    %361 = arith.mulf %360, %352 : vector<16x128xf32>
    %362 = arith.index_cast %c1_i32_159 : i32 to index
    %c0_162 = arith.constant 0 : index
    %c0_163 = arith.constant 0 : index
    %363 = vector.load %arg16[%362, %c0_162, %c0_163] : memref<8x16x128xbf16, #tpu.memory_space<vmem>>, vector<1x16x128xbf16>
    %364 = vector.shape_cast %363 : vector<1x16x128xbf16> to vector<16x128xbf16>
    %365 = arith.extf %364 : vector<16x128xbf16> to vector<16x128xf32>
    %366 = arith.addf %361, %365 : vector<16x128xf32>
    %367 = arith.truncf %366 : vector<16x128xf32> to vector<16x128xbf16>
    %368 = arith.index_cast %c1_i32_159 : i32 to index
    %c0_164 = arith.constant 0 : index
    %c0_165 = arith.constant 0 : index
    %369 = vector.load %arg17[%368, %c0_164, %c0_165] : memref<8x16x128xbf16, #tpu.memory_space<vmem>>, vector<1x16x128xbf16>
    %370 = vector.shape_cast %369 : vector<1x16x128xbf16> to vector<16x128xbf16>
    %371 = vector.shape_cast %367 : vector<16x128xbf16> to vector<1x16x128xbf16>
    tpu.vector_store %arg17[%368, %c0_164, %c0_165], %371 {strides = array<i32>} : memref<8x16x128xbf16, #tpu.memory_space<vmem>>, vector<1x16x128xbf16>,
    %c2_i32_166 = arith.constant 2 : i32
    %372 = arith.index_cast %c2_i32_166 : i32 to index
    %c0_167 = arith.constant 0 : index
    %c0_168 = arith.constant 0 : index
    %373 = vector.load %arg15[%372, %c0_167, %c0_168] : memref<8x16x128xf32, #tpu.memory_space<vmem>>, vector<1x16x128xf32>
    %374 = vector.shape_cast %373 : vector<1x16x128xf32> to vector<16x128xf32>
    %375 = arith.mulf %374, %366 : vector<16x128xf32>
    %376 = arith.index_cast %c2_i32_166 : i32 to index
    %c0_169 = arith.constant 0 : index
    %c0_170 = arith.constant 0 : index
    %377 = vector.load %arg16[%376, %c0_169, %c0_170] : memref<8x16x128xbf16, #tpu.memory_space<vmem>>, vector<1x16x128xbf16>
    %378 = vector.shape_cast %377 : vector<1x16x128xbf16> to vector<16x128xbf16>
    %379 = arith.extf %378 : vector<16x128xbf16> to vector<16x128xf32>
    %380 = arith.addf %375, %379 : vector<16x128xf32>
    %381 = arith.truncf %380 : vector<16x128xf32> to vector<16x128xbf16>
    %382 = arith.index_cast %c2_i32_166 : i32 to index
    %c0_171 = arith.constant 0 : index
    %c0_172 = arith.constant 0 : index
    %383 = vector.load %arg17[%382, %c0_171, %c0_172] : memref<8x16x128xbf16, #tpu.memory_space<vmem>>, vector<1x16x128xbf16>
    %384 = vector.shape_cast %383 : vector<1x16x128xbf16> to vector<16x128xbf16>
    %385 = vector.shape_cast %381 : vector<16x128xbf16> to vector<1x16x128xbf16>
    tpu.vector_store %arg17[%382, %c0_171, %c0_172], %385 {strides = array<i32>} : memref<8x16x128xbf16, #tpu.memory_space<vmem>>, vector<1x16x128xbf16>,
    %c3_i32_173 = arith.constant 3 : i32
    %386 = arith.index_cast %c3_i32_173 : i32 to index
    %c0_174 = arith.constant 0 : index
    %c0_175 = arith.constant 0 : index
    %387 = vector.load %arg15[%386, %c0_174, %c0_175] : memref<8x16x128xf32, #tpu.memory_space<vmem>>, vector<1x16x128xf32>
    %388 = vector.shape_cast %387 : vector<1x16x128xf32> to vector<16x128xf32>
    %389 = arith.mulf %388, %380 : vector<16x128xf32>
    %390 = arith.index_cast %c3_i32_173 : i32 to index
    %c0_176 = arith.constant 0 : index
    %c0_177 = arith.constant 0 : index
    %391 = vector.load %arg16[%390, %c0_176, %c0_177] : memref<8x16x128xbf16, #tpu.memory_space<vmem>>, vector<1x16x128xbf16>
    %392 = vector.shape_cast %391 : vector<1x16x128xbf16> to vector<16x128xbf16>
    %393 = arith.extf %392 : vector<16x128xbf16> to vector<16x128xf32>
    %394 = arith.addf %389, %393 : vector<16x128xf32>
    %395 = arith.truncf %394 : vector<16x128xf32> to vector<16x128xbf16>
    %396 = arith.index_cast %c3_i32_173 : i32 to index
    %c0_178 = arith.constant 0 : index
    %c0_179 = arith.constant 0 : index
    %397 = vector.load %arg17[%396, %c0_178, %c0_179] : memref<8x16x128xbf16, #tpu.memory_space<vmem>>, vector<1x16x128xbf16>
    %398 = vector.shape_cast %397 : vector<1x16x128xbf16> to vector<16x128xbf16>
    %399 = vector.shape_cast %395 : vector<16x128xbf16> to vector<1x16x128xbf16>
    tpu.vector_store %arg17[%396, %c0_178, %c0_179], %399 {strides = array<i32>} : memref<8x16x128xbf16, #tpu.memory_space<vmem>>, vector<1x16x128xbf16>,
    %c4_i32_180 = arith.constant 4 : i32
    %400 = arith.index_cast %c4_i32_180 : i32 to index
    %c0_181 = arith.constant 0 : index
    %c0_182 = arith.constant 0 : index
    %401 = vector.load %arg15[%400, %c0_181, %c0_182] : memref<8x16x128xf32, #tpu.memory_space<vmem>>, vector<1x16x128xf32>
    %402 = vector.shape_cast %401 : vector<1x16x128xf32> to vector<16x128xf32>
    %403 = arith.mulf %402, %394 : vector<16x128xf32>
    %404 = arith.index_cast %c4_i32_180 : i32 to index
    %c0_183 = arith.constant 0 : index
    %c0_184 = arith.constant 0 : index
    %405 = vector.load %arg16[%404, %c0_183, %c0_184] : memref<8x16x128xbf16, #tpu.memory_space<vmem>>, vector<1x16x128xbf16>
    %406 = vector.shape_cast %405 : vector<1x16x128xbf16> to vector<16x128xbf16>
    %407 = arith.extf %406 : vector<16x128xbf16> to vector<16x128xf32>
    %408 = arith.addf %403, %407 : vector<16x128xf32>
    %409 = arith.truncf %408 : vector<16x128xf32> to vector<16x128xbf16>
    %410 = arith.index_cast %c4_i32_180 : i32 to index
    %c0_185 = arith.constant 0 : index
    %c0_186 = arith.constant 0 : index
    %411 = vector.load %arg17[%410, %c0_185, %c0_186] : memref<8x16x128xbf16, #tpu.memory_space<vmem>>, vector<1x16x128xbf16>
    %412 = vector.shape_cast %411 : vector<1x16x128xbf16> to vector<16x128xbf16>
    %413 = vector.shape_cast %409 : vector<16x128xbf16> to vector<1x16x128xbf16>
    tpu.vector_store %arg17[%410, %c0_185, %c0_186], %413 {strides = array<i32>} : memref<8x16x128xbf16, #tpu.memory_space<vmem>>, vector<1x16x128xbf16>,
    %c5_i32_187 = arith.constant 5 : i32
    %414 = arith.index_cast %c5_i32_187 : i32 to index
    %c0_188 = arith.constant 0 : index
    %c0_189 = arith.constant 0 : index
    %415 = vector.load %arg15[%414, %c0_188, %c0_189] : memref<8x16x128xf32, #tpu.memory_space<vmem>>, vector<1x16x128xf32>
    %416 = vector.shape_cast %415 : vector<1x16x128xf32> to vector<16x128xf32>
    %417 = arith.mulf %416, %408 : vector<16x128xf32>
    %418 = arith.index_cast %c5_i32_187 : i32 to index
    %c0_190 = arith.constant 0 : index
    %c0_191 = arith.constant 0 : index
    %419 = vector.load %arg16[%418, %c0_190, %c0_191] : memref<8x16x128xbf16, #tpu.memory_space<vmem>>, vector<1x16x128xbf16>
    %420 = vector.shape_cast %419 : vector<1x16x128xbf16> to vector<16x128xbf16>
    %421 = arith.extf %420 : vector<16x128xbf16> to vector<16x128xf32>
    %422 = arith.addf %417, %421 : vector<16x128xf32>
    %423 = arith.truncf %422 : vector<16x128xf32> to vector<16x128xbf16>
    %424 = arith.index_cast %c5_i32_187 : i32 to index
    %c0_192 = arith.constant 0 : index
    %c0_193 = arith.constant 0 : index
    %425 = vector.load %arg17[%424, %c0_192, %c0_193] : memref<8x16x128xbf16, #tpu.memory_space<vmem>>, vector<1x16x128xbf16>
    %426 = vector.shape_cast %425 : vector<1x16x128xbf16> to vector<16x128xbf16>
    %427 = vector.shape_cast %423 : vector<16x128xbf16> to vector<1x16x128xbf16>
    tpu.vector_store %arg17[%424, %c0_192, %c0_193], %427 {strides = array<i32>} : memref<8x16x128xbf16, #tpu.memory_space<vmem>>, vector<1x16x128xbf16>,
    %c6_i32_194 = arith.constant 6 : i32
    %428 = arith.index_cast %c6_i32_194 : i32 to index
    %c0_195 = arith.constant 0 : index
    %c0_196 = arith.constant 0 : index
    %429 = vector.load %arg15[%428, %c0_195, %c0_196] : memref<8x16x128xf32, #tpu.memory_space<vmem>>, vector<1x16x128xf32>
    %430 = vector.shape_cast %429 : vector<1x16x128xf32> to vector<16x128xf32>
    %431 = arith.mulf %430, %422 : vector<16x128xf32>
    %432 = arith.index_cast %c6_i32_194 : i32 to index
    %c0_197 = arith.constant 0 : index
    %c0_198 = arith.constant 0 : index
    %433 = vector.load %arg16[%432, %c0_197, %c0_198] : memref<8x16x128xbf16, #tpu.memory_space<vmem>>, vector<1x16x128xbf16>
    %434 = vector.shape_cast %433 : vector<1x16x128xbf16> to vector<16x128xbf16>
    %435 = arith.extf %434 : vector<16x128xbf16> to vector<16x128xf32>
    %436 = arith.addf %431, %435 : vector<16x128xf32>
    %437 = arith.truncf %436 : vector<16x128xf32> to vector<16x128xbf16>
    %438 = arith.index_cast %c6_i32_194 : i32 to index
    %c0_199 = arith.constant 0 : index
    %c0_200 = arith.constant 0 : index
    %439 = vector.load %arg17[%438, %c0_199, %c0_200] : memref<8x16x128xbf16, #tpu.memory_space<vmem>>, vector<1x16x128xbf16>
    %440 = vector.shape_cast %439 : vector<1x16x128xbf16> to vector<16x128xbf16>
    %441 = vector.shape_cast %437 : vector<16x128xbf16> to vector<1x16x128xbf16>
    tpu.vector_store %arg17[%438, %c0_199, %c0_200], %441 {strides = array<i32>} : memref<8x16x128xbf16, #tpu.memory_space<vmem>>, vector<1x16x128xbf16>,
    %c7_i32_201 = arith.constant 7 : i32
    %442 = arith.index_cast %c7_i32_201 : i32 to index
    %c0_202 = arith.constant 0 : index
    %c0_203 = arith.constant 0 : index
    %443 = vector.load %arg15[%442, %c0_202, %c0_203] : memref<8x16x128xf32, #tpu.memory_space<vmem>>, vector<1x16x128xf32>
    %444 = vector.shape_cast %443 : vector<1x16x128xf32> to vector<16x128xf32>
    %445 = arith.mulf %444, %436 : vector<16x128xf32>
    %446 = arith.index_cast %c7_i32_201 : i32 to index
    %c0_204 = arith.constant 0 : index
    %c0_205 = arith.constant 0 : index
    %447 = vector.load %arg16[%446, %c0_204, %c0_205] : memref<8x16x128xbf16, #tpu.memory_space<vmem>>, vector<1x16x128xbf16>
    %448 = vector.shape_cast %447 : vector<1x16x128xbf16> to vector<16x128xbf16>
    %449 = arith.extf %448 : vector<16x128xbf16> to vector<16x128xf32>
    %450 = arith.addf %445, %449 : vector<16x128xf32>
    %451 = arith.truncf %450 : vector<16x128xf32> to vector<16x128xbf16>
    %452 = arith.index_cast %c7_i32_201 : i32 to index
    %c0_206 = arith.constant 0 : index
    %c0_207 = arith.constant 0 : index
    %453 = vector.load %arg17[%452, %c0_206, %c0_207] : memref<8x16x128xbf16, #tpu.memory_space<vmem>>, vector<1x16x128xbf16>
    %454 = vector.shape_cast %453 : vector<1x16x128xbf16> to vector<16x128xbf16>
    %455 = vector.shape_cast %451 : vector<16x128xbf16> to vector<1x16x128xbf16>
    tpu.vector_store %arg17[%452, %c0_206, %c0_207], %455 {strides = array<i32>} : memref<8x16x128xbf16, #tpu.memory_space<vmem>>, vector<1x16x128xbf16>,
    %c8_i32_208 = arith.constant 8 : i32
    %c0_209 = arith.constant 0 : index
    %c128_210 = arith.constant 128 : index
    %456 = vector.load %arg13[%c0_209, %c128_210] : memref<16x256xf32, #tpu.memory_space<vmem>>, vector<16x128xf32>
    tpu.vector_store %arg13[%c0_209, %c128_210], %450 {strides = array<i32>} : memref<16x256xf32, #tpu.memory_space<vmem>>, vector<16x128xf32>,
    %457 = vector.extract_strided_slice %47 {offsets = [0, 0], sizes = [8, 1], strides = [1, 1]} : vector<8x16xf32> to vector<8x1xf32>
    %c0_211 = arith.constant 0 : index
    %c0_212 = arith.constant 0 : index
    %c0_213 = arith.constant 0 : index
    %458 = vector.load %arg17[%c0_211, %c0_212, %c0_213] : memref<8x16x128xbf16, #tpu.memory_space<vmem>>, vector<8x1x128xbf16>
    %459 = vector.shape_cast %458 : vector<8x1x128xbf16> to vector<8x128xbf16>
    %460 = arith.extf %459 : vector<8x128xbf16> to vector<8x128xf32>
    %461 = vector.broadcast %457 : vector<8x1xf32> to vector<8x128xf32>
    %462 = arith.mulf %461, %460 : vector<8x128xf32>
    %463 = vector.extract_strided_slice %47 {offsets = [0, 1], sizes = [8, 1], strides = [1, 1]} : vector<8x16xf32> to vector<8x1xf32>
    %c0_214 = arith.constant 0 : index
    %c1_215 = arith.constant 1 : index
    %c0_216 = arith.constant 0 : index
    %464 = vector.load %arg17[%c0_214, %c1_215, %c0_216] : memref<8x16x128xbf16, #tpu.memory_space<vmem>>, vector<8x1x128xbf16>
    %465 = vector.shape_cast %464 : vector<8x1x128xbf16> to vector<8x128xbf16>
    %466 = arith.extf %465 : vector<8x128xbf16> to vector<8x128xf32>
    %467 = vector.broadcast %463 : vector<8x1xf32> to vector<8x128xf32>
    %468 = arith.mulf %467, %466 : vector<8x128xf32>
    %469 = arith.addf %462, %468 : vector<8x128xf32>
    %470 = vector.extract_strided_slice %47 {offsets = [0, 2], sizes = [8, 1], strides = [1, 1]} : vector<8x16xf32> to vector<8x1xf32>
    %c0_217 = arith.constant 0 : index
    %c2_218 = arith.constant 2 : index
    %c0_219 = arith.constant 0 : index
    %471 = vector.load %arg17[%c0_217, %c2_218, %c0_219] : memref<8x16x128xbf16, #tpu.memory_space<vmem>>, vector<8x1x128xbf16>
    %472 = vector.shape_cast %471 : vector<8x1x128xbf16> to vector<8x128xbf16>
    %473 = arith.extf %472 : vector<8x128xbf16> to vector<8x128xf32>
    %474 = vector.broadcast %470 : vector<8x1xf32> to vector<8x128xf32>
    %475 = arith.mulf %474, %473 : vector<8x128xf32>
    %476 = arith.addf %469, %475 : vector<8x128xf32>
    %477 = vector.extract_strided_slice %47 {offsets = [0, 3], sizes = [8, 1], strides = [1, 1]} : vector<8x16xf32> to vector<8x1xf32>
    %c0_220 = arith.constant 0 : index
    %c3_221 = arith.constant 3 : index
    %c0_222 = arith.constant 0 : index
    %478 = vector.load %arg17[%c0_220, %c3_221, %c0_222] : memref<8x16x128xbf16, #tpu.memory_space<vmem>>, vector<8x1x128xbf16>
    %479 = vector.shape_cast %478 : vector<8x1x128xbf16> to vector<8x128xbf16>
    %480 = arith.extf %479 : vector<8x128xbf16> to vector<8x128xf32>
    %481 = vector.broadcast %477 : vector<8x1xf32> to vector<8x128xf32>
    %482 = arith.mulf %481, %480 : vector<8x128xf32>
    %483 = arith.addf %476, %482 : vector<8x128xf32>
    %484 = vector.extract_strided_slice %47 {offsets = [0, 4], sizes = [8, 1], strides = [1, 1]} : vector<8x16xf32> to vector<8x1xf32>
    %c0_223 = arith.constant 0 : index
    %c4_224 = arith.constant 4 : index
    %c0_225 = arith.constant 0 : index
    %485 = vector.load %arg17[%c0_223, %c4_224, %c0_225] : memref<8x16x128xbf16, #tpu.memory_space<vmem>>, vector<8x1x128xbf16>
    %486 = vector.shape_cast %485 : vector<8x1x128xbf16> to vector<8x128xbf16>
    %487 = arith.extf %486 : vector<8x128xbf16> to vector<8x128xf32>
    %488 = vector.broadcast %484 : vector<8x1xf32> to vector<8x128xf32>
    %489 = arith.mulf %488, %487 : vector<8x128xf32>
    %490 = arith.addf %483, %489 : vector<8x128xf32>
    %491 = vector.extract_strided_slice %47 {offsets = [0, 5], sizes = [8, 1], strides = [1, 1]} : vector<8x16xf32> to vector<8x1xf32>
    %c0_226 = arith.constant 0 : index
    %c5_227 = arith.constant 5 : index
    %c0_228 = arith.constant 0 : index
    %492 = vector.load %arg17[%c0_226, %c5_227, %c0_228] : memref<8x16x128xbf16, #tpu.memory_space<vmem>>, vector<8x1x128xbf16>
    %493 = vector.shape_cast %492 : vector<8x1x128xbf16> to vector<8x128xbf16>
    %494 = arith.extf %493 : vector<8x128xbf16> to vector<8x128xf32>
    %495 = vector.broadcast %491 : vector<8x1xf32> to vector<8x128xf32>
    %496 = arith.mulf %495, %494 : vector<8x128xf32>
    %497 = arith.addf %490, %496 : vector<8x128xf32>
    %498 = vector.extract_strided_slice %47 {offsets = [0, 6], sizes = [8, 1], strides = [1, 1]} : vector<8x16xf32> to vector<8x1xf32>
    %c0_229 = arith.constant 0 : index
    %c6_230 = arith.constant 6 : index
    %c0_231 = arith.constant 0 : index
    %499 = vector.load %arg17[%c0_229, %c6_230, %c0_231] : memref<8x16x128xbf16, #tpu.memory_space<vmem>>, vector<8x1x128xbf16>
    %500 = vector.shape_cast %499 : vector<8x1x128xbf16> to vector<8x128xbf16>
    %501 = arith.extf %500 : vector<8x128xbf16> to vector<8x128xf32>
    %502 = vector.broadcast %498 : vector<8x1xf32> to vector<8x128xf32>
    %503 = arith.mulf %502, %501 : vector<8x128xf32>
    %504 = arith.addf %497, %503 : vector<8x128xf32>
    %505 = vector.extract_strided_slice %47 {offsets = [0, 7], sizes = [8, 1], strides = [1, 1]} : vector<8x16xf32> to vector<8x1xf32>
    %c0_232 = arith.constant 0 : index
    %c7_233 = arith.constant 7 : index
    %c0_234 = arith.constant 0 : index
    %506 = vector.load %arg17[%c0_232, %c7_233, %c0_234] : memref<8x16x128xbf16, #tpu.memory_space<vmem>>, vector<8x1x128xbf16>
    %507 = vector.shape_cast %506 : vector<8x1x128xbf16> to vector<8x128xbf16>
    %508 = arith.extf %507 : vector<8x128xbf16> to vector<8x128xf32>
    %509 = vector.broadcast %505 : vector<8x1xf32> to vector<8x128xf32>
    %510 = arith.mulf %509, %508 : vector<8x128xf32>
    %511 = arith.addf %504, %510 : vector<8x128xf32>
    %512 = vector.extract_strided_slice %47 {offsets = [0, 8], sizes = [8, 1], strides = [1, 1]} : vector<8x16xf32> to vector<8x1xf32>
    %c0_235 = arith.constant 0 : index
    %c8_236 = arith.constant 8 : index
    %c0_237 = arith.constant 0 : index
    %513 = vector.load %arg17[%c0_235, %c8_236, %c0_237] : memref<8x16x128xbf16, #tpu.memory_space<vmem>>, vector<8x1x128xbf16>
    %514 = vector.shape_cast %513 : vector<8x1x128xbf16> to vector<8x128xbf16>
    %515 = arith.extf %514 : vector<8x128xbf16> to vector<8x128xf32>
    %516 = vector.broadcast %512 : vector<8x1xf32> to vector<8x128xf32>
    %517 = arith.mulf %516, %515 : vector<8x128xf32>
    %518 = arith.addf %511, %517 : vector<8x128xf32>
    %519 = vector.extract_strided_slice %47 {offsets = [0, 9], sizes = [8, 1], strides = [1, 1]} : vector<8x16xf32> to vector<8x1xf32>
    %c0_238 = arith.constant 0 : index
    %c9_239 = arith.constant 9 : index
    %c0_240 = arith.constant 0 : index
    %520 = vector.load %arg17[%c0_238, %c9_239, %c0_240] : memref<8x16x128xbf16, #tpu.memory_space<vmem>>, vector<8x1x128xbf16>
    %521 = vector.shape_cast %520 : vector<8x1x128xbf16> to vector<8x128xbf16>
    %522 = arith.extf %521 : vector<8x128xbf16> to vector<8x128xf32>
    %523 = vector.broadcast %519 : vector<8x1xf32> to vector<8x128xf32>
    %524 = arith.mulf %523, %522 : vector<8x128xf32>
    %525 = arith.addf %518, %524 : vector<8x128xf32>
    %526 = vector.extract_strided_slice %47 {offsets = [0, 10], sizes = [8, 1], strides = [1, 1]} : vector<8x16xf32> to vector<8x1xf32>
    %c0_241 = arith.constant 0 : index
    %c10_242 = arith.constant 10 : index
    %c0_243 = arith.constant 0 : index
    %527 = vector.load %arg17[%c0_241, %c10_242, %c0_243] : memref<8x16x128xbf16, #tpu.memory_space<vmem>>, vector<8x1x128xbf16>
    %528 = vector.shape_cast %527 : vector<8x1x128xbf16> to vector<8x128xbf16>
    %529 = arith.extf %528 : vector<8x128xbf16> to vector<8x128xf32>
    %530 = vector.broadcast %526 : vector<8x1xf32> to vector<8x128xf32>
    %531 = arith.mulf %530, %529 : vector<8x128xf32>
    %532 = arith.addf %525, %531 : vector<8x128xf32>
    %533 = vector.extract_strided_slice %47 {offsets = [0, 11], sizes = [8, 1], strides = [1, 1]} : vector<8x16xf32> to vector<8x1xf32>
    %c0_244 = arith.constant 0 : index
    %c11_245 = arith.constant 11 : index
    %c0_246 = arith.constant 0 : index
    %534 = vector.load %arg17[%c0_244, %c11_245, %c0_246] : memref<8x16x128xbf16, #tpu.memory_space<vmem>>, vector<8x1x128xbf16>
    %535 = vector.shape_cast %534 : vector<8x1x128xbf16> to vector<8x128xbf16>
    %536 = arith.extf %535 : vector<8x128xbf16> to vector<8x128xf32>
    %537 = vector.broadcast %533 : vector<8x1xf32> to vector<8x128xf32>
    %538 = arith.mulf %537, %536 : vector<8x128xf32>
    %539 = arith.addf %532, %538 : vector<8x128xf32>
    %540 = vector.extract_strided_slice %47 {offsets = [0, 12], sizes = [8, 1], strides = [1, 1]} : vector<8x16xf32> to vector<8x1xf32>
    %c0_247 = arith.constant 0 : index
    %c12_248 = arith.constant 12 : index
    %c0_249 = arith.constant 0 : index
    %541 = vector.load %arg17[%c0_247, %c12_248, %c0_249] : memref<8x16x128xbf16, #tpu.memory_space<vmem>>, vector<8x1x128xbf16>
    %542 = vector.shape_cast %541 : vector<8x1x128xbf16> to vector<8x128xbf16>
    %543 = arith.extf %542 : vector<8x128xbf16> to vector<8x128xf32>
    %544 = vector.broadcast %540 : vector<8x1xf32> to vector<8x128xf32>
    %545 = arith.mulf %544, %543 : vector<8x128xf32>
    %546 = arith.addf %539, %545 : vector<8x128xf32>
    %547 = vector.extract_strided_slice %47 {offsets = [0, 13], sizes = [8, 1], strides = [1, 1]} : vector<8x16xf32> to vector<8x1xf32>
    %c0_250 = arith.constant 0 : index
    %c13_251 = arith.constant 13 : index
    %c0_252 = arith.constant 0 : index
    %548 = vector.load %arg17[%c0_250, %c13_251, %c0_252] : memref<8x16x128xbf16, #tpu.memory_space<vmem>>, vector<8x1x128xbf16>
    %549 = vector.shape_cast %548 : vector<8x1x128xbf16> to vector<8x128xbf16>
    %550 = arith.extf %549 : vector<8x128xbf16> to vector<8x128xf32>
    %551 = vector.broadcast %547 : vector<8x1xf32> to vector<8x128xf32>
    %552 = arith.mulf %551, %550 : vector<8x128xf32>
    %553 = arith.addf %546, %552 : vector<8x128xf32>
    %554 = vector.extract_strided_slice %47 {offsets = [0, 14], sizes = [8, 1], strides = [1, 1]} : vector<8x16xf32> to vector<8x1xf32>
    %c0_253 = arith.constant 0 : index
    %c14_254 = arith.constant 14 : index
    %c0_255 = arith.constant 0 : index
    %555 = vector.load %arg17[%c0_253, %c14_254, %c0_255] : memref<8x16x128xbf16, #tpu.memory_space<vmem>>, vector<8x1x128xbf16>
    %556 = vector.shape_cast %555 : vector<8x1x128xbf16> to vector<8x128xbf16>
    %557 = arith.extf %556 : vector<8x128xbf16> to vector<8x128xf32>
    %558 = vector.broadcast %554 : vector<8x1xf32> to vector<8x128xf32>
    %559 = arith.mulf %558, %557 : vector<8x128xf32>
    %560 = arith.addf %553, %559 : vector<8x128xf32>
    %561 = vector.extract_strided_slice %47 {offsets = [0, 15], sizes = [8, 1], strides = [1, 1]} : vector<8x16xf32> to vector<8x1xf32>
    %c0_256 = arith.constant 0 : index
    %c15_257 = arith.constant 15 : index
    %c0_258 = arith.constant 0 : index
    %562 = vector.load %arg17[%c0_256, %c15_257, %c0_258] : memref<8x16x128xbf16, #tpu.memory_space<vmem>>, vector<8x1x128xbf16>
    %563 = vector.shape_cast %562 : vector<8x1x128xbf16> to vector<8x128xbf16>
    %564 = arith.extf %563 : vector<8x128xbf16> to vector<8x128xf32>
    %565 = vector.broadcast %561 : vector<8x1xf32> to vector<8x128xf32>
    %566 = arith.mulf %565, %564 : vector<8x128xf32>
    %567 = arith.addf %560, %566 : vector<8x128xf32>
    %c0_259 = arith.constant 0 : index
    %c128_260 = arith.constant 128 : index
    %568 = vector.load %arg10[%c0_259, %c128_260] : memref<1x256xf32, #tpu.memory_space<vmem>>, vector<1x128xf32>
    %569 = vector.extract_strided_slice %39 {offsets = [0, 128], sizes = [8, 128], strides = [1, 1]} : vector<8x256xf32> to vector<8x128xf32>
    %570 = vector.broadcast %568 : vector<1x128xf32> to vector<8x128xf32>
    %571 = arith.mulf %570, %569 : vector<8x128xf32>
    %572 = arith.addf %567, %571 : vector<8x128xf32>
    %573 = vector.extract_strided_slice %9 {offsets = [0, 128], sizes = [8, 128], strides = [1, 1]} : vector<8x256xf32> to vector<8x128xf32>
    %cst_261 = arith.constant 0.000000e+00 : f32
    %574 = vector.broadcast %cst_261 : f32 to vector<8x128xf32>
    %575 = arith.subf %574, %573 : vector<8x128xf32>
    %576 = math.exp %575 : vector<8x128xf32>
    %cst_262 = arith.constant 1.000000e+00 : f32
    %577 = vector.broadcast %cst_262 : f32 to vector<8x128xf32>
    %578 = arith.addf %577, %576 : vector<8x128xf32>
    %579 = tpu.reciprocal %578 {approx = true} : vector<8x128xf32> -> vector<8x128xf32>
    %580 = arith.mulf %573, %579 : vector<8x128xf32>
    %581 = arith.mulf %572, %580 : vector<8x128xf32>
    %582 = arith.truncf %581 : vector<8x128xf32> to vector<8x128xbf16>
    %c128_263 = arith.constant 128 : index
    %c0_264 = arith.constant 0 : index
    %583 = vector.load %arg11[%c128_263, %c0_264] : memref<256x128xbf16, #tpu.memory_space<vmem>>, vector<128x128xbf16>
    %cst_265 = arith.constant dense<0.000000e+00> : vector<8x128xf32>
    %584 = tpu.matmul %582, %583, %cst_265 {dimension_numbers = #tpu.dot_dimension_numbers<[1], [0], [0], [1], [0, 0, 1, 1], [], []>} : vector<8x128xbf16>, vector<128x128xbf16>, vector<8x128xf32> -> vector<8x128xf32>
    %c0_266 = arith.constant 0 : index
    %c0_267 = arith.constant 0 : index
    %c0_268 = arith.constant 0 : index
    %585 = vector.load %arg12[%c0_266, %c0_267, %c0_268] : memref<1x8x128xf32, #tpu.memory_space<vmem>>, vector<1x8x128xf32>
    %586 = vector.shape_cast %585 : vector<1x8x128xf32> to vector<8x128xf32>
    %587 = arith.addf %586, %584 : vector<8x128xf32>
    %c0_269 = arith.constant 0 : index
    %c0_270 = arith.constant 0 : index
    %c0_271 = arith.constant 0 : index
    %588 = vector.load %arg12[%c0_269, %c0_270, %c0_271] : memref<1x8x128xf32, #tpu.memory_space<vmem>>, vector<1x8x128xf32>
    %589 = vector.shape_cast %588 : vector<1x8x128xf32> to vector<8x128xf32>
    %590 = vector.shape_cast %587 : vector<8x128xf32> to vector<1x8x128xf32>
    tpu.vector_store %arg12[%c0_269, %c0_270, %c0_271], %590 {strides = array<i32>} : memref<1x8x128xf32, #tpu.memory_space<vmem>>, vector<1x8x128xf32>,
    return
  }
  func.func @transform_0(%arg0: i32, %arg1: i32) -> (i32, i32, i32) {
    %c0_i32 = arith.constant 0 : i32
    %c0_i32_0 = arith.constant 0 : i32
    return %arg0, %arg1, %c0_i32 : i32, i32, i32
  }
  func.func @transform_1(%arg0: i32, %arg1: i32) -> (i32, i32) {
    %c0_i32 = arith.constant 0 : i32
    %c0_i32_0 = arith.constant 0 : i32
    %c0_i32_1 = arith.constant 0 : i32
    return %c0_i32, %c0_i32_0 : i32, i32
  }
  func.func @transform_2(%arg0: i32, %arg1: i32) -> (i32, i32) {
    %c0_i32 = arith.constant 0 : i32
    %c0_i32_0 = arith.constant 0 : i32
    %c0_i32_1 = arith.constant 0 : i32
    return %c0_i32, %c0_i32_0 : i32, i32
  }
  func.func @transform_3(%arg0: i32, %arg1: i32) -> (i32, i32) {
    %c0_i32 = arith.constant 0 : i32
    %c0_i32_0 = arith.constant 0 : i32
    %c0_i32_1 = arith.constant 0 : i32
    return %c0_i32, %c0_i32_0 : i32, i32
  }
  func.func @transform_4(%arg0: i32, %arg1: i32) -> (i32, i32) {
    %c0_i32 = arith.constant 0 : i32
    %c0_i32_0 = arith.constant 0 : i32
    %c0_i32_1 = arith.constant 0 : i32
    return %c0_i32, %c0_i32_0 : i32, i32
  }
  func.func @transform_5(%arg0: i32, %arg1: i32) -> (i32, i32) {
    %c0_i32 = arith.constant 0 : i32
    %c0_i32_0 = arith.constant 0 : i32
    %c0_i32_1 = arith.constant 0 : i32
    return %c0_i32, %c0_i32_0 : i32, i32
  }
  func.func @transform_6(%arg0: i32, %arg1: i32) -> (i32, i32) {
    %c0_i32 = arith.constant 0 : i32
    %c0_i32_0 = arith.constant 0 : i32
    %c0_i32_1 = arith.constant 0 : i32
    return %c0_i32, %c0_i32_0 : i32, i32
  }
  func.func @transform_7(%arg0: i32, %arg1: i32) -> (i32, i32) {
    %c0_i32 = arith.constant 0 : i32
    %c0_i32_0 = arith.constant 0 : i32
    %c0_i32_1 = arith.constant 0 : i32
    return %c0_i32, %c0_i32_0 : i32, i32
  }
  func.func @transform_8(%arg0: i32, %arg1: i32) -> (i32, i32) {
    %c0_i32 = arith.constant 0 : i32
    %c0_i32_0 = arith.constant 0 : i32
    %c0_i32_1 = arith.constant 0 : i32
    return %c0_i32, %c0_i32_0 : i32, i32
  }
  func.func @transform_9(%arg0: i32, %arg1: i32) -> (i32, i32) {
    %c0_i32 = arith.constant 0 : i32
    %c0_i32_0 = arith.constant 0 : i32
    %c0_i32_1 = arith.constant 0 : i32
    return %c0_i32, %c0_i32_0 : i32, i32
  }
  func.func @transform_10(%arg0: i32, %arg1: i32) -> (i32, i32, i32) {
    %c0_i32 = arith.constant 0 : i32
    %c0_i32_0 = arith.constant 0 : i32
    return %arg0, %arg1, %c0_i32 : i32, i32, i32
  }
}

</mosaic_0001>

<llo_original>
// kernel: tpu_custom_call.1
$region0: #{tpu_custom_call.1}
  #allocation0 [shape = 'u32[]', space=smem, size = 0x4, offset = 0x4, fixed_abs, tag = 'smem constant byte address 0x4 - core index']
  #allocation1 [shape = 'u32[72,128]{1,0:T(1,128)}', space=vmem, size = 0x9000, scoped, tag = 'internal scratch']
  #allocation2 [shape = 'f32[16,256]{1,0:T(8,128)}', space=vmem, size = 0x4000, scoped, tag = 'scratch operand']
  #allocation3 [shape = 'f32[16,256]{1,0:T(8,128)}', space=vmem, size = 0x4000, scoped, tag = 'scratch operand']
  #allocation4 [shape = 'f32[8,16,128]{2,1,0:T(8,128)}', space=vmem, size = 0x10000, scoped, tag = 'scratch operand']
  #allocation5 [shape = 'bf16[8,16,128]{2,1,0:T(8,128)(2,1)}', space=vmem, size = 0x8000, scoped, tag = 'scratch operand']
  #allocation6 [shape = 'bf16[8,16,128]{2,1,0:T(8,128)(2,1)}', space=vmem, size = 0x8000, scoped, tag = 'scratch operand']
  %s0 = inlined_call_operand.vmem [shape: f32[2,16,128], index: 0, kind: input, shape index: {}]
  %s1 = inlined_call_operand.hbm [shape: bf16[128,512], index: 1, kind: input, shape index: {}]
  %s2 = inlined_call_operand.vmem [shape: f32[4,256], index: 2, kind: input, shape index: {}]
  %s3 = inlined_call_operand.hbm [shape: f32[1,256], index: 3, kind: input, shape index: {}]
  %s4 = inlined_call_operand.vmem [shape: bf16[256,40], index: 4, kind: input, shape index: {}]
  %s5 = inlined_call_operand.vmem [shape: bf16[8,256], index: 5, kind: input, shape index: {}]
  %s6 = inlined_call_operand.hbm [shape: f32[1,256], index: 6, kind: input, shape index: {}]
  %s7 = inlined_call_operand.hbm [shape: f32[16,256], index: 7, kind: input, shape index: {}]
  %s8 = inlined_call_operand.hbm [shape: f32[1,256], index: 8, kind: input, shape index: {}]
  %s9 = inlined_call_operand.vmem [shape: bf16[256,128], index: 9, kind: input, shape index: {}]
  %s10 = inlined_call_operand.hbm [shape: f32[2,16,128], index: 10, kind: output, shape index: {}]
  %s11 = sld [smem:[#allocation0]]
  $region97: #{tpu_custom_call.1} parent=0
    _
  %s13 = ssub.s32 1, %s11
  %s14 = scalar_select 0, %s13, %s11
  $region1: #{tpu_custom_call.1} parent=0
    #allocation7 [shape = 'u8[131072]{0}', space=vmem, size = 0x20000, scoped, tag = 'input window, operand 1, single buffered']
    #allocation8 [shape = 's32[2]{0}', space=sflag, size = 0x8, scoped, tag = 'scoped memory for tpu_custom_call.1']
    #allocation9 [shape = 's32[2]{0}', space=sflag, size = 0x8, scoped, tag = 'scoped memory for tpu_custom_call.1']
    #allocation10 [shape = 'u8[1024]{0}', space=vmem, size = 0x400, scoped, tag = 'input window, operand 3, single buffered']
    #allocation11 [shape = 's32[1]{0}', space=sflag, size = 0x4, scoped, tag = 'scoped memory for tpu_custom_call.1']
    #allocation12 [shape = 'u8[1024]{0}', space=vmem, size = 0x400, scoped, tag = 'input window, operand 6, single buffered']
    #allocation13 [shape = 'u8[16384]{0}', space=vmem, size = 0x4000, scoped, tag = 'input window, operand 7, single buffered']
    #allocation14 [shape = 's32[1]{0}', space=sflag, size = 0x4, scoped, tag = 'scoped memory for tpu_custom_call.1']
    #allocation15 [shape = 'u8[1024]{0}', space=vmem, size = 0x400, scoped, tag = 'input window, operand 8, single buffered']
    #allocation16 [shape = 'u8[8192]{0}', space=vmem, size = 0x2000, scoped, tag = 'output window, operand 0']
    %15 = vsyncpa [#allocation8], 0
    %16 = vsyncpa [#allocation11], 0
    %17 = vsyncpa [#allocation14], 0
    %18 = vsyncpa [#allocation9], 0
    %s19 = scalar_lea.sflag [#allocation9], 1
    %20 = vsyncpa %s19, 0
    loop: start=0, step=1, limit=6
    $region2: #{tpu_custom_call.1} parent=1 // loop_pre_header
      _
    $region3: #{tpu_custom_call.1} parent=1 // loop_header
      %s22 = sphi 0, %s26
      %p23 = scmp.ge.s32.totalorder %s22, 6
      %s29 = sphi 0, %s41
      %s30 = sphi 0, %s37
      %s31 = sphi 0, %s29
      %s32 = sphi 0, %s30
      %s33 = sphi 0, %s31
      %s34 = sphi 0, %s32
      %s46 = sphi 0, %s48
      %s49 = sphi 0, %s46
      %s50 = sphi 0, %s49
      %s66 = sphi 0, %s50
      %s70 = sphi 0, %s70
      %s72 = sphi 0, %s70
      %s73 = sphi 0, %s72
      %s87 = sphi 0, %s73
      %s91 = sphi 0, %s91
      %s93 = sphi 0, %s91
      %s94 = sphi 0, %s93
      %s108 = sphi 0, %s94
      %s112 = sphi 0, %s112
      %s114 = sphi 0, %s112
      %s115 = sphi 0, %s114
      %s129 = sphi 0, %s115
      %s133 = sphi 0, %s133
      %s135 = sphi 0, %s133
      %s136 = sphi 0, %s135
      %s150 = sphi 0, %s136
      %s154 = sphi 0, %s154
      %s156 = sphi 0, %s154
      %s157 = sphi 0, %s156
      %s171 = sphi 0, %s157
      %s175 = sphi 0, %s175
      %s177 = sphi 0, %s175
      %s178 = sphi 0, %s177
      %s192 = sphi 0, %s178
      %s196 = sphi 0, %s196
      %s198 = sphi 0, %s196
      %s199 = sphi 0, %s198
      %s213 = sphi 0, %s199
      %s217 = sphi 0, %s217
      %s219 = sphi 0, %s217
      %s220 = sphi 0, %s219
      %s234 = sphi 0, %s220
      %s238 = sphi 0, %s238
      %s240 = sphi 0, %s238
      %s241 = sphi 0, %s240
      %s255 = sphi 0, %s241
      %s263 = sphi 0, %s265
      %s266 = sphi 0, %s263
      %s267 = sphi 0, %s266
      %s283 = sphi 0, %s267
    $region4: #{tpu_custom_call.1} parent=1 // loop_header_branch
      %25 = sbr.rel (%p23) target = $region8
    $region5: #{tpu_custom_call.1} parent=1 // loop_body
      %s27 = ssub.s32 %s22, 1
      %s28 = ssub.s32 %s22, 2
      %s35 = sadd.s32 1, %s30
      %p36 = scmp.ge.s32.totalorder %s35, 2
      %s37 = scalar_select %p36, 0, %s35
      %s38 = sadd.s32 1, %s29
      %s39 = scalar_select %p36, %s38, %s29
      %p40 = scmp.ge.s32.totalorder %s39, 2
      %s41 = scalar_select %p40, 0, %s39
      %s42 = ssub.s32 %s29, %s41
      %s43 = ssub.s32 %s30, %s37
      %s44 = sor.u32 %s42, %s43
      %p45 = scmp.eq.s32.totalorder %s44, 0
      %s47 = sadd.s32 %s46, 1
      %s48 = scalar_select %p45, %s46, %s47
      %p51 = pneg %p45
      %p52 = scmp.eq.s32.totalorder %s22, 3
      %p53 = por %p51, %p52
      %p54 = scmp.ne.s32.totalorder %s46, %s49
      %p55 = scmp.eq.s32.totalorder %s22, 0
      %p56 = por %p54, %p55
      %p57 = scmp.ne.s32.totalorder %s46, %s49
      %p58 = scmp.eq.s32.totalorder %s27, 3
      %p59 = por %p57, %p58
      %p60 = scmp.ne.s32.totalorder %s49, %s50
      %p61 = scmp.eq.s32.totalorder %s27, 0
      %p62 = por %p60, %p61
      %p63 = scmp.ne.s32.totalorder %s49, %s50
      %p64 = scmp.eq.s32.totalorder %s28, 3
      %p65 = por %p63, %p64
      %p67 = scmp.ne.s32.totalorder %s50, %s66
      %p68 = scmp.eq.s32.totalorder %s28, 0
      %p69 = por %p67, %p68
      %s71 = sadd.s32 %s70, 1
      %p74 = scmp.eq.s32.totalorder %s22, 3
      %p75 = scmp.ne.s32.totalorder %s70, %s72
      %p76 = scmp.eq.s32.totalorder %s22, 0
      %p77 = por %p75, %p76
      %p78 = scmp.ne.s32.totalorder %s70, %s72
      %p79 = scmp.eq.s32.totalorder %s27, 3
      %p80 = por %p78, %p79
      %p81 = scmp.ne.s32.totalorder %s72, %s73
      %p82 = scmp.eq.s32.totalorder %s27, 0
      %p83 = por %p81, %p82
      %p84 = scmp.ne.s32.totalorder %s72, %s73
      %p85 = scmp.eq.s32.totalorder %s28, 3
      %p86 = por %p84, %p85
      %p88 = scmp.ne.s32.totalorder %s73, %s87
      %p89 = scmp.eq.s32.totalorder %s28, 0
      %p90 = por %p88, %p89
      %s92 = sadd.s32 %s91, 1
      %p95 = scmp.eq.s32.totalorder %s22, 3
      %p96 = scmp.ne.s32.totalorder %s91, %s93
      %p97 = scmp.eq.s32.totalorder %s22, 0
      %p98 = por %p96, %p97
      %p99 = scmp.ne.s32.totalorder %s91, %s93
      %p100 = scmp.eq.s32.totalorder %s27, 3
      %p101 = por %p99, %p100
      %p102 = scmp.ne.s32.totalorder %s93, %s94
      %p103 = scmp.eq.s32.totalorder %s27, 0
      %p104 = por %p102, %p103
      %p105 = scmp.ne.s32.totalorder %s93, %s94
      %p106 = scmp.eq.s32.totalorder %s28, 3
      %p107 = por %p105, %p106
      %p109 = scmp.ne.s32.totalorder %s94, %s108
      %p110 = scmp.eq.s32.totalorder %s28, 0
      %p111 = por %p109, %p110
      %s113 = sadd.s32 %s112, 1
      %p116 = scmp.eq.s32.totalorder %s22, 3
      %p117 = scmp.ne.s32.totalorder %s112, %s114
      %p118 = scmp.eq.s32.totalorder %s22, 0
      %p119 = por %p117, %p118
      %p120 = scmp.ne.s32.totalorder %s112, %s114
      %p121 = scmp.eq.s32.totalorder %s27, 3
      %p122 = por %p120, %p121
      %p123 = scmp.ne.s32.totalorder %s114, %s115
      %p124 = scmp.eq.s32.totalorder %s27, 0
      %p125 = por %p123, %p124
      %p126 = scmp.ne.s32.totalorder %s114, %s115
      %p127 = scmp.eq.s32.totalorder %s28, 3
      %p128 = por %p126, %p127
      %p130 = scmp.ne.s32.totalorder %s115, %s129
      %p131 = scmp.eq.s32.totalorder %s28, 0
      %p132 = por %p130, %p131
      %s134 = sadd.s32 %s133, 1
      %p137 = scmp.eq.s32.totalorder %s22, 3
      %p138 = scmp.ne.s32.totalorder %s133, %s135
      %p139 = scmp.eq.s32.totalorder %s22, 0
      %p140 = por %p138, %p139
      %p141 = scmp.ne.s32.totalorder %s133, %s135
      %p142 = scmp.eq.s32.totalorder %s27, 3
      %p143 = por %p141, %p142
      %p144 = scmp.ne.s32.totalorder %s135, %s136
      %p145 = scmp.eq.s32.totalorder %s27, 0
      %p146 = por %p144, %p145
      %p147 = scmp.ne.s32.totalorder %s135, %s136
      %p148 = scmp.eq.s32.totalorder %s28, 3
      %p149 = por %p147, %p148
      %p151 = scmp.ne.s32.totalorder %s136, %s150
      %p152 = scmp.eq.s32.totalorder %s28, 0
      %p153 = por %p151, %p152
      %s155 = sadd.s32 %s154, 1
      %p158 = scmp.eq.s32.totalorder %s22, 3
      %p159 = scmp.ne.s32.totalorder %s154, %s156
      %p160 = scmp.eq.s32.totalorder %s22, 0
      %p161 = por %p159, %p160
      %p162 = scmp.ne.s32.totalorder %s154, %s156
      %p163 = scmp.eq.s32.totalorder %s27, 3
      %p164 = por %p162, %p163
      %p165 = scmp.ne.s32.totalorder %s156, %s157
      %p166 = scmp.eq.s32.totalorder %s27, 0
      %p167 = por %p165, %p166
      %p168 = scmp.ne.s32.totalorder %s156, %s157
      %p169 = scmp.eq.s32.totalorder %s28, 3
      %p170 = por %p168, %p169
      %p172 = scmp.ne.s32.totalorder %s157, %s171
      %p173 = scmp.eq.s32.totalorder %s28, 0
      %p174 = por %p172, %p173
      %s176 = sadd.s32 %s175, 1
      %p179 = scmp.eq.s32.totalorder %s22, 3
      %p180 = scmp.ne.s32.totalorder %s175, %s177
      %p181 = scmp.eq.s32.totalorder %s22, 0
      %p182 = por %p180, %p181
      %p183 = scmp.ne.s32.totalorder %s175, %s177
      %p184 = scmp.eq.s32.totalorder %s27, 3
      %p185 = por %p183, %p184
      %p186 = scmp.ne.s32.totalorder %s177, %s178
      %p187 = scmp.eq.s32.totalorder %s27, 0
      %p188 = por %p186, %p187
      %p189 = scmp.ne.s32.totalorder %s177, %s178
      %p190 = scmp.eq.s32.totalorder %s28, 3
      %p191 = por %p189, %p190
      %p193 = scmp.ne.s32.totalorder %s178, %s192
      %p194 = scmp.eq.s32.totalorder %s28, 0
      %p195 = por %p193, %p194
      %s197 = sadd.s32 %s196, 1
      %p200 = scmp.eq.s32.totalorder %s22, 3
      %p201 = scmp.ne.s32.totalorder %s196, %s198
      %p202 = scmp.eq.s32.totalorder %s22, 0
      %p203 = por %p201, %p202
      %p204 = scmp.ne.s32.totalorder %s196, %s198
      %p205 = scmp.eq.s32.totalorder %s27, 3
      %p206 = por %p204, %p205
      %p207 = scmp.ne.s32.totalorder %s198, %s199
      %p208 = scmp.eq.s32.totalorder %s27, 0
      %p209 = por %p207, %p208
      %p210 = scmp.ne.s32.totalorder %s198, %s199
      %p211 = scmp.eq.s32.totalorder %s28, 3
      %p212 = por %p210, %p211
      %p214 = scmp.ne.s32.totalorder %s199, %s213
      %p215 = scmp.eq.s32.totalorder %s28, 0
      %p216 = por %p214, %p215
      %s218 = sadd.s32 %s217, 1
      %p221 = scmp.eq.s32.totalorder %s22, 3
      %p222 = scmp.ne.s32.totalorder %s217, %s219
      %p223 = scmp.eq.s32.totalorder %s22, 0
      %p224 = por %p222, %p223
      %p225 = scmp.ne.s32.totalorder %s217, %s219
      %p226 = scmp.eq.s32.totalorder %s27, 3
      %p227 = por %p225, %p226
      %p228 = scmp.ne.s32.totalorder %s219, %s220
      %p229 = scmp.eq.s32.totalorder %s27, 0
      %p230 = por %p228, %p229
      %p231 = scmp.ne.s32.totalorder %s219, %s220
      %p232 = scmp.eq.s32.totalorder %s28, 3
      %p233 = por %p231, %p232
      %p235 = scmp.ne.s32.totalorder %s220, %s234
      %p236 = scmp.eq.s32.totalorder %s28, 0
      %p237 = por %p235, %p236
      %s239 = sadd.s32 %s238, 1
      %p242 = scmp.eq.s32.totalorder %s22, 3
      %p243 = scmp.ne.s32.totalorder %s238, %s240
      %p244 = scmp.eq.s32.totalorder %s22, 0
      %p245 = por %p243, %p244
      %p246 = scmp.ne.s32.totalorder %s238, %s240
      %p247 = scmp.eq.s32.totalorder %s27, 3
      %p248 = por %p246, %p247
      %p249 = scmp.ne.s32.totalorder %s240, %s241
      %p250 = scmp.eq.s32.totalorder %s27, 0
      %p251 = por %p249, %p250
      %p252 = scmp.ne.s32.totalorder %s240, %s241
      %p253 = scmp.eq.s32.totalorder %s28, 3
      %p254 = por %p252, %p253
      %p256 = scmp.ne.s32.totalorder %s241, %s255
      %p257 = scmp.eq.s32.totalorder %s28, 0
      %p258 = por %p256, %p257
      %s259 = ssub.s32 %s29, %s41
      %s260 = ssub.s32 %s30, %s37
      %s261 = sor.u32 %s259, %s260
      %p262 = scmp.eq.s32.totalorder %s261, 0
      %s264 = sadd.s32 %s263, 1
      %s265 = scalar_select %p262, %s263, %s264
      %p268 = pneg %p262
      %p269 = scmp.eq.s32.totalorder %s22, 3
      %p270 = por %p268, %p269
      %p271 = scmp.ne.s32.totalorder %s263, %s266
      %p272 = scmp.eq.s32.totalorder %s22, 0
      %p273 = por %p271, %p272
      %p274 = scmp.ne.s32.totalorder %s263, %s266
      %p275 = scmp.eq.s32.totalorder %s27, 3
      %p276 = por %p274, %p275
      %p277 = scmp.ne.s32.totalorder %s266, %s267
      %p278 = scmp.eq.s32.totalorder %s27, 0
      %p279 = por %p277, %p278
      %p280 = scmp.ne.s32.totalorder %s266, %s267
      %p281 = scmp.eq.s32.totalorder %s28, 3
      %p282 = por %p280, %p281
      %p284 = scmp.ne.s32.totalorder %s267, %s283
      %p285 = scmp.eq.s32.totalorder %s28, 0
      %p286 = por %p284, %p285
      %p287 = scmp.le.s32.totalorder 1, %s22
      %p288 = scmp.lt.s32.totalorder %s22, 5
      %p289 = pnand %p287, %p288
      %p290 = pneg %p289
      // Predicated region
      $region9: #{tpu_custom_call.1} parent=5 // pred_check
        _
      $region10: #{tpu_custom_call.1} parent=5 // pred_check_branch
        %292 = sbr.rel (%p289) target = $region12
      $region11: #{tpu_custom_call.1} parent=5 // pred_region
        %s293 = ssub.s32 %s22, 1
        // Predicated region
        $region13: #{tpu_custom_call.1} parent=11 // pred_check
          %p294 = pneg %p83
        $region14: #{tpu_custom_call.1} parent=11 // pred_check_branch
          %296 = sbr.rel (%p294) target = $region16
        $region15: #{tpu_custom_call.1} parent=11 // pred_region
          %298 = vsyncadd [#allocation8], 0
          %s299 = sshll.u32 %s1, 4
          %s300 = int_to_ptr.hbm [resolvable:$true] %s299
          %s301 = sshll.u32 [#allocation7], 4
          %s302 = int_to_ptr.vmem [resolvable:$true] %s301
          %307 = dma.hbm_to_vmem [thread:$0]  %s300, 4096, %s302, [#allocation8], 256, 256, 16
        $region16: #{tpu_custom_call.1} parent=11 // pred_fallthru
          _
        // Predicated region
        $region17: #{tpu_custom_call.1} parent=11 // pred_check
          %p308 = pneg %p104
        $region18: #{tpu_custom_call.1} parent=11 // pred_check_branch
          %310 = sbr.rel (%p308) target = $region20
        $region19: #{tpu_custom_call.1} parent=11 // pred_region
          _
        $region20: #{tpu_custom_call.1} parent=11 // pred_fallthru
          _
        // Predicated region
        $region21: #{tpu_custom_call.1} parent=11 // pred_check
          %p311 = pneg %p125
        $region22: #{tpu_custom_call.1} parent=11 // pred_check_branch
          %313 = sbr.rel (%p311) target = $region24
        $region23: #{tpu_custom_call.1} parent=11 // pred_region
          %315 = vsyncadd [#allocation11], 0
          %s317 = sshll.u32 %s3, 4
          %s318 = int_to_ptr.hbm [resolvable:$true] %s317
          %s319 = sshll.u32 [#allocation10], 4
          %s320 = int_to_ptr.vmem [resolvable:$true] %s319
          %322 = dma.hbm_to_vmem [thread:$0]  %s318, 32, %s320, [#allocation11]
        $region24: #{tpu_custom_call.1} parent=11 // pred_fallthru
          _
        // Predicated region
        $region25: #{tpu_custom_call.1} parent=11 // pred_check
          %p323 = pneg %p146
        $region26: #{tpu_custom_call.1} parent=11 // pred_check_branch
          %325 = sbr.rel (%p323) target = $region28
        $region27: #{tpu_custom_call.1} parent=11 // pred_region
          _
        $region28: #{tpu_custom_call.1} parent=11 // pred_fallthru
          _
        // Predicated region
        $region29: #{tpu_custom_call.1} parent=11 // pred_check
          %p326 = pneg %p167
        $region30: #{tpu_custom_call.1} parent=11 // pred_check_branch
          %328 = sbr.rel (%p326) target = $region32
        $region31: #{tpu_custom_call.1} parent=11 // pred_region
          _
        $region32: #{tpu_custom_call.1} parent=11 // pred_fallthru
          _
        // Predicated region
        $region33: #{tpu_custom_call.1} parent=11 // pred_check
          %p329 = pneg %p188
        $region34: #{tpu_custom_call.1} parent=11 // pred_check_branch
          %331 = sbr.rel (%p329) target = $region36
        $region35: #{tpu_custom_call.1} parent=11 // pred_region
          %333 = vsyncadd [#allocation11], 0
          %s335 = sshll.u32 %s6, 4
          %s336 = int_to_ptr.hbm [resolvable:$true] %s335
          %s337 = sshll.u32 [#allocation12], 4
          %s338 = int_to_ptr.vmem [resolvable:$true] %s337
          %340 = dma.hbm_to_vmem [thread:$0]  %s336, 32, %s338, [#allocation11]
        $region36: #{tpu_custom_call.1} parent=11 // pred_fallthru
          _
        // Predicated region
        $region37: #{tpu_custom_call.1} parent=11 // pred_check
          %p341 = pneg %p209
        $region38: #{tpu_custom_call.1} parent=11 // pred_check_branch
          %343 = sbr.rel (%p341) target = $region40
        $region39: #{tpu_custom_call.1} parent=11 // pred_region
          %345 = vsyncadd [#allocation14], 0
          %s346 = sshll.u32 %s7, 4
          %s347 = int_to_ptr.hbm [resolvable:$true] %s346
          %s348 = sshll.u32 [#allocation13], 4
          %s349 = int_to_ptr.vmem [resolvable:$true] %s348
          %354 = dma.hbm_to_vmem [thread:$0]  %s347, 512, %s349, [#allocation14], 256, 256, 16
        $region40: #{tpu_custom_call.1} parent=11 // pred_fallthru
          _
        // Predicated region
        $region41: #{tpu_custom_call.1} parent=11 // pred_check
          %p355 = pneg %p230
        $region42: #{tpu_custom_call.1} parent=11 // pred_check_branch
          %357 = sbr.rel (%p355) target = $region44
        $region43: #{tpu_custom_call.1} parent=11 // pred_region
          %359 = vsyncadd [#allocation14], 0
          %s361 = sshll.u32 %s8, 4
          %s362 = int_to_ptr.hbm [resolvable:$true] %s361
          %s363 = sshll.u32 [#allocation15], 4
          %s364 = int_to_ptr.vmem [resolvable:$true] %s363
          %366 = dma.hbm_to_vmem [thread:$0]  %s362, 32, %s364, [#allocation14]
        $region44: #{tpu_custom_call.1} parent=11 // pred_fallthru
          _
        // Predicated region
        $region45: #{tpu_custom_call.1} parent=11 // pred_check
          %p367 = pneg %p251
        $region46: #{tpu_custom_call.1} parent=11 // pred_check_branch
          %369 = sbr.rel (%p367) target = $region48
        $region47: #{tpu_custom_call.1} parent=11 // pred_region
          _
        $region48: #{tpu_custom_call.1} parent=11 // pred_fallthru
          _
      $region12: #{tpu_custom_call.1} parent=5 // pred_fallthru
        _
      %p370 = scmp.lt.s32.totalorder %s22, 4
      // Predicated region
      $region49: #{tpu_custom_call.1} parent=5 // pred_check
        %p371 = pneg %p370
      $region50: #{tpu_custom_call.1} parent=5 // pred_check_branch
        %373 = sbr.rel (%p371) target = $region52
      $region51: #{tpu_custom_call.1} parent=5 // pred_region
        // Predicated region
        $region53: #{tpu_custom_call.1} parent=51 // pred_check
          %p374 = pneg %p56
        $region54: #{tpu_custom_call.1} parent=51 // pred_check_branch
          %376 = sbr.rel (%p374) target = $region56
        $region55: #{tpu_custom_call.1} parent=51 // pred_region
          %p377 = scmp.lt.s32.totalorder %s29, 1
          %s378 = scalar_select %p377, %s29, 1
          %p379 = scmp.lt.s32.totalorder %s30, 1
          %s380 = scalar_select %p379, %s30, 1
          %s381 = smul.addr %s378, 2
          %s382 = sadd.s32 %s380, %s381
          %s383 = smul.addr %s382, 8
          %s384 = scalar_lea.vmem %s0, %s383
        $region56: #{tpu_custom_call.1} parent=51 // pred_fallthru
          _
      $region52: #{tpu_custom_call.1} parent=5 // pred_fallthru
        _
      %p385 = scmp.le.s32.totalorder 1, %s22
      %p386 = scmp.lt.s32.totalorder %s22, 5
      %p387 = pnand %p385, %p386
      %p388 = pneg %p387
      // Predicated region
      $region57: #{tpu_custom_call.1} parent=5 // pred_check
        _
      $region58: #{tpu_custom_call.1} parent=5 // pred_check_branch
        %390 = sbr.rel (%p387) target = $region60
      $region59: #{tpu_custom_call.1} parent=5 // pred_region
        %s391 = ssub.s32 %s22, 1
        // Predicated region
        $region61: #{tpu_custom_call.1} parent=59 // pred_check
          %p392 = pneg %p83
        $region62: #{tpu_custom_call.1} parent=59 // pred_check_branch
          %394 = sbr.rel (%p392) target = $region64
        $region63: #{tpu_custom_call.1} parent=59 // pred_region
          %396 = dma.done [#allocation8], 4096
        $region64: #{tpu_custom_call.1} parent=59 // pred_fallthru
          _
        // Predicated region
        $region65: #{tpu_custom_call.1} parent=59 // pred_check
          %p397 = pneg %p125
        $region66: #{tpu_custom_call.1} parent=59 // pred_check_branch
          %399 = sbr.rel (%p397) target = $region68
        $region67: #{tpu_custom_call.1} parent=59 // pred_region
          %401 = dma.done [#allocation11], 32
        $region68: #{tpu_custom_call.1} parent=59 // pred_fallthru
          _
        // Predicated region
        $region69: #{tpu_custom_call.1} parent=59 // pred_check
          %p402 = pneg %p188
        $region70: #{tpu_custom_call.1} parent=59 // pred_check_branch
          %404 = sbr.rel (%p402) target = $region72
        $region71: #{tpu_custom_call.1} parent=59 // pred_region
          %406 = dma.done [#allocation11], 32
        $region72: #{tpu_custom_call.1} parent=59 // pred_fallthru
          _
        // Predicated region
        $region73: #{tpu_custom_call.1} parent=59 // pred_check
          %p407 = pneg %p209
        $region74: #{tpu_custom_call.1} parent=59 // pred_check_branch
          %409 = sbr.rel (%p407) target = $region76
        $region75: #{tpu_custom_call.1} parent=59 // pred_region
          %411 = dma.done [#allocation14], 512
        $region76: #{tpu_custom_call.1} parent=59 // pred_fallthru
          _
        // Predicated region
        $region77: #{tpu_custom_call.1} parent=59 // pred_check
          %p412 = pneg %p230
        $region78: #{tpu_custom_call.1} parent=59 // pred_check_branch
          %414 = sbr.rel (%p412) target = $region80
        $region79: #{tpu_custom_call.1} parent=59 // pred_region
          %416 = dma.done [#allocation14], 32
        $region80: #{tpu_custom_call.1} parent=59 // pred_fallthru
          _
        %p417 = scmp.lt.s32.totalorder %s31, 1
        %s418 = scalar_select %p417, %s31, 1
        %p419 = scmp.lt.s32.totalorder %s32, 1
        %s420 = scalar_select %p419, %s32, 1
        %s421 = smul.addr %s418, 2
        %s422 = sadd.s32 %s420, %s421
        %s423 = smul.addr %s422, 8
        %s424 = scalar_lea.vmem %s0, %s423
        %p425 = pneg %p62
        %p426 = pneg %p59
        %p427 = pneg %p83
        %p428 = pneg %p80
        %p429 = pneg %p104
        %p430 = pneg %p101
        %p431 = pneg %p125
        %p432 = pneg %p122
        %p433 = pneg %p146
        %p434 = pneg %p143
        %p435 = pneg %p167
        %p436 = pneg %p164
        %p437 = pneg %p188
        %p438 = pneg %p185
        %p439 = pneg %p209
        %p440 = pneg %p206
        %p441 = pneg %p230
        %p442 = pneg %p227
        %p443 = pneg %p251
        %p444 = pneg %p248
        %p445 = pneg %p279
        %p446 = pneg %p276
        %s447 = sand.u32 %s266, 1
        %s448 = scalar_lea.sflag [#allocation9], %s447
        %s449 = sand.u32 %s266, 1
        %s450 = smul.addr %s449, 8
        %s451 = scalar_lea.vmem [#allocation16], %s450
        %p452 = scmp.lt.s32.totalorder %s31, 1
        %s453 = scalar_select %p452, %s31, 1
        %p454 = scmp.lt.s32.totalorder %s32, 1
        %s455 = scalar_select %p454, %s32, 1
        %s456 = smul.addr %s453, 2
        %s457 = sadd.s32 %s455, %s456
        %s458 = smul.addr %s457, 8
        %s459 = scalar_lea.vmem %s0, %s458
        %p461 = scmp.eq.s32.totalorder %s32, 0
        // Predicated region
        $region81: #{tpu_custom_call.1} parent=59 // pred_check
          %p462 = pneg %p461
        $region82: #{tpu_custom_call.1} parent=59 // pred_check_branch
          %464 = sbr.rel (%p462) target = $region84
        $region83: #{tpu_custom_call.1} parent=59 // pred_region
          %465 = vst [vmem:[#allocation2] sm:$0xff] 0.0
          %466 = vst [vmem:[#allocation2 + $0x8] sm:$0xff] 0.0
          %467 = vst [vmem:[#allocation2 + $0x10] sm:$0xff] 0.0
          %468 = vst [vmem:[#allocation2 + $0x18] sm:$0xff] 0.0
          %469 = vst [vmem:[#allocation3] sm:$0xff] 0.0
          %470 = vst [vmem:[#allocation3 + $0x8] sm:$0xff] 0.0
        $region84: #{tpu_custom_call.1} parent=59 // pred_fallthru
          _
        %v471 = vld [vmem:[%s459] sm:$0xff]
        %v472 = vpack.c.bf16 %v471, %v471
        %v473 = vld [vmem:[#allocation7] sm:$0xff]
        %v474 = vld [vmem:[#allocation7 + $0x8] sm:$0xff]
        %v475 = vld [vmem:[#allocation7 + $0x10] sm:$0xff]
        %v476 = vld [vmem:[#allocation7 + $0x18] sm:$0xff]
        %v477 = vld [vmem:[#allocation7 + $0x20] sm:$0xff]
        %v478 = vld [vmem:[#allocation7 + $0x28] sm:$0xff]
        %v479 = vld [vmem:[#allocation7 + $0x30] sm:$0xff]
        %v480 = vld [vmem:[#allocation7 + $0x38] sm:$0xff]
        %v481 = vld [vmem:[#allocation7 + $0x40] sm:$0xff]
        %v482 = vld [vmem:[#allocation7 + $0x48] sm:$0xff]
        %v483 = vld [vmem:[#allocation7 + $0x50] sm:$0xff]
        %v484 = vld [vmem:[#allocation7 + $0x58] sm:$0xff]
        %v485 = vld [vmem:[#allocation7 + $0x60] sm:$0xff]
        %v486 = vld [vmem:[#allocation7 + $0x68] sm:$0xff]
        %v487 = vld [vmem:[#allocation7 + $0x70] sm:$0xff]
        %v488 = vld [vmem:[#allocation7 + $0x78] sm:$0xff]
        %v489 = vld [vmem:[#allocation7 + $0x80] sm:$0xff]
        %v490 = vld [vmem:[#allocation7 + $0x88] sm:$0xff]
        %v491 = vld [vmem:[#allocation7 + $0x90] sm:$0xff]
        %v492 = vld [vmem:[#allocation7 + $0x98] sm:$0xff]
        %v493 = vld [vmem:[#allocation7 + $0xa0] sm:$0xff]
        %v494 = vld [vmem:[#allocation7 + $0xa8] sm:$0xff]
        %v495 = vld [vmem:[#allocation7 + $0xb0] sm:$0xff]
        %v496 = vld [vmem:[#allocation7 + $0xb8] sm:$0xff]
        %v497 = vld [vmem:[#allocation7 + $0xc0] sm:$0xff]
        %v498 = vld [vmem:[#allocation7 + $0xc8] sm:$0xff]
        %v499 = vld [vmem:[#allocation7 + $0xd0] sm:$0xff]
        %v500 = vld [vmem:[#allocation7 + $0xd8] sm:$0xff]
        %v501 = vld [vmem:[#allocation7 + $0xe0] sm:$0xff]
        %v502 = vld [vmem:[#allocation7 + $0xe8] sm:$0xff]
        %v503 = vld [vmem:[#allocation7 + $0xf0] sm:$0xff]
        %v504 = vld [vmem:[#allocation7 + $0xf8] sm:$0xff]
        %v537 = vunpack.c.l.b16 %v473
        %v538 = vunpack.c.h.b16 %v473
        %v539 = vunpack.c.l.b16 %v474
        %v540 = vunpack.c.h.b16 %v474
        %v541 = vunpack.c.l.b16 %v475
        %v542 = vunpack.c.h.b16 %v475
        %v543 = vunpack.c.l.b16 %v476
        %v544 = vunpack.c.h.b16 %v476
        %v545 = vunpack.c.l.b16 %v477
        %v546 = vunpack.c.h.b16 %v477
        %v547 = vunpack.c.l.b16 %v478
        %v548 = vunpack.c.h.b16 %v478
        %v549 = vunpack.c.l.b16 %v479
        %v550 = vunpack.c.h.b16 %v479
        %v551 = vunpack.c.l.b16 %v480
        %v552 = vunpack.c.h.b16 %v480
        %v553 = vunpack.c.l.b16 %v481
        %v554 = vunpack.c.h.b16 %v481
        %v555 = vunpack.c.l.b16 %v482
        %v556 = vunpack.c.h.b16 %v482
        %v557 = vunpack.c.l.b16 %v483
        %v558 = vunpack.c.h.b16 %v483
        %v559 = vunpack.c.l.b16 %v484
        %v560 = vunpack.c.h.b16 %v484
        %v561 = vunpack.c.l.b16 %v485
        %v562 = vunpack.c.h.b16 %v485
        %v563 = vunpack.c.l.b16 %v486
        %v564 = vunpack.c.h.b16 %v486
        %v565 = vunpack.c.l.b16 %v487
        %v566 = vunpack.c.h.b16 %v487
        %v567 = vunpack.c.l.b16 %v488
        %v568 = vunpack.c.h.b16 %v488
        %v569 = vunpack.c.l.b16 %v489
        %v570 = vunpack.c.h.b16 %v489
        %v571 = vunpack.c.l.b16 %v490
        %v572 = vunpack.c.h.b16 %v490
        %v573 = vunpack.c.l.b16 %v491
        %v574 = vunpack.c.h.b16 %v491
        %v575 = vunpack.c.l.b16 %v492
        %v576 = vunpack.c.h.b16 %v492
        %v577 = vunpack.c.l.b16 %v493
        %v578 = vunpack.c.h.b16 %v493
        %v579 = vunpack.c.l.b16 %v494
        %v580 = vunpack.c.h.b16 %v494
        %v581 = vunpack.c.l.b16 %v495
        %v582 = vunpack.c.h.b16 %v495
        %v583 = vunpack.c.l.b16 %v496
        %v584 = vunpack.c.h.b16 %v496
        %v585 = vunpack.c.l.b16 %v497
        %v586 = vunpack.c.h.b16 %v497
        %v587 = vunpack.c.l.b16 %v498
        %v588 = vunpack.c.h.b16 %v498
        %v589 = vunpack.c.l.b16 %v499
        %v590 = vunpack.c.h.b16 %v499
        %v591 = vunpack.c.l.b16 %v500
        %v592 = vunpack.c.h.b16 %v500
        %v593 = vunpack.c.l.b16 %v501
        %v594 = vunpack.c.h.b16 %v501
        %v595 = vunpack.c.l.b16 %v502
        %v596 = vunpack.c.h.b16 %v502
        %v597 = vunpack.c.l.b16 %v503
        %v598 = vunpack.c.h.b16 %v503
        %v599 = vunpack.c.l.b16 %v504
        %v600 = vunpack.c.h.b16 %v504
        %v601 = vpack.c.b16 %v541, %v537
        %v602 = vpack.c.b16 %v542, %v538
        %v603 = vpack.c.b16 %v543, %v539
        %v604 = vpack.c.b16 %v544, %v540
        %v605 = vpack.c.b16 %v549, %v545
        %v606 = vpack.c.b16 %v550, %v546
        %v607 = vpack.c.b16 %v551, %v547
        %v608 = vpack.c.b16 %v552, %v548
        %v609 = vpack.c.b16 %v557, %v553
        %v610 = vpack.c.b16 %v558, %v554
        %v611 = vpack.c.b16 %v559, %v555
        %v612 = vpack.c.b16 %v560, %v556
        %v613 = vpack.c.b16 %v565, %v561
        %v614 = vpack.c.b16 %v566, %v562
        %v615 = vpack.c.b16 %v567, %v563
        %v616 = vpack.c.b16 %v568, %v564
        %v617 = vpack.c.b16 %v573, %v569
        %v618 = vpack.c.b16 %v574, %v570
        %v619 = vpack.c.b16 %v575, %v571
        %v620 = vpack.c.b16 %v576, %v572
        %v621 = vpack.c.b16 %v581, %v577
        %v622 = vpack.c.b16 %v582, %v578
        %v623 = vpack.c.b16 %v583, %v579
        %v624 = vpack.c.b16 %v584, %v580
        %v625 = vpack.c.b16 %v589, %v585
        %v626 = vpack.c.b16 %v590, %v586
        %v627 = vpack.c.b16 %v591, %v587
        %v628 = vpack.c.b16 %v592, %v588
        %v629 = vpack.c.b16 %v597, %v593
        %v630 = vpack.c.b16 %v598, %v594
        %v631 = vpack.c.b16 %v599, %v595
        %v632 = vpack.c.b16 %v600, %v596
        %665 = vmatpush.bf16.msra.mxu0 %v629
        %666 = vmatpush.bf16.msra.mxu0 %v625
        %667 = vmatpush.bf16.msra.mxu0 %v621
        %668 = vmatpush.bf16.msra.mxu0 %v617
        %669 = vmatpush.bf16.msra.mxu0 %v613
        %670 = vmatpush.bf16.msra.mxu0 %v609
        %671 = vmatpush.bf16.msra.mxu0 %v605
        %672 = vmatpush.bf16.msra.mxu0 %v601
        %673 = vmatmul.bf16.gmra.mxu0 %v472
        %v674 = vpop.f32.mrf.mxu0
        %v675 = vadd.f32 0.0, %v674
        %v676 = vpop.f32.mrf.mxu0
        %677 = vdwg.mxu0
        %678 = vmatpush.bf16.msra.mxu0 %v630
        %679 = vmatpush.bf16.msra.mxu0 %v626
        %680 = vmatpush.bf16.msra.mxu0 %v622
        %681 = vmatpush.bf16.msra.mxu0 %v618
        %682 = vmatpush.bf16.msra.mxu0 %v614
        %683 = vmatpush.bf16.msra.mxu0 %v610
        %684 = vmatpush.bf16.msra.mxu0 %v606
        %685 = vmatpush.bf16.msra.mxu0 %v602
        %686 = vmatmul.bf16.gmra.mxu0 %v472
        %v687 = vpop.f32.mrf.mxu0
        %v688 = vadd.f32 0.0, %v687
        %v689 = vpop.f32.mrf.mxu0
        %690 = vdwg.mxu0
        %691 = vmatpush.bf16.msra.mxu0 %v631
        %692 = vmatpush.bf16.msra.mxu0 %v627
        %693 = vmatpush.bf16.msra.mxu0 %v623
        %694 = vmatpush.bf16.msra.mxu0 %v619
        %695 = vmatpush.bf16.msra.mxu0 %v615
        %696 = vmatpush.bf16.msra.mxu0 %v611
        %697 = vmatpush.bf16.msra.mxu0 %v607
        %698 = vmatpush.bf16.msra.mxu0 %v603
        %699 = vmatmul.bf16.gmra.mxu0 %v472
        %v700 = vpop.f32.mrf.mxu0
        %v701 = vadd.f32 0.0, %v700
        %v702 = vpop.f32.mrf.mxu0
        %703 = vdwg.mxu0
        %704 = vmatpush.bf16.msra.mxu0 %v632
        %705 = vmatpush.bf16.msra.mxu0 %v628
        %706 = vmatpush.bf16.msra.mxu0 %v624
        %707 = vmatpush.bf16.msra.mxu0 %v620
        %708 = vmatpush.bf16.msra.mxu0 %v616
        %709 = vmatpush.bf16.msra.mxu0 %v612
        %710 = vmatpush.bf16.msra.mxu0 %v608
        %711 = vmatpush.bf16.msra.mxu0 %v604
        %712 = vmatmul.bf16.gmra.mxu0 %v472
        %v713 = vpop.f32.mrf.mxu0
        %v714 = vadd.f32 0.0, %v713
        %v715 = vpop.f32.mrf.mxu0
        %716 = vdwg.mxu0
        %717 = vst [vmem:[#allocation3 + $0x10] sm:$0xff] %v675
        %718 = vst [vmem:[#allocation3 + $0x18] sm:$0xff] %v688
        %v719 = vld [vmem:[#allocation10] sm:$0x3]
        %v720 = vld [vmem:[#allocation3] sm:$0xe0]
        %v721 = vld [vmem:[#allocation3 + $0x8] sm:$0xe0]
        %v722 = vld [vmem:[#allocation3 + $0x10] sm:$0x1f]
        %v723 = vld [vmem:[#allocation3 + $0x18] sm:$0x1f]
        %v724 = vld [vmem:[%s2] ss:$4 sm:$0x3]
        %v726 = vperm.slane %v724, 0
        %v727 = vperm.slane %v724, 1
        %v730 = vmul.f32 %v720, %v726
        %v731 = vmul.f32 %v721, %v727
        %v732 = vmul.f32 %v722, %v726
        %v733 = vmul.f32 %v723, %v727
        %v735 = vperm.slane %v719, 0
        %v736 = vperm.slane %v719, 1
        %v739 = vadd.f32 %v735, %v730
        %v740 = vadd.f32 %v736, %v731
        %v741 = vadd.f32 %v735, %v732
        %v742 = vadd.f32 %v736, %v733
        %v743 = vld [vmem:[#allocation3] sm:$0xc0]
        %v744 = vld [vmem:[#allocation3 + $0x8] sm:$0xc0]
        %v745 = vld [vmem:[#allocation3 + $0x10] sm:$0x3f]
        %v746 = vld [vmem:[#allocation3 + $0x18] sm:$0x3f]
        %s747 = scalar_lea.vmem %s2, 1
        %v748 = vld [vmem:[%s747] ss:$4 sm:$0x3]
        %v750 = vperm.slane %v748, 0
        %v751 = vperm.slane %v748, 1
        %v754 = vmul.f32 %v743, %v750
        %v755 = vmul.f32 %v744, %v751
        %v756 = vmul.f32 %v745, %v750
        %v757 = vmul.f32 %v746, %v751
        %vm762 = vcmask 1046528
        %v763 = vrot.slane %v754, 1
        %v764 = vrot.slane %v756, 1
        %v765 = vsel %vm762, %v763, %v764
        %v766 = vrot.slane %v755, 1
        %v767 = vrot.slane %v757, 1
        %v768 = vsel %vm762, %v766, %v767
        %v773 = vadd.f32 %v739, %v765
        %v774 = vadd.f32 %v740, %v768
        %v775 = vadd.f32 %v741, %v764
        %v776 = vadd.f32 %v742, %v767
        %v777 = vld [vmem:[#allocation3] sm:$0x80]
        %v778 = vld [vmem:[#allocation3 + $0x8] sm:$0x80]
        %v779 = vld [vmem:[#allocation3 + $0x10] sm:$0x7f]
        %v780 = vld [vmem:[#allocation3 + $0x18] sm:$0x7f]
        %s781 = scalar_lea.vmem %s2, 2
        %v782 = vld [vmem:[%s781] ss:$4 sm:$0x3]
        %v784 = vperm.slane %v782, 0
        %v785 = vperm.slane %v782, 1
        %v788 = vmul.f32 %v777, %v784
        %v789 = vmul.f32 %v778, %v785
        %v790 = vmul.f32 %v779, %v784
        %v791 = vmul.f32 %v780, %v785
        %vm796 = vcmask 1045504
        %v797 = vrot.slane %v788, 2
        %v798 = vrot.slane %v790, 2
        %v799 = vsel %vm796, %v797, %v798
        %v800 = vrot.slane %v789, 2
        %v801 = vrot.slane %v791, 2
        %v802 = vsel %vm796, %v800, %v801
        %v807 = vadd.f32 %v773, %v799
        %v808 = vadd.f32 %v774, %v802
        %v809 = vadd.f32 %v775, %v798
        %v810 = vadd.f32 %v776, %v801
        %v811 = vld [vmem:[#allocation3 + $0x10] sm:$0xff]
        %v812 = vld [vmem:[#allocation3 + $0x18] sm:$0xff]
        %s813 = scalar_lea.vmem %s2, 3
        %v814 = vld [vmem:[%s813] ss:$4 sm:$0x3]
        %v816 = vperm.slane %v814, 0
        %v817 = vperm.slane %v814, 1
        %v820 = vmul.f32 %v811, %v816
        %v821 = vmul.f32 %v812, %v817
        %v824 = vrot.slane %v820, 3
        %v825 = vrot.slane %v821, 3
        %v828 = vadd.f32 %v807, %v824
        %v829 = vadd.f32 %v808, %v825
        %v830 = vadd.f32 %v809, %v824
        %v831 = vadd.f32 %v810, %v825
        %v832 = vsub.f32 0.0, %v828
        %v833 = vsub.f32 0.0, %v829
        %v834 = vsub.f32 0.0, %v830
        %v835 = vsub.f32 0.0, %v831
        %v836 = vmul.f32 %v832, 1.442695
        %v837 = vpow.pop %v836
        %v838 = vmul.f32 %v833, 1.442695
        %v839 = vpow.pop %v838
        %v840 = vmul.f32 %v834, 1.442695
        %v841 = vpow.pop %v840
        %v842 = vmul.f32 %v835, 1.442695
        %v843 = vpow.pop %v842
        %v844 = vadd.f32 %v837, 1.0
        %v845 = vadd.f32 %v839, 1.0
        %v846 = vadd.f32 %v841, 1.0
        %v847 = vadd.f32 %v843, 1.0
        %v848 = vrcp.pop %v844
        %v849 = vrcp.pop %v845
        %v850 = vrcp.pop %v846
        %v851 = vrcp.pop %v847
        %v852 = vmul.f32 %v828, %v848
        %v853 = vmul.f32 %v829, %v849
        %v854 = vmul.f32 %v830, %v850
        %v855 = vmul.f32 %v831, %v851
        %856 = vst [vmem:[#allocation3] sm:$0xff] %v811
        %857 = vst [vmem:[#allocation3 + $0x8] sm:$0xff] %v812
        %v858 = vpack.c.bf16 %v854, %v852
        %v859 = vpack.c.bf16 %v855, %v853
        %v860 = vld [vmem:[%s4] sm:$0xf]
        %v861 = vld [vmem:[%s4 + $0x4] sm:$0xf]
        %v862 = vld [vmem:[%s4 + $0x8] sm:$0xf]
        %v863 = vld [vmem:[%s4 + $0xc] sm:$0xf]
        %v864 = vld [vmem:[%s4 + $0x10] sm:$0xf]
        %v865 = vld [vmem:[%s4 + $0x14] sm:$0xf]
        %v866 = vld [vmem:[%s4 + $0x18] sm:$0xf]
        %v867 = vld [vmem:[%s4 + $0x1c] sm:$0xf]
        %v868 = vld [vmem:[%s4 + $0x20] sm:$0xf]
        %v869 = vld [vmem:[%s4 + $0x24] sm:$0xf]
        %v870 = vld [vmem:[%s4 + $0x28] sm:$0xf]
        %v871 = vld [vmem:[%s4 + $0x2c] sm:$0xf]
        %v872 = vld [vmem:[%s4 + $0x30] sm:$0xf]
        %v873 = vld [vmem:[%s4 + $0x34] sm:$0xf]
        %v874 = vld [vmem:[%s4 + $0x38] sm:$0xf]
        %v875 = vld [vmem:[%s4 + $0x3c] sm:$0xf]
        %v876 = vld [vmem:[%s4 + $0x40] sm:$0xf]
        %v877 = vld [vmem:[%s4 + $0x44] sm:$0xf]
        %v878 = vld [vmem:[%s4 + $0x48] sm:$0xf]
        %v879 = vld [vmem:[%s4 + $0x4c] sm:$0xf]
        %v880 = vld [vmem:[%s4 + $0x50] sm:$0xf]
        %v881 = vld [vmem:[%s4 + $0x54] sm:$0xf]
        %v882 = vld [vmem:[%s4 + $0x58] sm:$0xf]
        %v883 = vld [vmem:[%s4 + $0x5c] sm:$0xf]
        %v884 = vld [vmem:[%s4 + $0x60] sm:$0xf]
        %v885 = vld [vmem:[%s4 + $0x64] sm:$0xf]
        %v886 = vld [vmem:[%s4 + $0x68] sm:$0xf]
        %v887 = vld [vmem:[%s4 + $0x6c] sm:$0xf]
        %v888 = vld [vmem:[%s4 + $0x70] sm:$0xf]
        %v889 = vld [vmem:[%s4 + $0x74] sm:$0xf]
        %v890 = vld [vmem:[%s4 + $0x78] sm:$0xf]
        %v891 = vld [vmem:[%s4 + $0x7c] sm:$0xf]
        %v893 = vshrl.u32 %v858, 16
        %v895 = vrot.slane %v893, 2
        %v896 = vshll.u32 %v858, 16
        %v898 = vrot.slane %v896, 3
        %v899 = vor.u32 %v895, %v898
        %v901 = vshrl.u32 %v859, 16
        %v903 = vrot.slane %v901, 2
        %v904 = vshll.u32 %v859, 16
        %v906 = vrot.slane %v904, 3
        %v907 = vor.u32 %v903, %v906
        %v942 = vunpack.c.l.b16 %v860
        %v943 = vunpack.c.l.b16 %v861
        %v944 = vunpack.c.l.b16 %v862
        %v945 = vunpack.c.l.b16 %v863
        %v946 = vunpack.c.l.b16 %v864
        %v947 = vunpack.c.l.b16 %v865
        %v948 = vunpack.c.l.b16 %v866
        %v949 = vunpack.c.l.b16 %v867
        %v950 = vunpack.c.l.b16 %v868
        %v951 = vunpack.c.l.b16 %v869
        %v952 = vunpack.c.l.b16 %v870
        %v953 = vunpack.c.l.b16 %v871
        %v954 = vunpack.c.l.b16 %v872
        %v955 = vunpack.c.l.b16 %v873
        %v956 = vunpack.c.l.b16 %v874
        %v957 = vunpack.c.l.b16 %v875
        %v958 = vunpack.c.l.b16 %v876
        %v959 = vunpack.c.l.b16 %v877
        %v960 = vunpack.c.l.b16 %v878
        %v961 = vunpack.c.l.b16 %v879
        %v962 = vunpack.c.l.b16 %v880
        %v963 = vunpack.c.l.b16 %v881
        %v964 = vunpack.c.l.b16 %v882
        %v965 = vunpack.c.l.b16 %v883
        %v966 = vunpack.c.l.b16 %v884
        %v967 = vunpack.c.l.b16 %v885
        %v968 = vunpack.c.l.b16 %v886
        %v969 = vunpack.c.l.b16 %v887
        %v970 = vunpack.c.l.b16 %v888
        %v971 = vunpack.c.l.b16 %v889
        %v972 = vunpack.c.l.b16 %v890
        %v973 = vunpack.c.l.b16 %v891
        %v974 = vpack.c.b16 %v943, %v942
        %v975 = vpack.c.b16 %v945, %v944
        %v976 = vpack.c.b16 %v947, %v946
        %v977 = vpack.c.b16 %v949, %v948
        %v978 = vpack.c.b16 %v951, %v950
        %v979 = vpack.c.b16 %v953, %v952
        %v980 = vpack.c.b16 %v955, %v954
        %v981 = vpack.c.b16 %v957, %v956
        %v982 = vpack.c.b16 %v959, %v958
        %v983 = vpack.c.b16 %v961, %v960
        %v984 = vpack.c.b16 %v963, %v962
        %v985 = vpack.c.b16 %v965, %v964
        %v986 = vpack.c.b16 %v967, %v966
        %v987 = vpack.c.b16 %v969, %v968
        %v988 = vpack.c.b16 %v971, %v970
        %v989 = vpack.c.b16 %v973, %v972
        %1006 = vmatpush.bf16.msra.mxu0 %v981
        %1007 = vmatpush.bf16.msra.mxu0 %v980
        %1008 = vmatpush.bf16.msra.mxu0 %v979
        %1009 = vmatpush.bf16.msra.mxu0 %v978
        %1010 = vmatpush.bf16.msra.mxu0 %v977
        %1011 = vmatpush.bf16.msra.mxu0 %v976
        %1012 = vmatpush.bf16.msra.mxu0 %v975
        %1013 = vmatpush.bf16.msra.mxu0 %v974
        %1014 = vmatmul.bf16.gmra.mxu0 %v899
        %v1015 = vpop.f32.mrf.mxu0
        %v1016 = vadd.f32 0.0, %v1015
        %v1017 = vpop.f32.mrf.mxu0
        %1018 = vdwg.mxu0
        %1019 = vmatpush.bf16.msra.mxu0 %v989
        %1020 = vmatpush.bf16.msra.mxu0 %v988
        %1021 = vmatpush.bf16.msra.mxu0 %v987
        %1022 = vmatpush.bf16.msra.mxu0 %v986
        %1023 = vmatpush.bf16.msra.mxu0 %v985
        %1024 = vmatpush.bf16.msra.mxu0 %v984
        %1025 = vmatpush.bf16.msra.mxu0 %v983
        %1026 = vmatpush.bf16.msra.mxu0 %v982
        %1027 = vmatmul.bf16.gmra.mxu0 %v907
        %v1028 = vpop.f32.mrf.mxu0
        %v1029 = vadd.f32 %v1016, %v1028
        %v1030 = vpop.f32.mrf.mxu0
        %1031 = vdwg.mxu0
        %v1032 = vpack.c.bf16 %v1029, %v1029
        %v1033 = vld [vmem:[%s5] sm:$0xff]
        %v1034 = vld [vmem:[#allocation12] sm:$0x3]
        %v1036 = vperm.slane %v1034, 0
        %v1037 = vperm.slane %v1034, 1
        %v1041 = vunpack.c.l.b16 %v1033
        %v1042 = vunpack.c.h.b16 %v1033
        %v1043 = vpack.c.b16 %v1041, %v1041
        %v1044 = vpack.c.b16 %v1042, %v1042
        %vm1045 = vcmask 64512
        %v1047 = vsel %vm1045, %v1032, 0
        %vm1049 = vcmask 1043456
        %v1051 = vsel %vm1049, %v1043, 0
        %v1054 = vsel %vm1049, %v1044, 0
        %1056 = vmatpush.bf16.msra.mxu0 0
        %1057 = vmatpush.bf16.msra.mxu0 0
        %1058 = vmatpush.bf16.msra.mxu0 0
        %1059 = vmatpush.bf16.msra.mxu0 0
        %1060 = vmatpush.bf16.msra.mxu0 0
        %1061 = vmatpush.bf16.msra.mxu0 0
        %1062 = vmatpush.bf16.msra.mxu0 0
        %1063 = vmatpush.bf16.msra.mxu0 %v1051
        %1064 = vmatmul.bf16.gmra.mxu0 %v1047
        %v1065 = vpop.f32.mrf.mxu0
        %v1066 = vadd.f32 %v1036, %v1065
        %v1067 = vpop.f32.mrf.mxu0
        %1068 = vdwg.mxu0
        %1069 = vmatpush.bf16.msra.mxu0 0
        %1070 = vmatpush.bf16.msra.mxu0 0
        %1071 = vmatpush.bf16.msra.mxu0 0
        %1072 = vmatpush.bf16.msra.mxu0 0
        %1073 = vmatpush.bf16.msra.mxu0 0
        %1074 = vmatpush.bf16.msra.mxu0 0
        %1075 = vmatpush.bf16.msra.mxu0 0
        %1076 = vmatpush.bf16.msra.mxu0 %v1054
        %1077 = vmatmul.bf16.gmra.mxu0 %v1047
        %v1078 = vpop.f32.mrf.mxu0
        %v1079 = vadd.f32 %v1037, %v1078
        %v1080 = vpop.f32.mrf.mxu0
        %1081 = vdwg.mxu0
        %vm1082 = vcmp.gt.f32.partialorder %v1066, 20.0
        %vm1083 = vcmp.gt.f32.partialorder %v1079, 20.0
        %v1084 = vmul.f32 %v1066, 1.442695
        %v1085 = vpow.pop %v1084
        %v1086 = vmul.f32 %v1079, 1.442695
        %v1087 = vpow.pop %v1086
        %v1088 = vadd.f32 %v1085, 1.0
        %v1089 = vlog2.pop %v1088
        %v1090 = vmul.f32 %v1089, 0.6931472
        %v1091 = vmul.f32 -0.5, %v1085
        %v1092 = vadd.f32 %v1091, 1.0
        %v1093 = vmul.f32 %v1092, %v1085
        %v1094 = vand.u32 2147483647, %v1085
        %vm1095 = vcmp.lt.f32.partialorder %v1094, 0.0004427343
        %v1096 = vsel %vm1095, %v1093, %v1090
        %v1097 = vadd.f32 %v1087, 1.0
        %v1098 = vlog2.pop %v1097
        %v1099 = vmul.f32 %v1098, 0.6931472
        %v1100 = vmul.f32 -0.5, %v1087
        %v1101 = vadd.f32 %v1100, 1.0
        %v1102 = vmul.f32 %v1101, %v1087
        %v1103 = vand.u32 2147483647, %v1087
        %vm1104 = vcmp.lt.f32.partialorder %v1103, 0.0004427343
        %v1105 = vsel %vm1104, %v1102, %v1099
        %v1106 = vsel %vm1082, %v1066, %v1096
        %v1107 = vsel %vm1083, %v1079, %v1105
        %v1108 = vld [vmem:[#allocation13] sm:$0xff]
        %v1109 = vld [vmem:[#allocation13 + $0x8] sm:$0xff]
        %v1110 = vld [vmem:[#allocation13 + $0x10] sm:$0xff]
        %v1111 = vld [vmem:[#allocation13 + $0x18] sm:$0xff]
        %v1112 = vmul.f32 %v1108, 1.442695
        %v1113 = vpow.pop %v1112
        %v1114 = vmul.f32 %v1109, 1.442695
        %v1115 = vpow.pop %v1114
        %v1116 = vmul.f32 %v1110, 1.442695
        %v1117 = vpow.pop %v1116
        %v1118 = vmul.f32 %v1111, 1.442695
        %v1119 = vpow.pop %v1118
        %v1120 = vsub.f32 0.0, %v1113
        %v1121 = vsub.f32 0.0, %v1115
        %v1122 = vsub.f32 0.0, %v1117
        %v1123 = vsub.f32 0.0, %v1119
        %vm1128 = vcmask 1042432
        %v1129 = vrot.slane %v852, 5
        %v1130 = vrot.slane %v854, 5
        %v1131 = vsel %vm1128, %v1129, %v1130
        %v1132 = vrot.slane %v853, 5
        %v1133 = vrot.slane %v855, 5
        %v1134 = vsel %vm1128, %v1132, %v1133
        %v1137 = vmul.f32 %v1106, %v1131
        %v1138 = vmul.f32 %v1107, %v1134
        %v1140 = vrot.slane %v1106, 1
        %v1141 = vrot.slane %v1106, 2
        %v1142 = vrot.slane %v1106, 3
        %v1143 = vrot.slane %v1106, 4
        %v1144 = vrot.slane %v1106, 5
        %v1145 = vrot.slane %v1106, 6
        %v1146 = vrot.slane %v1106, 7
        %v1147 = vperm.slane %v1106, 0
        %v1148 = vperm.slane %v1140, 0
        %v1149 = vperm.slane %v1141, 0
        %v1150 = vperm.slane %v1142, 0
        %v1151 = vperm.slane %v1143, 0
        %v1152 = vperm.slane %v1144, 0
        %v1153 = vperm.slane %v1145, 0
        %v1154 = vperm.slane %v1146, 0
        %v1163 = vmul.f32 %v1147, %v1120
        %v1164 = vmul.f32 %v1147, %v1122
        %v1165 = vmul.f32 %v1148, %v1120
        %v1166 = vmul.f32 %v1148, %v1122
        %v1167 = vmul.f32 %v1149, %v1120
        %v1168 = vmul.f32 %v1149, %v1122
        %v1169 = vmul.f32 %v1150, %v1120
        %v1170 = vmul.f32 %v1150, %v1122
        %v1171 = vmul.f32 %v1151, %v1120
        %v1172 = vmul.f32 %v1151, %v1122
        %v1173 = vmul.f32 %v1152, %v1120
        %v1174 = vmul.f32 %v1152, %v1122
        %v1175 = vmul.f32 %v1153, %v1120
        %v1176 = vmul.f32 %v1153, %v1122
        %v1177 = vmul.f32 %v1154, %v1120
        %v1178 = vmul.f32 %v1154, %v1122
        %v1179 = vmul.f32 %v1163, 1.442695
        %v1180 = vpow.pop %v1179
        %v1181 = vmul.f32 %v1164, 1.442695
        %v1182 = vpow.pop %v1181
        %v1183 = vmul.f32 %v1165, 1.442695
        %v1184 = vpow.pop %v1183
        %v1185 = vmul.f32 %v1166, 1.442695
        %v1186 = vpow.pop %v1185
        %v1187 = vmul.f32 %v1167, 1.442695
        %v1188 = vpow.pop %v1187
        %v1189 = vmul.f32 %v1168, 1.442695
        %v1190 = vpow.pop %v1189
        %v1191 = vmul.f32 %v1169, 1.442695
        %v1192 = vpow.pop %v1191
        %v1193 = vmul.f32 %v1170, 1.442695
        %v1194 = vpow.pop %v1193
        %v1195 = vmul.f32 %v1171, 1.442695
        %v1196 = vpow.pop %v1195
        %v1197 = vmul.f32 %v1172, 1.442695
        %v1198 = vpow.pop %v1197
        %v1199 = vmul.f32 %v1173, 1.442695
        %v1200 = vpow.pop %v1199
        %v1201 = vmul.f32 %v1174, 1.442695
        %v1202 = vpow.pop %v1201
        %v1203 = vmul.f32 %v1175, 1.442695
        %v1204 = vpow.pop %v1203
        %v1205 = vmul.f32 %v1176, 1.442695
        %v1206 = vpow.pop %v1205
        %v1207 = vmul.f32 %v1177, 1.442695
        %v1208 = vpow.pop %v1207
        %v1209 = vmul.f32 %v1178, 1.442695
        %v1210 = vpow.pop %v1209
        %1211 = vst [vmem:[#allocation4] sm:$0xff] %v1180
        %1212 = vst [vmem:[#allocation4 + $0x8] sm:$0xff] %v1182
        %1213 = vst [vmem:[#allocation4 + $0x10] sm:$0xff] %v1184
        %1214 = vst [vmem:[#allocation4 + $0x18] sm:$0xff] %v1186
        %1215 = vst [vmem:[#allocation4 + $0x20] sm:$0xff] %v1188
        %1216 = vst [vmem:[#allocation4 + $0x28] sm:$0xff] %v1190
        %1217 = vst [vmem:[#allocation4 + $0x30] sm:$0xff] %v1192
        %1218 = vst [vmem:[#allocation4 + $0x38] sm:$0xff] %v1194
        %1219 = vst [vmem:[#allocation4 + $0x40] sm:$0xff] %v1196
        %1220 = vst [vmem:[#allocation4 + $0x48] sm:$0xff] %v1198
        %1221 = vst [vmem:[#allocation4 + $0x50] sm:$0xff] %v1200
        %1222 = vst [vmem:[#allocation4 + $0x58] sm:$0xff] %v1202
        %1223 = vst [vmem:[#allocation4 + $0x60] sm:$0xff] %v1204
        %1224 = vst [vmem:[#allocation4 + $0x68] sm:$0xff] %v1206
        %1225 = vst [vmem:[#allocation4 + $0x70] sm:$0xff] %v1208
        %1226 = vst [vmem:[#allocation4 + $0x78] sm:$0xff] %v1210
        %v1227 = vperm.slane %v1029, 0
        %v1228 = vlaneseq
        %v1229 = vshrl.u32 %v1228, 7
        %v1230 = vadd.s32 %v1229, 8
        %1231 = vset.pattern.permute.xlu0 %v1230
        %1232 = vperm.xlu0 %1231, %v1227
        %v1233 = vpop.permute.xlu0 %1232
        %v1234 = vlaneseq
        %v1235 = vshrl.u32 %v1234, 7
        %v1236 = vadd.s32 %v1235, 16
        %1237 = vset.pattern.permute.xlu0 %v1236
        %1238 = vperm.xlu0 %1237, %v1227
        %v1239 = vpop.permute.xlu0 %1238
        %v1240 = vperm.slane %v1029, 1
        %v1241 = vlaneseq
        %v1242 = vshrl.u32 %v1241, 7
        %v1243 = vadd.s32 %v1242, 8
        %1244 = vset.pattern.permute.xlu0 %v1243
        %1245 = vperm.xlu0 %1244, %v1240
        %v1246 = vpop.permute.xlu0 %1245
        %v1247 = vlaneseq
        %v1248 = vshrl.u32 %v1247, 7
        %v1249 = vadd.s32 %v1248, 16
        %1250 = vset.pattern.permute.xlu0 %v1249
        %1251 = vperm.xlu0 %1250, %v1240
        %v1252 = vpop.permute.xlu0 %1251
        %v1253 = vperm.slane %v1029, 2
        %v1254 = vlaneseq
        %v1255 = vshrl.u32 %v1254, 7
        %v1256 = vadd.s32 %v1255, 8
        %1257 = vset.pattern.permute.xlu0 %v1256
        %1258 = vperm.xlu0 %1257, %v1253
        %v1259 = vpop.permute.xlu0 %1258
        %v1260 = vlaneseq
        %v1261 = vshrl.u32 %v1260, 7
        %v1262 = vadd.s32 %v1261, 16
        %1263 = vset.pattern.permute.xlu0 %v1262
        %1264 = vperm.xlu0 %1263, %v1253
        %v1265 = vpop.permute.xlu0 %1264
        %v1266 = vperm.slane %v1029, 3
        %v1267 = vlaneseq
        %v1268 = vshrl.u32 %v1267, 7
        %v1269 = vadd.s32 %v1268, 8
        %1270 = vset.pattern.permute.xlu0 %v1269
        %1271 = vperm.xlu0 %1270, %v1266
        %v1272 = vpop.permute.xlu0 %1271
        %v1273 = vlaneseq
        %v1274 = vshrl.u32 %v1273, 7
        %v1275 = vadd.s32 %v1274, 16
        %1276 = vset.pattern.permute.xlu0 %v1275
        %1277 = vperm.xlu0 %1276, %v1266
        %v1278 = vpop.permute.xlu0 %1277
        %v1279 = vperm.slane %v1029, 4
        %v1280 = vlaneseq
        %v1281 = vshrl.u32 %v1280, 7
        %v1282 = vadd.s32 %v1281, 8
        %1283 = vset.pattern.permute.xlu0 %v1282
        %1284 = vperm.xlu0 %1283, %v1279
        %v1285 = vpop.permute.xlu0 %1284
        %v1286 = vlaneseq
        %v1287 = vshrl.u32 %v1286, 7
        %v1288 = vadd.s32 %v1287, 16
        %1289 = vset.pattern.permute.xlu0 %v1288
        %1290 = vperm.xlu0 %1289, %v1279
        %v1291 = vpop.permute.xlu0 %1290
        %v1292 = vperm.slane %v1029, 5
        %v1293 = vlaneseq
        %v1294 = vshrl.u32 %v1293, 7
        %v1295 = vadd.s32 %v1294, 8
        %1296 = vset.pattern.permute.xlu0 %v1295
        %1297 = vperm.xlu0 %1296, %v1292
        %v1298 = vpop.permute.xlu0 %1297
        %v1299 = vlaneseq
        %v1300 = vshrl.u32 %v1299, 7
        %v1301 = vadd.s32 %v1300, 16
        %1302 = vset.pattern.permute.xlu0 %v1301
        %1303 = vperm.xlu0 %1302, %v1292
        %v1304 = vpop.permute.xlu0 %1303
        %v1305 = vperm.slane %v1029, 6
        %v1306 = vlaneseq
        %v1307 = vshrl.u32 %v1306, 7
        %v1308 = vadd.s32 %v1307, 8
        %1309 = vset.pattern.permute.xlu0 %v1308
        %1310 = vperm.xlu0 %1309, %v1305
        %v1311 = vpop.permute.xlu0 %1310
        %v1312 = vlaneseq
        %v1313 = vshrl.u32 %v1312, 7
        %v1314 = vadd.s32 %v1313, 16
        %1315 = vset.pattern.permute.xlu0 %v1314
        %1316 = vperm.xlu0 %1315, %v1305
        %v1317 = vpop.permute.xlu0 %1316
        %v1318 = vperm.slane %v1029, 7
        %v1319 = vlaneseq
        %v1320 = vshrl.u32 %v1319, 7
        %v1321 = vadd.s32 %v1320, 8
        %1322 = vset.pattern.permute.xlu0 %v1321
        %1323 = vperm.xlu0 %1322, %v1318
        %v1324 = vpop.permute.xlu0 %1323
        %v1325 = vlaneseq
        %v1326 = vshrl.u32 %v1325, 7
        %v1327 = vadd.s32 %v1326, 16
        %1328 = vset.pattern.permute.xlu0 %v1327
        %1329 = vperm.xlu0 %1328, %v1318
        %v1330 = vpop.permute.xlu0 %1329
        %v1332 = vrot.slane %v1137, 1
        %v1333 = vrot.slane %v1137, 2
        %v1334 = vrot.slane %v1137, 3
        %v1335 = vrot.slane %v1137, 4
        %v1336 = vrot.slane %v1137, 5
        %v1337 = vrot.slane %v1137, 6
        %v1338 = vrot.slane %v1137, 7
        %v1339 = vperm.slane %v1137, 0
        %v1340 = vperm.slane %v1332, 0
        %v1341 = vperm.slane %v1333, 0
        %v1342 = vperm.slane %v1334, 0
        %v1343 = vperm.slane %v1335, 0
        %v1344 = vperm.slane %v1336, 0
        %v1345 = vperm.slane %v1337, 0
        %v1346 = vperm.slane %v1338, 0
        %v1355 = vmul.f32 %v1233, %v1339
        %v1356 = vmul.f32 %v1239, %v1339
        %v1357 = vmul.f32 %v1246, %v1340
        %v1358 = vmul.f32 %v1252, %v1340
        %v1359 = vmul.f32 %v1259, %v1341
        %v1360 = vmul.f32 %v1265, %v1341
        %v1361 = vmul.f32 %v1272, %v1342
        %v1362 = vmul.f32 %v1278, %v1342
        %v1363 = vmul.f32 %v1285, %v1343
        %v1364 = vmul.f32 %v1291, %v1343
        %v1365 = vmul.f32 %v1298, %v1344
        %v1366 = vmul.f32 %v1304, %v1344
        %v1367 = vmul.f32 %v1311, %v1345
        %v1368 = vmul.f32 %v1317, %v1345
        %v1369 = vmul.f32 %v1324, %v1346
        %v1370 = vmul.f32 %v1330, %v1346
        %v1371 = vpack.c.bf16 %v1355, %v1355
        %v1372 = vpack.c.bf16 %v1356, %v1356
        %v1373 = vpack.c.bf16 %v1357, %v1357
        %v1374 = vpack.c.bf16 %v1358, %v1358
        %v1375 = vpack.c.bf16 %v1359, %v1359
        %v1376 = vpack.c.bf16 %v1360, %v1360
        %v1377 = vpack.c.bf16 %v1361, %v1361
        %v1378 = vpack.c.bf16 %v1362, %v1362
        %v1379 = vpack.c.bf16 %v1363, %v1363
        %v1380 = vpack.c.bf16 %v1364, %v1364
        %v1381 = vpack.c.bf16 %v1365, %v1365
        %v1382 = vpack.c.bf16 %v1366, %v1366
        %v1383 = vpack.c.bf16 %v1367, %v1367
        %v1384 = vpack.c.bf16 %v1368, %v1368
        %v1385 = vpack.c.bf16 %v1369, %v1369
        %v1386 = vpack.c.bf16 %v1370, %v1370
        %1387 = vst [vmem:[#allocation5] sm:$0xf] %v1371
        %1388 = vst [vmem:[#allocation5 + $0x4] sm:$0xf] %v1372
        %1389 = vst [vmem:[#allocation5 + $0x8] sm:$0xf] %v1373
        %1390 = vst [vmem:[#allocation5 + $0xc] sm:$0xf] %v1374
        %1391 = vst [vmem:[#allocation5 + $0x10] sm:$0xf] %v1375
        %1392 = vst [vmem:[#allocation5 + $0x14] sm:$0xf] %v1376
        %1393 = vst [vmem:[#allocation5 + $0x18] sm:$0xf] %v1377
        %1394 = vst [vmem:[#allocation5 + $0x1c] sm:$0xf] %v1378
        %1395 = vst [vmem:[#allocation5 + $0x20] sm:$0xf] %v1379
        %1396 = vst [vmem:[#allocation5 + $0x24] sm:$0xf] %v1380
        %1397 = vst [vmem:[#allocation5 + $0x28] sm:$0xf] %v1381
        %1398 = vst [vmem:[#allocation5 + $0x2c] sm:$0xf] %v1382
        %1399 = vst [vmem:[#allocation5 + $0x30] sm:$0xf] %v1383
        %1400 = vst [vmem:[#allocation5 + $0x34] sm:$0xf] %v1384
        %1401 = vst [vmem:[#allocation5 + $0x38] sm:$0xf] %v1385
        %1402 = vst [vmem:[#allocation5 + $0x3c] sm:$0xf] %v1386
        %v1403 = vld [vmem:[#allocation2] sm:$0xff]
        %v1404 = vld [vmem:[#allocation2 + $0x10] sm:$0xff]
        %v1405 = vld [vmem:[#allocation4] sm:$0xff]
        %v1406 = vld [vmem:[#allocation4 + $0x8] sm:$0xff]
        %v1407 = vmul.f32 %v1405, %v1403
        %v1408 = vmul.f32 %v1406, %v1404
        %v1409 = vld [vmem:[#allocation5] sm:$0xf]
        %v1410 = vld [vmem:[#allocation5 + $0x4] sm:$0xf]
        %v1411 = vunpack.c.l.bf16 %v1409
        %v1412 = vunpack.c.l.bf16 %v1410
        %v1413 = vadd.f32 %v1407, %v1411
        %v1414 = vadd.f32 %v1408, %v1412
        %v1415 = vpack.c.bf16 %v1413, %v1413
        %v1416 = vpack.c.bf16 %v1414, %v1414
        %1417 = vst [vmem:[#allocation6] sm:$0xf] %v1415
        %1418 = vst [vmem:[#allocation6 + $0x4] sm:$0xf] %v1416
        %s1419 = scalar_lea.vmem [#allocation4], 16
        %v1420 = vld [vmem:[%s1419] sm:$0xff]
        %v1421 = vld [vmem:[%s1419 + $0x8] sm:$0xff]
        %v1422 = vmul.f32 %v1420, %v1413
        %v1423 = vmul.f32 %v1421, %v1414
        %s1424 = scalar_lea.vmem [#allocation5], 8
        %v1425 = vld [vmem:[%s1424] sm:$0xf]
        %v1426 = vld [vmem:[%s1424 + $0x4] sm:$0xf]
        %v1427 = vunpack.c.l.bf16 %v1425
        %v1428 = vunpack.c.l.bf16 %v1426
        %v1429 = vadd.f32 %v1422, %v1427
        %v1430 = vadd.f32 %v1423, %v1428
        %v1431 = vpack.c.bf16 %v1429, %v1429
        %v1432 = vpack.c.bf16 %v1430, %v1430
        %s1433 = scalar_lea.vmem [#allocation6], 8
        %1434 = vst [vmem:[%s1433] sm:$0xf] %v1431
        %1435 = vst [vmem:[%s1433 + $0x4] sm:$0xf] %v1432
        %s1436 = scalar_lea.vmem [#allocation4], 32
        %v1437 = vld [vmem:[%s1436] sm:$0xff]
        %v1438 = vld [vmem:[%s1436 + $0x8] sm:$0xff]
        %v1439 = vmul.f32 %v1437, %v1429
        %v1440 = vmul.f32 %v1438, %v1430
        %s1441 = scalar_lea.vmem [#allocation5], 16
        %v1442 = vld [vmem:[%s1441] sm:$0xf]
        %v1443 = vld [vmem:[%s1441 + $0x4] sm:$0xf]
        %v1444 = vunpack.c.l.bf16 %v1442
        %v1445 = vunpack.c.l.bf16 %v1443
        %v1446 = vadd.f32 %v1439, %v1444
        %v1447 = vadd.f32 %v1440, %v1445
        %v1448 = vpack.c.bf16 %v1446, %v1446
        %v1449 = vpack.c.bf16 %v1447, %v1447
        %s1450 = scalar_lea.vmem [#allocation6], 16
        %1451 = vst [vmem:[%s1450] sm:$0xf] %v1448
        %1452 = vst [vmem:[%s1450 + $0x4] sm:$0xf] %v1449
        %s1453 = scalar_lea.vmem [#allocation4], 48
        %v1454 = vld [vmem:[%s1453] sm:$0xff]
        %v1455 = vld [vmem:[%s1453 + $0x8] sm:$0xff]
        %v1456 = vmul.f32 %v1454, %v1446
        %v1457 = vmul.f32 %v1455, %v1447
        %s1458 = scalar_lea.vmem [#allocation5], 24
        %v1459 = vld [vmem:[%s1458] sm:$0xf]
        %v1460 = vld [vmem:[%s1458 + $0x4] sm:$0xf]
        %v1461 = vunpack.c.l.bf16 %v1459
        %v1462 = vunpack.c.l.bf16 %v1460
        %v1463 = vadd.f32 %v1456, %v1461
        %v1464 = vadd.f32 %v1457, %v1462
        %v1465 = vpack.c.bf16 %v1463, %v1463
        %v1466 = vpack.c.bf16 %v1464, %v1464
        %s1467 = scalar_lea.vmem [#allocation6], 24
        %1468 = vst [vmem:[%s1467] sm:$0xf] %v1465
        %1469 = vst [vmem:[%s1467 + $0x4] sm:$0xf] %v1466
        %s1470 = scalar_lea.vmem [#allocation4], 64
        %v1471 = vld [vmem:[%s1470] sm:$0xff]
        %v1472 = vld [vmem:[%s1470 + $0x8] sm:$0xff]
        %v1473 = vmul.f32 %v1471, %v1463
        %v1474 = vmul.f32 %v1472, %v1464
        %s1475 = scalar_lea.vmem [#allocation5], 32
        %v1476 = vld [vmem:[%s1475] sm:$0xf]
        %v1477 = vld [vmem:[%s1475 + $0x4] sm:$0xf]
        %v1478 = vunpack.c.l.bf16 %v1476
        %v1479 = vunpack.c.l.bf16 %v1477
        %v1480 = vadd.f32 %v1473, %v1478
        %v1481 = vadd.f32 %v1474, %v1479
        %v1482 = vpack.c.bf16 %v1480, %v1480
        %v1483 = vpack.c.bf16 %v1481, %v1481
        %s1484 = scalar_lea.vmem [#allocation6], 32
        %1485 = vst [vmem:[%s1484] sm:$0xf] %v1482
        %1486 = vst [vmem:[%s1484 + $0x4] sm:$0xf] %v1483
        %s1487 = scalar_lea.vmem [#allocation4], 80
        %v1488 = vld [vmem:[%s1487] sm:$0xff]
        %v1489 = vld [vmem:[%s1487 + $0x8] sm:$0xff]
        %v1490 = vmul.f32 %v1488, %v1480
        %v1491 = vmul.f32 %v1489, %v1481
        %s1492 = scalar_lea.vmem [#allocation5], 40
        %v1493 = vld [vmem:[%s1492] sm:$0xf]
        %v1494 = vld [vmem:[%s1492 + $0x4] sm:$0xf]
        %v1495 = vunpack.c.l.bf16 %v1493
        %v1496 = vunpack.c.l.bf16 %v1494
        %v1497 = vadd.f32 %v1490, %v1495
        %v1498 = vadd.f32 %v1491, %v1496
        %v1499 = vpack.c.bf16 %v1497, %v1497
        %v1500 = vpack.c.bf16 %v1498, %v1498
        %s1501 = scalar_lea.vmem [#allocation6], 40
        %1502 = vst [vmem:[%s1501] sm:$0xf] %v1499
        %1503 = vst [vmem:[%s1501 + $0x4] sm:$0xf] %v1500
        %s1504 = scalar_lea.vmem [#allocation4], 96
        %v1505 = vld [vmem:[%s1504] sm:$0xff]
        %v1506 = vld [vmem:[%s1504 + $0x8] sm:$0xff]
        %v1507 = vmul.f32 %v1505, %v1497
        %v1508 = vmul.f32 %v1506, %v1498
        %s1509 = scalar_lea.vmem [#allocation5], 48
        %v1510 = vld [vmem:[%s1509] sm:$0xf]
        %v1511 = vld [vmem:[%s1509 + $0x4] sm:$0xf]
        %v1512 = vunpack.c.l.bf16 %v1510
        %v1513 = vunpack.c.l.bf16 %v1511
        %v1514 = vadd.f32 %v1507, %v1512
        %v1515 = vadd.f32 %v1508, %v1513
        %v1516 = vpack.c.bf16 %v1514, %v1514
        %v1517 = vpack.c.bf16 %v1515, %v1515
        %s1518 = scalar_lea.vmem [#allocation6], 48
        %1519 = vst [vmem:[%s1518] sm:$0xf] %v1516
        %1520 = vst [vmem:[%s1518 + $0x4] sm:$0xf] %v1517
        %s1521 = scalar_lea.vmem [#allocation4], 112
        %v1522 = vld [vmem:[%s1521] sm:$0xff]
        %v1523 = vld [vmem:[%s1521 + $0x8] sm:$0xff]
        %v1524 = vmul.f32 %v1522, %v1514
        %v1525 = vmul.f32 %v1523, %v1515
        %s1526 = scalar_lea.vmem [#allocation5], 56
        %v1527 = vld [vmem:[%s1526] sm:$0xf]
        %v1528 = vld [vmem:[%s1526 + $0x4] sm:$0xf]
        %v1529 = vunpack.c.l.bf16 %v1527
        %v1530 = vunpack.c.l.bf16 %v1528
        %v1531 = vadd.f32 %v1524, %v1529
        %v1532 = vadd.f32 %v1525, %v1530
        %v1533 = vpack.c.bf16 %v1531, %v1531
        %v1534 = vpack.c.bf16 %v1532, %v1532
        %s1535 = scalar_lea.vmem [#allocation6], 56
        %1536 = vst [vmem:[%s1535] sm:$0xf] %v1533
        %1537 = vst [vmem:[%s1535 + $0x4] sm:$0xf] %v1534
        %1538 = vst [vmem:[#allocation2] sm:$0xff] %v1531
        %1539 = vst [vmem:[#allocation2 + $0x10] sm:$0xff] %v1532
        %v1540 = vld [vmem:[#allocation6] sm:$0x1]
        %v1541 = vld [vmem:[#allocation6 + $0x8] sm:$0x1]
        %v1542 = vld [vmem:[#allocation6 + $0x10] sm:$0x1]
        %v1543 = vld [vmem:[#allocation6 + $0x18] sm:$0x1]
        %v1544 = vld [vmem:[#allocation6 + $0x20] sm:$0x1]
        %v1545 = vld [vmem:[#allocation6 + $0x28] sm:$0x1]
        %v1546 = vld [vmem:[#allocation6 + $0x30] sm:$0x1]
        %v1547 = vld [vmem:[#allocation6 + $0x38] sm:$0x1]
        %v1548 = vunpack.c.l.bf16 %v1540
        %v1549 = vunpack.c.l.bf16 %v1541
        %v1550 = vunpack.c.l.bf16 %v1542
        %v1551 = vunpack.c.l.bf16 %v1543
        %v1552 = vunpack.c.l.bf16 %v1544
        %v1553 = vunpack.c.l.bf16 %v1545
        %v1554 = vunpack.c.l.bf16 %v1546
        %v1555 = vunpack.c.l.bf16 %v1547
        %1557 = vset.pattern.permute.xlu0 24
        %1558 = vperm.xlu0 %1557, %v1029
        %v1559 = vpop.permute.xlu0 %1558
        %v1569 = vrot.slane %v1549, 7
        %vm1570 = vcmask 1041409
        %v1571 = vsel %vm1570, %v1569, %v1548
        %v1572 = vrot.slane %v1550, 6
        %vm1573 = vcmask 1042434
        %v1574 = vsel %vm1573, %v1572, %v1571
        %v1575 = vrot.slane %v1551, 5
        %vm1576 = vcmask 1043459
        %v1577 = vsel %vm1576, %v1575, %v1574
        %v1578 = vrot.slane %v1552, 4
        %vm1579 = vcmask 1044484
        %v1580 = vsel %vm1579, %v1578, %v1577
        %v1581 = vrot.slane %v1553, 3
        %vm1582 = vcmask 1045509
        %v1583 = vsel %vm1582, %v1581, %v1580
        %v1584 = vrot.slane %v1554, 2
        %vm1585 = vcmask 1046534
        %v1586 = vsel %vm1585, %v1584, %v1583
        %v1587 = vrot.slane %v1555, 1
        %vm1588 = vcmask 1047559
        %v1589 = vsel %vm1588, %v1587, %v1586
        %v1591 = vmul.f32 %v1559, %v1589
        %1592 = vset.pattern.permute.xlu0 25
        %1593 = vperm.xlu0 %1592, %v1029
        %v1594 = vpop.permute.xlu0 %1593
        %v1596 = vrot.slane %v1548, 1
        %v1597 = vsel %vm1570, %v1549, %v1596
        %v1598 = vrot.slane %v1550, 7
        %v1599 = vsel %vm1573, %v1598, %v1597
        %v1600 = vrot.slane %v1551, 6
        %v1601 = vsel %vm1576, %v1600, %v1599
        %v1602 = vrot.slane %v1552, 5
        %v1603 = vsel %vm1579, %v1602, %v1601
        %v1604 = vrot.slane %v1553, 4
        %v1605 = vsel %vm1582, %v1604, %v1603
        %v1606 = vrot.slane %v1554, 3
        %v1607 = vsel %vm1585, %v1606, %v1605
        %v1608 = vrot.slane %v1555, 2
        %v1609 = vsel %vm1588, %v1608, %v1607
        %v1611 = vmul.f32 %v1594, %v1609
        %v1612 = vadd.f32 %v1591, %v1611
        %v1613 = vld [vmem:[#allocation6] sm:$0x2]
        %v1614 = vld [vmem:[#allocation6 + $0x8] sm:$0x2]
        %v1615 = vld [vmem:[#allocation6 + $0x10] sm:$0x2]
        %v1616 = vld [vmem:[#allocation6 + $0x18] sm:$0x2]
        %v1617 = vld [vmem:[#allocation6 + $0x20] sm:$0x2]
        %v1618 = vld [vmem:[#allocation6 + $0x28] sm:$0x2]
        %v1619 = vld [vmem:[#allocation6 + $0x30] sm:$0x2]
        %v1620 = vld [vmem:[#allocation6 + $0x38] sm:$0x2]
        %v1621 = vunpack.c.l.bf16 %v1613
        %v1622 = vunpack.c.l.bf16 %v1614
        %v1623 = vunpack.c.l.bf16 %v1615
        %v1624 = vunpack.c.l.bf16 %v1616
        %v1625 = vunpack.c.l.bf16 %v1617
        %v1626 = vunpack.c.l.bf16 %v1618
        %v1627 = vunpack.c.l.bf16 %v1619
        %v1628 = vunpack.c.l.bf16 %v1620
        %1629 = vset.pattern.permute.xlu0 26
        %1630 = vperm.xlu0 %1629, %v1029
        %v1631 = vpop.permute.xlu0 %1630
        %v1641 = vrot.slane %v1621, 2
        %v1642 = vrot.slane %v1622, 1
        %v1643 = vsel %vm1570, %v1642, %v1641
        %v1644 = vsel %vm1573, %v1623, %v1643
        %v1645 = vrot.slane %v1624, 7
        %v1646 = vsel %vm1576, %v1645, %v1644
        %v1647 = vrot.slane %v1625, 6
        %v1648 = vsel %vm1579, %v1647, %v1646
        %v1649 = vrot.slane %v1626, 5
        %v1650 = vsel %vm1582, %v1649, %v1648
        %v1651 = vrot.slane %v1627, 4
        %v1652 = vsel %vm1585, %v1651, %v1650
        %v1653 = vrot.slane %v1628, 3
        %v1654 = vsel %vm1588, %v1653, %v1652
        %v1656 = vmul.f32 %v1631, %v1654
        %v1657 = vadd.f32 %v1612, %v1656
        %1658 = vset.pattern.permute.xlu0 27
        %1659 = vperm.xlu0 %1658, %v1029
        %v1660 = vpop.permute.xlu0 %1659
        %v1662 = vrot.slane %v1621, 3
        %v1663 = vrot.slane %v1622, 2
        %v1664 = vsel %vm1570, %v1663, %v1662
        %v1665 = vrot.slane %v1623, 1
        %v1666 = vsel %vm1573, %v1665, %v1664
        %v1667 = vsel %vm1576, %v1624, %v1666
        %v1668 = vrot.slane %v1625, 7
        %v1669 = vsel %vm1579, %v1668, %v1667
        %v1670 = vrot.slane %v1626, 6
        %v1671 = vsel %vm1582, %v1670, %v1669
        %v1672 = vrot.slane %v1627, 5
        %v1673 = vsel %vm1585, %v1672, %v1671
        %v1674 = vrot.slane %v1628, 4
        %v1675 = vsel %vm1588, %v1674, %v1673
        %v1677 = vmul.f32 %v1660, %v1675
        %v1678 = vadd.f32 %v1657, %v1677
        %v1679 = vld [vmem:[#allocation6] sm:$0x4]
        %v1680 = vld [vmem:[#allocation6 + $0x8] sm:$0x4]
        %v1681 = vld [vmem:[#allocation6 + $0x10] sm:$0x4]
        %v1682 = vld [vmem:[#allocation6 + $0x18] sm:$0x4]
        %v1683 = vld [vmem:[#allocation6 + $0x20] sm:$0x4]
        %v1684 = vld [vmem:[#allocation6 + $0x28] sm:$0x4]
        %v1685 = vld [vmem:[#allocation6 + $0x30] sm:$0x4]
        %v1686 = vld [vmem:[#allocation6 + $0x38] sm:$0x4]
        %v1687 = vunpack.c.l.bf16 %v1679
        %v1688 = vunpack.c.l.bf16 %v1680
        %v1689 = vunpack.c.l.bf16 %v1681
        %v1690 = vunpack.c.l.bf16 %v1682
        %v1691 = vunpack.c.l.bf16 %v1683
        %v1692 = vunpack.c.l.bf16 %v1684
        %v1693 = vunpack.c.l.bf16 %v1685
        %v1694 = vunpack.c.l.bf16 %v1686
        %1695 = vset.pattern.permute.xlu0 28
        %1696 = vperm.xlu0 %1695, %v1029
        %v1697 = vpop.permute.xlu0 %1696
        %v1707 = vrot.slane %v1687, 4
        %v1708 = vrot.slane %v1688, 3
        %v1709 = vsel %vm1570, %v1708, %v1707
        %v1710 = vrot.slane %v1689, 2
        %v1711 = vsel %vm1573, %v1710, %v1709
        %v1712 = vrot.slane %v1690, 1
        %v1713 = vsel %vm1576, %v1712, %v1711
        %v1714 = vsel %vm1579, %v1691, %v1713
        %v1715 = vrot.slane %v1692, 7
        %v1716 = vsel %vm1582, %v1715, %v1714
        %v1717 = vrot.slane %v1693, 6
        %v1718 = vsel %vm1585, %v1717, %v1716
        %v1719 = vrot.slane %v1694, 5
        %v1720 = vsel %vm1588, %v1719, %v1718
        %v1722 = vmul.f32 %v1697, %v1720
        %v1723 = vadd.f32 %v1678, %v1722
        %1724 = vset.pattern.permute.xlu0 29
        %1725 = vperm.xlu0 %1724, %v1029
        %v1726 = vpop.permute.xlu0 %1725
        %v1728 = vrot.slane %v1687, 5
        %v1729 = vrot.slane %v1688, 4
        %v1730 = vsel %vm1570, %v1729, %v1728
        %v1731 = vrot.slane %v1689, 3
        %v1732 = vsel %vm1573, %v1731, %v1730
        %v1733 = vrot.slane %v1690, 2
        %v1734 = vsel %vm1576, %v1733, %v1732
        %v1735 = vrot.slane %v1691, 1
        %v1736 = vsel %vm1579, %v1735, %v1734
        %v1737 = vsel %vm1582, %v1692, %v1736
        %v1738 = vrot.slane %v1693, 7
        %v1739 = vsel %vm1585, %v1738, %v1737
        %v1740 = vrot.slane %v1694, 6
        %v1741 = vsel %vm1588, %v1740, %v1739
        %v1743 = vmul.f32 %v1726, %v1741
        %v1744 = vadd.f32 %v1723, %v1743
        %v1745 = vld [vmem:[#allocation6] sm:$0x8]
        %v1746 = vld [vmem:[#allocation6 + $0x8] sm:$0x8]
        %v1747 = vld [vmem:[#allocation6 + $0x10] sm:$0x8]
        %v1748 = vld [vmem:[#allocation6 + $0x18] sm:$0x8]
        %v1749 = vld [vmem:[#allocation6 + $0x20] sm:$0x8]
        %v1750 = vld [vmem:[#allocation6 + $0x28] sm:$0x8]
        %v1751 = vld [vmem:[#allocation6 + $0x30] sm:$0x8]
        %v1752 = vld [vmem:[#allocation6 + $0x38] sm:$0x8]
        %v1753 = vunpack.c.l.bf16 %v1745
        %v1754 = vunpack.c.l.bf16 %v1746
        %v1755 = vunpack.c.l.bf16 %v1747
        %v1756 = vunpack.c.l.bf16 %v1748
        %v1757 = vunpack.c.l.bf16 %v1749
        %v1758 = vunpack.c.l.bf16 %v1750
        %v1759 = vunpack.c.l.bf16 %v1751
        %v1760 = vunpack.c.l.bf16 %v1752
        %1761 = vset.pattern.permute.xlu0 30
        %1762 = vperm.xlu0 %1761, %v1029
        %v1763 = vpop.permute.xlu0 %1762
        %v1773 = vrot.slane %v1753, 6
        %v1774 = vrot.slane %v1754, 5
        %v1775 = vsel %vm1570, %v1774, %v1773
        %v1776 = vrot.slane %v1755, 4
        %v1777 = vsel %vm1573, %v1776, %v1775
        %v1778 = vrot.slane %v1756, 3
        %v1779 = vsel %vm1576, %v1778, %v1777
        %v1780 = vrot.slane %v1757, 2
        %v1781 = vsel %vm1579, %v1780, %v1779
        %v1782 = vrot.slane %v1758, 1
        %v1783 = vsel %vm1582, %v1782, %v1781
        %v1784 = vsel %vm1585, %v1759, %v1783
        %v1785 = vrot.slane %v1760, 7
        %v1786 = vsel %vm1588, %v1785, %v1784
        %v1788 = vmul.f32 %v1763, %v1786
        %v1789 = vadd.f32 %v1744, %v1788
        %1790 = vset.pattern.permute.xlu0 31
        %1791 = vperm.xlu0 %1790, %v1029
        %v1792 = vpop.permute.xlu0 %1791
        %v1794 = vrot.slane %v1753, 7
        %v1795 = vrot.slane %v1754, 6
        %v1796 = vsel %vm1570, %v1795, %v1794
        %v1797 = vrot.slane %v1755, 5
        %v1798 = vsel %vm1573, %v1797, %v1796
        %v1799 = vrot.slane %v1756, 4
        %v1800 = vsel %vm1576, %v1799, %v1798
        %v1801 = vrot.slane %v1757, 3
        %v1802 = vsel %vm1579, %v1801, %v1800
        %v1803 = vrot.slane %v1758, 2
        %v1804 = vsel %vm1582, %v1803, %v1802
        %v1805 = vrot.slane %v1759, 1
        %v1806 = vsel %vm1585, %v1805, %v1804
        %v1807 = vsel %vm1588, %v1760, %v1806
        %v1809 = vmul.f32 %v1792, %v1807
        %v1810 = vadd.f32 %v1789, %v1809
        %v1811 = vld [vmem:[#allocation6 + $0x4] sm:$0x1]
        %v1812 = vld [vmem:[#allocation6 + $0xc] sm:$0x1]
        %v1813 = vld [vmem:[#allocation6 + $0x14] sm:$0x1]
        %v1814 = vld [vmem:[#allocation6 + $0x1c] sm:$0x1]
        %v1815 = vld [vmem:[#allocation6 + $0x24] sm:$0x1]
        %v1816 = vld [vmem:[#allocation6 + $0x2c] sm:$0x1]
        %v1817 = vld [vmem:[#allocation6 + $0x34] sm:$0x1]
        %v1818 = vld [vmem:[#allocation6 + $0x3c] sm:$0x1]
        %v1819 = vunpack.c.l.bf16 %v1811
        %v1820 = vunpack.c.l.bf16 %v1812
        %v1821 = vunpack.c.l.bf16 %v1813
        %v1822 = vunpack.c.l.bf16 %v1814
        %v1823 = vunpack.c.l.bf16 %v1815
        %v1824 = vunpack.c.l.bf16 %v1816
        %v1825 = vunpack.c.l.bf16 %v1817
        %v1826 = vunpack.c.l.bf16 %v1818
        %1827 = vset.pattern.permute.xlu0 32
        %1828 = vperm.xlu0 %1827, %v1029
        %v1829 = vpop.permute.xlu0 %1828
        %v1839 = vrot.slane %v1820, 7
        %v1840 = vsel %vm1570, %v1839, %v1819
        %v1841 = vrot.slane %v1821, 6
        %v1842 = vsel %vm1573, %v1841, %v1840
        %v1843 = vrot.slane %v1822, 5
        %v1844 = vsel %vm1576, %v1843, %v1842
        %v1845 = vrot.slane %v1823, 4
        %v1846 = vsel %vm1579, %v1845, %v1844
        %v1847 = vrot.slane %v1824, 3
        %v1848 = vsel %vm1582, %v1847, %v1846
        %v1849 = vrot.slane %v1825, 2
        %v1850 = vsel %vm1585, %v1849, %v1848
        %v1851 = vrot.slane %v1826, 1
        %v1852 = vsel %vm1588, %v1851, %v1850
        %v1854 = vmul.f32 %v1829, %v1852
        %v1855 = vadd.f32 %v1810, %v1854
        %1856 = vset.pattern.permute.xlu0 33
        %1857 = vperm.xlu0 %1856, %v1029
        %v1858 = vpop.permute.xlu0 %1857
        %v1860 = vrot.slane %v1819, 1
        %v1861 = vsel %vm1570, %v1820, %v1860
        %v1862 = vrot.slane %v1821, 7
        %v1863 = vsel %vm1573, %v1862, %v1861
        %v1864 = vrot.slane %v1822, 6
        %v1865 = vsel %vm1576, %v1864, %v1863
        %v1866 = vrot.slane %v1823, 5
        %v1867 = vsel %vm1579, %v1866, %v1865
        %v1868 = vrot.slane %v1824, 4
        %v1869 = vsel %vm1582, %v1868, %v1867
        %v1870 = vrot.slane %v1825, 3
        %v1871 = vsel %vm1585, %v1870, %v1869
        %v1872 = vrot.slane %v1826, 2
        %v1873 = vsel %vm1588, %v1872, %v1871
        %v1875 = vmul.f32 %v1858, %v1873
        %v1876 = vadd.f32 %v1855, %v1875
        %v1877 = vld [vmem:[#allocation6 + $0x4] sm:$0x2]
        %v1878 = vld [vmem:[#allocation6 + $0xc] sm:$0x2]
        %v1879 = vld [vmem:[#allocation6 + $0x14] sm:$0x2]
        %v1880 = vld [vmem:[#allocation6 + $0x1c] sm:$0x2]
        %v1881 = vld [vmem:[#allocation6 + $0x24] sm:$0x2]
        %v1882 = vld [vmem:[#allocation6 + $0x2c] sm:$0x2]
        %v1883 = vld [vmem:[#allocation6 + $0x34] sm:$0x2]
        %v1884 = vld [vmem:[#allocation6 + $0x3c] sm:$0x2]
        %v1885 = vunpack.c.l.bf16 %v1877
        %v1886 = vunpack.c.l.bf16 %v1878
        %v1887 = vunpack.c.l.bf16 %v1879
        %v1888 = vunpack.c.l.bf16 %v1880
        %v1889 = vunpack.c.l.bf16 %v1881
        %v1890 = vunpack.c.l.bf16 %v1882
        %v1891 = vunpack.c.l.bf16 %v1883
        %v1892 = vunpack.c.l.bf16 %v1884
        %1893 = vset.pattern.permute.xlu0 34
        %1894 = vperm.xlu0 %1893, %v1029
        %v1895 = vpop.permute.xlu0 %1894
        %v1905 = vrot.slane %v1885, 2
        %v1906 = vrot.slane %v1886, 1
        %v1907 = vsel %vm1570, %v1906, %v1905
        %v1908 = vsel %vm1573, %v1887, %v1907
        %v1909 = vrot.slane %v1888, 7
        %v1910 = vsel %vm1576, %v1909, %v1908
        %v1911 = vrot.slane %v1889, 6
        %v1912 = vsel %vm1579, %v1911, %v1910
        %v1913 = vrot.slane %v1890, 5
        %v1914 = vsel %vm1582, %v1913, %v1912
        %v1915 = vrot.slane %v1891, 4
        %v1916 = vsel %vm1585, %v1915, %v1914
        %v1917 = vrot.slane %v1892, 3
        %v1918 = vsel %vm1588, %v1917, %v1916
        %v1920 = vmul.f32 %v1895, %v1918
        %v1921 = vadd.f32 %v1876, %v1920
        %1922 = vset.pattern.permute.xlu0 35
        %1923 = vperm.xlu0 %1922, %v1029
        %v1924 = vpop.permute.xlu0 %1923
        %v1926 = vrot.slane %v1885, 3
        %v1927 = vrot.slane %v1886, 2
        %v1928 = vsel %vm1570, %v1927, %v1926
        %v1929 = vrot.slane %v1887, 1
        %v1930 = vsel %vm1573, %v1929, %v1928
        %v1931 = vsel %vm1576, %v1888, %v1930
        %v1932 = vrot.slane %v1889, 7
        %v1933 = vsel %vm1579, %v1932, %v1931
        %v1934 = vrot.slane %v1890, 6
        %v1935 = vsel %vm1582, %v1934, %v1933
        %v1936 = vrot.slane %v1891, 5
        %v1937 = vsel %vm1585, %v1936, %v1935
        %v1938 = vrot.slane %v1892, 4
        %v1939 = vsel %vm1588, %v1938, %v1937
        %v1941 = vmul.f32 %v1924, %v1939
        %v1942 = vadd.f32 %v1921, %v1941
        %v1943 = vld [vmem:[#allocation6 + $0x4] sm:$0x4]
        %v1944 = vld [vmem:[#allocation6 + $0xc] sm:$0x4]
        %v1945 = vld [vmem:[#allocation6 + $0x14] sm:$0x4]
        %v1946 = vld [vmem:[#allocation6 + $0x1c] sm:$0x4]
        %v1947 = vld [vmem:[#allocation6 + $0x24] sm:$0x4]
        %v1948 = vld [vmem:[#allocation6 + $0x2c] sm:$0x4]
        %v1949 = vld [vmem:[#allocation6 + $0x34] sm:$0x4]
        %v1950 = vld [vmem:[#allocation6 + $0x3c] sm:$0x4]
        %v1951 = vunpack.c.l.bf16 %v1943
        %v1952 = vunpack.c.l.bf16 %v1944
        %v1953 = vunpack.c.l.bf16 %v1945
        %v1954 = vunpack.c.l.bf16 %v1946
        %v1955 = vunpack.c.l.bf16 %v1947
        %v1956 = vunpack.c.l.bf16 %v1948
        %v1957 = vunpack.c.l.bf16 %v1949
        %v1958 = vunpack.c.l.bf16 %v1950
        %1959 = vset.pattern.permute.xlu0 36
        %1960 = vperm.xlu0 %1959, %v1029
        %v1961 = vpop.permute.xlu0 %1960
        %v1971 = vrot.slane %v1951, 4
        %v1972 = vrot.slane %v1952, 3
        %v1973 = vsel %vm1570, %v1972, %v1971
        %v1974 = vrot.slane %v1953, 2
        %v1975 = vsel %vm1573, %v1974, %v1973
        %v1976 = vrot.slane %v1954, 1
        %v1977 = vsel %vm1576, %v1976, %v1975
        %v1978 = vsel %vm1579, %v1955, %v1977
        %v1979 = vrot.slane %v1956, 7
        %v1980 = vsel %vm1582, %v1979, %v1978
        %v1981 = vrot.slane %v1957, 6
        %v1982 = vsel %vm1585, %v1981, %v1980
        %v1983 = vrot.slane %v1958, 5
        %v1984 = vsel %vm1588, %v1983, %v1982
        %v1986 = vmul.f32 %v1961, %v1984
        %v1987 = vadd.f32 %v1942, %v1986
        %1988 = vset.pattern.permute.xlu0 37
        %1989 = vperm.xlu0 %1988, %v1029
        %v1990 = vpop.permute.xlu0 %1989
        %v1992 = vrot.slane %v1951, 5
        %v1993 = vrot.slane %v1952, 4
        %v1994 = vsel %vm1570, %v1993, %v1992
        %v1995 = vrot.slane %v1953, 3
        %v1996 = vsel %vm1573, %v1995, %v1994
        %v1997 = vrot.slane %v1954, 2
        %v1998 = vsel %vm1576, %v1997, %v1996
        %v1999 = vrot.slane %v1955, 1
        %v2000 = vsel %vm1579, %v1999, %v1998
        %v2001 = vsel %vm1582, %v1956, %v2000
        %v2002 = vrot.slane %v1957, 7
        %v2003 = vsel %vm1585, %v2002, %v2001
        %v2004 = vrot.slane %v1958, 6
        %v2005 = vsel %vm1588, %v2004, %v2003
        %v2007 = vmul.f32 %v1990, %v2005
        %v2008 = vadd.f32 %v1987, %v2007
        %v2009 = vld [vmem:[#allocation6 + $0x4] sm:$0x8]
        %v2010 = vld [vmem:[#allocation6 + $0xc] sm:$0x8]
        %v2011 = vld [vmem:[#allocation6 + $0x14] sm:$0x8]
        %v2012 = vld [vmem:[#allocation6 + $0x1c] sm:$0x8]
        %v2013 = vld [vmem:[#allocation6 + $0x24] sm:$0x8]
        %v2014 = vld [vmem:[#allocation6 + $0x2c] sm:$0x8]
        %v2015 = vld [vmem:[#allocation6 + $0x34] sm:$0x8]
        %v2016 = vld [vmem:[#allocation6 + $0x3c] sm:$0x8]
        %v2017 = vunpack.c.l.bf16 %v2009
        %v2018 = vunpack.c.l.bf16 %v2010
        %v2019 = vunpack.c.l.bf16 %v2011
        %v2020 = vunpack.c.l.bf16 %v2012
        %v2021 = vunpack.c.l.bf16 %v2013
        %v2022 = vunpack.c.l.bf16 %v2014
        %v2023 = vunpack.c.l.bf16 %v2015
        %v2024 = vunpack.c.l.bf16 %v2016
        %2025 = vset.pattern.permute.xlu0 38
        %2026 = vperm.xlu0 %2025, %v1029
        %v2027 = vpop.permute.xlu0 %2026
        %v2037 = vrot.slane %v2017, 6
        %v2038 = vrot.slane %v2018, 5
        %v2039 = vsel %vm1570, %v2038, %v2037
        %v2040 = vrot.slane %v2019, 4
        %v2041 = vsel %vm1573, %v2040, %v2039
        %v2042 = vrot.slane %v2020, 3
        %v2043 = vsel %vm1576, %v2042, %v2041
        %v2044 = vrot.slane %v2021, 2
        %v2045 = vsel %vm1579, %v2044, %v2043
        %v2046 = vrot.slane %v2022, 1
        %v2047 = vsel %vm1582, %v2046, %v2045
        %v2048 = vsel %vm1585, %v2023, %v2047
        %v2049 = vrot.slane %v2024, 7
        %v2050 = vsel %vm1588, %v2049, %v2048
        %v2052 = vmul.f32 %v2027, %v2050
        %v2053 = vadd.f32 %v2008, %v2052
        %2054 = vset.pattern.permute.xlu0 39
        %2055 = vperm.xlu0 %2054, %v1029
        %v2056 = vpop.permute.xlu0 %2055
        %v2058 = vrot.slane %v2017, 7
        %v2059 = vrot.slane %v2018, 6
        %v2060 = vsel %vm1570, %v2059, %v2058
        %v2061 = vrot.slane %v2019, 5
        %v2062 = vsel %vm1573, %v2061, %v2060
        %v2063 = vrot.slane %v2020, 4
        %v2064 = vsel %vm1576, %v2063, %v2062
        %v2065 = vrot.slane %v2021, 3
        %v2066 = vsel %vm1579, %v2065, %v2064
        %v2067 = vrot.slane %v2022, 2
        %v2068 = vsel %vm1582, %v2067, %v2066
        %v2069 = vrot.slane %v2023, 1
        %v2070 = vsel %vm1585, %v2069, %v2068
        %v2071 = vsel %vm1588, %v2024, %v2070
        %v2073 = vmul.f32 %v2056, %v2071
        %v2074 = vadd.f32 %v2053, %v2073
        %v2075 = vld [vmem:[#allocation15] sm:$0x1]
        %v2077 = vperm.slane %v2075, 0
        %v2079 = vmul.f32 %v2077, %v852
        %v2080 = vmul.f32 %v2077, %v854
        %v2083 = vrot.slane %v2079, 5
        %v2084 = vrot.slane %v2080, 5
        %v2085 = vsel %vm1128, %v2083, %v2084
        %v2087 = vadd.f32 %v2074, %v2085
        %v2088 = vsub.f32 0.0, %v701
        %v2089 = vmul.f32 %v2088, 1.442695
        %v2090 = vpow.pop %v2089
        %v2091 = vadd.f32 %v2090, 1.0
        %v2092 = vrcp.pop %v2091
        %v2093 = vmul.f32 %v701, %v2092
        %v2094 = vmul.f32 %v2087, %v2093
        %v2095 = vpack.c.bf16 %v2094, %v2094
        %v2096 = vld [vmem:[%s9] sm:$0xf]
        %v2097 = vld [vmem:[%s9 + $0x4] sm:$0xf]
        %v2098 = vld [vmem:[%s9 + $0x8] sm:$0xf]
        %v2099 = vld [vmem:[%s9 + $0xc] sm:$0xf]
        %v2100 = vld [vmem:[%s9 + $0x10] sm:$0xf]
        %v2101 = vld [vmem:[%s9 + $0x14] sm:$0xf]
        %v2102 = vld [vmem:[%s9 + $0x18] sm:$0xf]
        %v2103 = vld [vmem:[%s9 + $0x1c] sm:$0xf]
        %v2104 = vld [vmem:[%s9 + $0x20] sm:$0xf]
        %v2105 = vld [vmem:[%s9 + $0x24] sm:$0xf]
        %v2106 = vld [vmem:[%s9 + $0x28] sm:$0xf]
        %v2107 = vld [vmem:[%s9 + $0x2c] sm:$0xf]
        %v2108 = vld [vmem:[%s9 + $0x30] sm:$0xf]
        %v2109 = vld [vmem:[%s9 + $0x34] sm:$0xf]
        %v2110 = vld [vmem:[%s9 + $0x38] sm:$0xf]
        %v2111 = vld [vmem:[%s9 + $0x3c] sm:$0xf]
        %v2128 = vunpack.c.l.b16 %v2096
        %v2129 = vunpack.c.l.b16 %v2097
        %v2130 = vunpack.c.l.b16 %v2098
        %v2131 = vunpack.c.l.b16 %v2099
        %v2132 = vunpack.c.l.b16 %v2100
        %v2133 = vunpack.c.l.b16 %v2101
        %v2134 = vunpack.c.l.b16 %v2102
        %v2135 = vunpack.c.l.b16 %v2103
        %v2136 = vunpack.c.l.b16 %v2104
        %v2137 = vunpack.c.l.b16 %v2105
        %v2138 = vunpack.c.l.b16 %v2106
        %v2139 = vunpack.c.l.b16 %v2107
        %v2140 = vunpack.c.l.b16 %v2108
        %v2141 = vunpack.c.l.b16 %v2109
        %v2142 = vunpack.c.l.b16 %v2110
        %v2143 = vunpack.c.l.b16 %v2111
        %v2144 = vpack.c.b16 %v2129, %v2128
        %v2145 = vpack.c.b16 %v2131, %v2130
        %v2146 = vpack.c.b16 %v2133, %v2132
        %v2147 = vpack.c.b16 %v2135, %v2134
        %v2148 = vpack.c.b16 %v2137, %v2136
        %v2149 = vpack.c.b16 %v2139, %v2138
        %v2150 = vpack.c.b16 %v2141, %v2140
        %v2151 = vpack.c.b16 %v2143, %v2142
        %2160 = vmatpush.bf16.msra.mxu0 %v2151
        %2161 = vmatpush.bf16.msra.mxu0 %v2150
        %2162 = vmatpush.bf16.msra.mxu0 %v2149
        %2163 = vmatpush.bf16.msra.mxu0 %v2148
        %2164 = vmatpush.bf16.msra.mxu0 %v2147
        %2165 = vmatpush.bf16.msra.mxu0 %v2146
        %2166 = vmatpush.bf16.msra.mxu0 %v2145
        %2167 = vmatpush.bf16.msra.mxu0 %v2144
        %2168 = vmatmul.bf16.gmra.mxu0 %v2095
        %v2169 = vpop.f32.mrf.mxu0
        %v2170 = vadd.f32 0.0, %v2169
        %v2171 = vpop.f32.mrf.mxu0
        %2172 = vdwg.mxu0
        %2173 = vst [vmem:[%s451] sm:$0xff] %v2170
        %v2175 = vrot.slane %v1107, 1
        %v2176 = vrot.slane %v1107, 2
        %v2177 = vrot.slane %v1107, 3
        %v2178 = vrot.slane %v1107, 4
        %v2179 = vrot.slane %v1107, 5
        %v2180 = vrot.slane %v1107, 6
        %v2181 = vrot.slane %v1107, 7
        %v2182 = vperm.slane %v1107, 0
        %v2183 = vperm.slane %v2175, 0
        %v2184 = vperm.slane %v2176, 0
        %v2185 = vperm.slane %v2177, 0
        %v2186 = vperm.slane %v2178, 0
        %v2187 = vperm.slane %v2179, 0
        %v2188 = vperm.slane %v2180, 0
        %v2189 = vperm.slane %v2181, 0
        %v2198 = vmul.f32 %v2182, %v1121
        %v2199 = vmul.f32 %v2182, %v1123
        %v2200 = vmul.f32 %v2183, %v1121
        %v2201 = vmul.f32 %v2183, %v1123
        %v2202 = vmul.f32 %v2184, %v1121
        %v2203 = vmul.f32 %v2184, %v1123
        %v2204 = vmul.f32 %v2185, %v1121
        %v2205 = vmul.f32 %v2185, %v1123
        %v2206 = vmul.f32 %v2186, %v1121
        %v2207 = vmul.f32 %v2186, %v1123
        %v2208 = vmul.f32 %v2187, %v1121
        %v2209 = vmul.f32 %v2187, %v1123
        %v2210 = vmul.f32 %v2188, %v1121
        %v2211 = vmul.f32 %v2188, %v1123
        %v2212 = vmul.f32 %v2189, %v1121
        %v2213 = vmul.f32 %v2189, %v1123
        %v2214 = vmul.f32 %v2198, 1.442695
        %v2215 = vpow.pop %v2214
        %v2216 = vmul.f32 %v2199, 1.442695
        %v2217 = vpow.pop %v2216
        %v2218 = vmul.f32 %v2200, 1.442695
        %v2219 = vpow.pop %v2218
        %v2220 = vmul.f32 %v2201, 1.442695
        %v2221 = vpow.pop %v2220
        %v2222 = vmul.f32 %v2202, 1.442695
        %v2223 = vpow.pop %v2222
        %v2224 = vmul.f32 %v2203, 1.442695
        %v2225 = vpow.pop %v2224
        %v2226 = vmul.f32 %v2204, 1.442695
        %v2227 = vpow.pop %v2226
        %v2228 = vmul.f32 %v2205, 1.442695
        %v2229 = vpow.pop %v2228
        %v2230 = vmul.f32 %v2206, 1.442695
        %v2231 = vpow.pop %v2230
        %v2232 = vmul.f32 %v2207, 1.442695
        %v2233 = vpow.pop %v2232
        %v2234 = vmul.f32 %v2208, 1.442695
        %v2235 = vpow.pop %v2234
        %v2236 = vmul.f32 %v2209, 1.442695
        %v2237 = vpow.pop %v2236
        %v2238 = vmul.f32 %v2210, 1.442695
        %v2239 = vpow.pop %v2238
        %v2240 = vmul.f32 %v2211, 1.442695
        %v2241 = vpow.pop %v2240
        %v2242 = vmul.f32 %v2212, 1.442695
        %v2243 = vpow.pop %v2242
        %v2244 = vmul.f32 %v2213, 1.442695
        %v2245 = vpow.pop %v2244
        %2246 = vst [vmem:[#allocation4] sm:$0xff] %v2215
        %2247 = vst [vmem:[#allocation4 + $0x8] sm:$0xff] %v2217
        %2248 = vst [vmem:[#allocation4 + $0x10] sm:$0xff] %v2219
        %2249 = vst [vmem:[#allocation4 + $0x18] sm:$0xff] %v2221
        %2250 = vst [vmem:[#allocation4 + $0x20] sm:$0xff] %v2223
        %2251 = vst [vmem:[#allocation4 + $0x28] sm:$0xff] %v2225
        %2252 = vst [vmem:[#allocation4 + $0x30] sm:$0xff] %v2227
        %2253 = vst [vmem:[#allocation4 + $0x38] sm:$0xff] %v2229
        %2254 = vst [vmem:[#allocation4 + $0x40] sm:$0xff] %v2231
        %2255 = vst [vmem:[#allocation4 + $0x48] sm:$0xff] %v2233
        %2256 = vst [vmem:[#allocation4 + $0x50] sm:$0xff] %v2235
        %2257 = vst [vmem:[#allocation4 + $0x58] sm:$0xff] %v2237
        %2258 = vst [vmem:[#allocation4 + $0x60] sm:$0xff] %v2239
        %2259 = vst [vmem:[#allocation4 + $0x68] sm:$0xff] %v2241
        %2260 = vst [vmem:[#allocation4 + $0x70] sm:$0xff] %v2243
        %2261 = vst [vmem:[#allocation4 + $0x78] sm:$0xff] %v2245
        %v2263 = vrot.slane %v1138, 1
        %v2264 = vrot.slane %v1138, 2
        %v2265 = vrot.slane %v1138, 3
        %v2266 = vrot.slane %v1138, 4
        %v2267 = vrot.slane %v1138, 5
        %v2268 = vrot.slane %v1138, 6
        %v2269 = vrot.slane %v1138, 7
        %v2270 = vperm.slane %v1138, 0
        %v2271 = vperm.slane %v2263, 0
        %v2272 = vperm.slane %v2264, 0
        %v2273 = vperm.slane %v2265, 0
        %v2274 = vperm.slane %v2266, 0
        %v2275 = vperm.slane %v2267, 0
        %v2276 = vperm.slane %v2268, 0
        %v2277 = vperm.slane %v2269, 0
        %v2286 = vmul.f32 %v1233, %v2270
        %v2287 = vmul.f32 %v1239, %v2270
        %v2288 = vmul.f32 %v1246, %v2271
        %v2289 = vmul.f32 %v1252, %v2271
        %v2290 = vmul.f32 %v1259, %v2272
        %v2291 = vmul.f32 %v1265, %v2272
        %v2292 = vmul.f32 %v1272, %v2273
        %v2293 = vmul.f32 %v1278, %v2273
        %v2294 = vmul.f32 %v1285, %v2274
        %v2295 = vmul.f32 %v1291, %v2274
        %v2296 = vmul.f32 %v1298, %v2275
        %v2297 = vmul.f32 %v1304, %v2275
        %v2298 = vmul.f32 %v1311, %v2276
        %v2299 = vmul.f32 %v1317, %v2276
        %v2300 = vmul.f32 %v1324, %v2277
        %v2301 = vmul.f32 %v1330, %v2277
        %v2302 = vpack.c.bf16 %v2286, %v2286
        %v2303 = vpack.c.bf16 %v2287, %v2287
        %v2304 = vpack.c.bf16 %v2288, %v2288
        %v2305 = vpack.c.bf16 %v2289, %v2289
        %v2306 = vpack.c.bf16 %v2290, %v2290
        %v2307 = vpack.c.bf16 %v2291, %v2291
        %v2308 = vpack.c.bf16 %v2292, %v2292
        %v2309 = vpack.c.bf16 %v2293, %v2293
        %v2310 = vpack.c.bf16 %v2294, %v2294
        %v2311 = vpack.c.bf16 %v2295, %v2295
        %v2312 = vpack.c.bf16 %v2296, %v2296
        %v2313 = vpack.c.bf16 %v2297, %v2297
        %v2314 = vpack.c.bf16 %v2298, %v2298
        %v2315 = vpack.c.bf16 %v2299, %v2299
        %v2316 = vpack.c.bf16 %v2300, %v2300
        %v2317 = vpack.c.bf16 %v2301, %v2301
        %2318 = vst [vmem:[#allocation5] sm:$0xf] %v2302
        %2319 = vst [vmem:[#allocation5 + $0x4] sm:$0xf] %v2303
        %2320 = vst [vmem:[#allocation5 + $0x8] sm:$0xf] %v2304
        %2321 = vst [vmem:[#allocation5 + $0xc] sm:$0xf] %v2305
        %2322 = vst [vmem:[#allocation5 + $0x10] sm:$0xf] %v2306
        %2323 = vst [vmem:[#allocation5 + $0x14] sm:$0xf] %v2307
        %2324 = vst [vmem:[#allocation5 + $0x18] sm:$0xf] %v2308
        %2325 = vst [vmem:[#allocation5 + $0x1c] sm:$0xf] %v2309
        %2326 = vst [vmem:[#allocation5 + $0x20] sm:$0xf] %v2310
        %2327 = vst [vmem:[#allocation5 + $0x24] sm:$0xf] %v2311
        %2328 = vst [vmem:[#allocation5 + $0x28] sm:$0xf] %v2312
        %2329 = vst [vmem:[#allocation5 + $0x2c] sm:$0xf] %v2313
        %2330 = vst [vmem:[#allocation5 + $0x30] sm:$0xf] %v2314
        %2331 = vst [vmem:[#allocation5 + $0x34] sm:$0xf] %v2315
        %2332 = vst [vmem:[#allocation5 + $0x38] sm:$0xf] %v2316
        %2333 = vst [vmem:[#allocation5 + $0x3c] sm:$0xf] %v2317
        %v2334 = vld [vmem:[#allocation2 + $0x8] sm:$0xff]
        %v2335 = vld [vmem:[#allocation2 + $0x18] sm:$0xff]
        %v2336 = vld [vmem:[#allocation4] sm:$0xff]
        %v2337 = vld [vmem:[#allocation4 + $0x8] sm:$0xff]
        %v2338 = vmul.f32 %v2336, %v2334
        %v2339 = vmul.f32 %v2337, %v2335
        %v2340 = vld [vmem:[#allocation5] sm:$0xf]
        %v2341 = vld [vmem:[#allocation5 + $0x4] sm:$0xf]
        %v2342 = vunpack.c.l.bf16 %v2340
        %v2343 = vunpack.c.l.bf16 %v2341
        %v2344 = vadd.f32 %v2338, %v2342
        %v2345 = vadd.f32 %v2339, %v2343
        %v2346 = vpack.c.bf16 %v2344, %v2344
        %v2347 = vpack.c.bf16 %v2345, %v2345
        %2348 = vst [vmem:[#allocation6] sm:$0xf] %v2346
        %2349 = vst [vmem:[#allocation6 + $0x4] sm:$0xf] %v2347
        %v2350 = vld [vmem:[%s1419] sm:$0xff]
        %v2351 = vld [vmem:[%s1419 + $0x8] sm:$0xff]
        %v2352 = vmul.f32 %v2350, %v2344
        %v2353 = vmul.f32 %v2351, %v2345
        %v2354 = vld [vmem:[%s1424] sm:$0xf]
        %v2355 = vld [vmem:[%s1424 + $0x4] sm:$0xf]
        %v2356 = vunpack.c.l.bf16 %v2354
        %v2357 = vunpack.c.l.bf16 %v2355
        %v2358 = vadd.f32 %v2352, %v2356
        %v2359 = vadd.f32 %v2353, %v2357
        %v2360 = vpack.c.bf16 %v2358, %v2358
        %v2361 = vpack.c.bf16 %v2359, %v2359
        %2362 = vst [vmem:[%s1433] sm:$0xf] %v2360
        %2363 = vst [vmem:[%s1433 + $0x4] sm:$0xf] %v2361
        %v2364 = vld [vmem:[%s1436] sm:$0xff]
        %v2365 = vld [vmem:[%s1436 + $0x8] sm:$0xff]
        %v2366 = vmul.f32 %v2364, %v2358
        %v2367 = vmul.f32 %v2365, %v2359
        %v2368 = vld [vmem:[%s1441] sm:$0xf]
        %v2369 = vld [vmem:[%s1441 + $0x4] sm:$0xf]
        %v2370 = vunpack.c.l.bf16 %v2368
        %v2371 = vunpack.c.l.bf16 %v2369
        %v2372 = vadd.f32 %v2366, %v2370
        %v2373 = vadd.f32 %v2367, %v2371
        %v2374 = vpack.c.bf16 %v2372, %v2372
        %v2375 = vpack.c.bf16 %v2373, %v2373
        %2376 = vst [vmem:[%s1450] sm:$0xf] %v2374
        %2377 = vst [vmem:[%s1450 + $0x4] sm:$0xf] %v2375
        %v2378 = vld [vmem:[%s1453] sm:$0xff]
        %v2379 = vld [vmem:[%s1453 + $0x8] sm:$0xff]
        %v2380 = vmul.f32 %v2378, %v2372
        %v2381 = vmul.f32 %v2379, %v2373
        %v2382 = vld [vmem:[%s1458] sm:$0xf]
        %v2383 = vld [vmem:[%s1458 + $0x4] sm:$0xf]
        %v2384 = vunpack.c.l.bf16 %v2382
        %v2385 = vunpack.c.l.bf16 %v2383
        %v2386 = vadd.f32 %v2380, %v2384
        %v2387 = vadd.f32 %v2381, %v2385
        %v2388 = vpack.c.bf16 %v2386, %v2386
        %v2389 = vpack.c.bf16 %v2387, %v2387
        %2390 = vst [vmem:[%s1467] sm:$0xf] %v2388
        %2391 = vst [vmem:[%s1467 + $0x4] sm:$0xf] %v2389
        %v2392 = vld [vmem:[%s1470] sm:$0xff]
        %v2393 = vld [vmem:[%s1470 + $0x8] sm:$0xff]
        %v2394 = vmul.f32 %v2392, %v2386
        %v2395 = vmul.f32 %v2393, %v2387
        %v2396 = vld [vmem:[%s1475] sm:$0xf]
        %v2397 = vld [vmem:[%s1475 + $0x4] sm:$0xf]
        %v2398 = vunpack.c.l.bf16 %v2396
        %v2399 = vunpack.c.l.bf16 %v2397
        %v2400 = vadd.f32 %v2394, %v2398
        %v2401 = vadd.f32 %v2395, %v2399
        %v2402 = vpack.c.bf16 %v2400, %v2400
        %v2403 = vpack.c.bf16 %v2401, %v2401
        %2404 = vst [vmem:[%s1484] sm:$0xf] %v2402
        %2405 = vst [vmem:[%s1484 + $0x4] sm:$0xf] %v2403
        %v2406 = vld [vmem:[%s1487] sm:$0xff]
        %v2407 = vld [vmem:[%s1487 + $0x8] sm:$0xff]
        %v2408 = vmul.f32 %v2406, %v2400
        %v2409 = vmul.f32 %v2407, %v2401
        %v2410 = vld [vmem:[%s1492] sm:$0xf]
        %v2411 = vld [vmem:[%s1492 + $0x4] sm:$0xf]
        %v2412 = vunpack.c.l.bf16 %v2410
        %v2413 = vunpack.c.l.bf16 %v2411
        %v2414 = vadd.f32 %v2408, %v2412
        %v2415 = vadd.f32 %v2409, %v2413
        %v2416 = vpack.c.bf16 %v2414, %v2414
        %v2417 = vpack.c.bf16 %v2415, %v2415
        %2418 = vst [vmem:[%s1501] sm:$0xf] %v2416
        %2419 = vst [vmem:[%s1501 + $0x4] sm:$0xf] %v2417
        %v2420 = vld [vmem:[%s1504] sm:$0xff]
        %v2421 = vld [vmem:[%s1504 + $0x8] sm:$0xff]
        %v2422 = vmul.f32 %v2420, %v2414
        %v2423 = vmul.f32 %v2421, %v2415
        %v2424 = vld [vmem:[%s1509] sm:$0xf]
        %v2425 = vld [vmem:[%s1509 + $0x4] sm:$0xf]
        %v2426 = vunpack.c.l.bf16 %v2424
        %v2427 = vunpack.c.l.bf16 %v2425
        %v2428 = vadd.f32 %v2422, %v2426
        %v2429 = vadd.f32 %v2423, %v2427
        %v2430 = vpack.c.bf16 %v2428, %v2428
        %v2431 = vpack.c.bf16 %v2429, %v2429
        %2432 = vst [vmem:[%s1518] sm:$0xf] %v2430
        %2433 = vst [vmem:[%s1518 + $0x4] sm:$0xf] %v2431
        %v2434 = vld [vmem:[%s1521] sm:$0xff]
        %v2435 = vld [vmem:[%s1521 + $0x8] sm:$0xff]
        %v2436 = vmul.f32 %v2434, %v2428
        %v2437 = vmul.f32 %v2435, %v2429
        %v2438 = vld [vmem:[%s1526] sm:$0xf]
        %v2439 = vld [vmem:[%s1526 + $0x4] sm:$0xf]
        %v2440 = vunpack.c.l.bf16 %v2438
        %v2441 = vunpack.c.l.bf16 %v2439
        %v2442 = vadd.f32 %v2436, %v2440
        %v2443 = vadd.f32 %v2437, %v2441
        %v2444 = vpack.c.bf16 %v2442, %v2442
        %v2445 = vpack.c.bf16 %v2443, %v2443
        %2446 = vst [vmem:[%s1535] sm:$0xf] %v2444
        %2447 = vst [vmem:[%s1535 + $0x4] sm:$0xf] %v2445
        %2448 = vst [vmem:[#allocation2 + $0x8] sm:$0xff] %v2442
        %2449 = vst [vmem:[#allocation2 + $0x18] sm:$0xff] %v2443
        %v2450 = vld [vmem:[#allocation6] sm:$0x1]
        %v2451 = vld [vmem:[#allocation6 + $0x8] sm:$0x1]
        %v2452 = vld [vmem:[#allocation6 + $0x10] sm:$0x1]
        %v2453 = vld [vmem:[#allocation6 + $0x18] sm:$0x1]
        %v2454 = vld [vmem:[#allocation6 + $0x20] sm:$0x1]
        %v2455 = vld [vmem:[#allocation6 + $0x28] sm:$0x1]
        %v2456 = vld [vmem:[#allocation6 + $0x30] sm:$0x1]
        %v2457 = vld [vmem:[#allocation6 + $0x38] sm:$0x1]
        %v2458 = vunpack.c.l.bf16 %v2450
        %v2459 = vunpack.c.l.bf16 %v2451
        %v2460 = vunpack.c.l.bf16 %v2452
        %v2461 = vunpack.c.l.bf16 %v2453
        %v2462 = vunpack.c.l.bf16 %v2454
        %v2463 = vunpack.c.l.bf16 %v2455
        %v2464 = vunpack.c.l.bf16 %v2456
        %v2465 = vunpack.c.l.bf16 %v2457
        %v2474 = vrot.slane %v2459, 7
        %v2475 = vsel %vm1570, %v2474, %v2458
        %v2476 = vrot.slane %v2460, 6
        %v2477 = vsel %vm1573, %v2476, %v2475
        %v2478 = vrot.slane %v2461, 5
        %v2479 = vsel %vm1576, %v2478, %v2477
        %v2480 = vrot.slane %v2462, 4
        %v2481 = vsel %vm1579, %v2480, %v2479
        %v2482 = vrot.slane %v2463, 3
        %v2483 = vsel %vm1582, %v2482, %v2481
        %v2484 = vrot.slane %v2464, 2
        %v2485 = vsel %vm1585, %v2484, %v2483
        %v2486 = vrot.slane %v2465, 1
        %v2487 = vsel %vm1588, %v2486, %v2485
        %v2489 = vmul.f32 %v1559, %v2487
        %v2490 = vrot.slane %v2458, 1
        %v2491 = vsel %vm1570, %v2459, %v2490
        %v2492 = vrot.slane %v2460, 7
        %v2493 = vsel %vm1573, %v2492, %v2491
        %v2494 = vrot.slane %v2461, 6
        %v2495 = vsel %vm1576, %v2494, %v2493
        %v2496 = vrot.slane %v2462, 5
        %v2497 = vsel %vm1579, %v2496, %v2495
        %v2498 = vrot.slane %v2463, 4
        %v2499 = vsel %vm1582, %v2498, %v2497
        %v2500 = vrot.slane %v2464, 3
        %v2501 = vsel %vm1585, %v2500, %v2499
        %v2502 = vrot.slane %v2465, 2
        %v2503 = vsel %vm1588, %v2502, %v2501
        %v2505 = vmul.f32 %v1594, %v2503
        %v2506 = vadd.f32 %v2489, %v2505
        %v2507 = vld [vmem:[#allocation6] sm:$0x2]
        %v2508 = vld [vmem:[#allocation6 + $0x8] sm:$0x2]
        %v2509 = vld [vmem:[#allocation6 + $0x10] sm:$0x2]
        %v2510 = vld [vmem:[#allocation6 + $0x18] sm:$0x2]
        %v2511 = vld [vmem:[#allocation6 + $0x20] sm:$0x2]
        %v2512 = vld [vmem:[#allocation6 + $0x28] sm:$0x2]
        %v2513 = vld [vmem:[#allocation6 + $0x30] sm:$0x2]
        %v2514 = vld [vmem:[#allocation6 + $0x38] sm:$0x2]
        %v2515 = vunpack.c.l.bf16 %v2507
        %v2516 = vunpack.c.l.bf16 %v2508
        %v2517 = vunpack.c.l.bf16 %v2509
        %v2518 = vunpack.c.l.bf16 %v2510
        %v2519 = vunpack.c.l.bf16 %v2511
        %v2520 = vunpack.c.l.bf16 %v2512
        %v2521 = vunpack.c.l.bf16 %v2513
        %v2522 = vunpack.c.l.bf16 %v2514
        %v2531 = vrot.slane %v2515, 2
        %v2532 = vrot.slane %v2516, 1
        %v2533 = vsel %vm1570, %v2532, %v2531
        %v2534 = vsel %vm1573, %v2517, %v2533
        %v2535 = vrot.slane %v2518, 7
        %v2536 = vsel %vm1576, %v2535, %v2534
        %v2537 = vrot.slane %v2519, 6
        %v2538 = vsel %vm1579, %v2537, %v2536
        %v2539 = vrot.slane %v2520, 5
        %v2540 = vsel %vm1582, %v2539, %v2538
        %v2541 = vrot.slane %v2521, 4
        %v2542 = vsel %vm1585, %v2541, %v2540
        %v2543 = vrot.slane %v2522, 3
        %v2544 = vsel %vm1588, %v2543, %v2542
        %v2546 = vmul.f32 %v1631, %v2544
        %v2547 = vadd.f32 %v2506, %v2546
        %v2548 = vrot.slane %v2515, 3
        %v2549 = vrot.slane %v2516, 2
        %v2550 = vsel %vm1570, %v2549, %v2548
        %v2551 = vrot.slane %v2517, 1
        %v2552 = vsel %vm1573, %v2551, %v2550
        %v2553 = vsel %vm1576, %v2518, %v2552
        %v2554 = vrot.slane %v2519, 7
        %v2555 = vsel %vm1579, %v2554, %v2553
        %v2556 = vrot.slane %v2520, 6
        %v2557 = vsel %vm1582, %v2556, %v2555
        %v2558 = vrot.slane %v2521, 5
        %v2559 = vsel %vm1585, %v2558, %v2557
        %v2560 = vrot.slane %v2522, 4
        %v2561 = vsel %vm1588, %v2560, %v2559
        %v2563 = vmul.f32 %v1660, %v2561
        %v2564 = vadd.f32 %v2547, %v2563
        %v2565 = vld [vmem:[#allocation6] sm:$0x4]
        %v2566 = vld [vmem:[#allocation6 + $0x8] sm:$0x4]
        %v2567 = vld [vmem:[#allocation6 + $0x10] sm:$0x4]
        %v2568 = vld [vmem:[#allocation6 + $0x18] sm:$0x4]
        %v2569 = vld [vmem:[#allocation6 + $0x20] sm:$0x4]
        %v2570 = vld [vmem:[#allocation6 + $0x28] sm:$0x4]
        %v2571 = vld [vmem:[#allocation6 + $0x30] sm:$0x4]
        %v2572 = vld [vmem:[#allocation6 + $0x38] sm:$0x4]
        %v2573 = vunpack.c.l.bf16 %v2565
        %v2574 = vunpack.c.l.bf16 %v2566
        %v2575 = vunpack.c.l.bf16 %v2567
        %v2576 = vunpack.c.l.bf16 %v2568
        %v2577 = vunpack.c.l.bf16 %v2569
        %v2578 = vunpack.c.l.bf16 %v2570
        %v2579 = vunpack.c.l.bf16 %v2571
        %v2580 = vunpack.c.l.bf16 %v2572
        %v2589 = vrot.slane %v2573, 4
        %v2590 = vrot.slane %v2574, 3
        %v2591 = vsel %vm1570, %v2590, %v2589
        %v2592 = vrot.slane %v2575, 2
        %v2593 = vsel %vm1573, %v2592, %v2591
        %v2594 = vrot.slane %v2576, 1
        %v2595 = vsel %vm1576, %v2594, %v2593
        %v2596 = vsel %vm1579, %v2577, %v2595
        %v2597 = vrot.slane %v2578, 7
        %v2598 = vsel %vm1582, %v2597, %v2596
        %v2599 = vrot.slane %v2579, 6
        %v2600 = vsel %vm1585, %v2599, %v2598
        %v2601 = vrot.slane %v2580, 5
        %v2602 = vsel %vm1588, %v2601, %v2600
        %v2604 = vmul.f32 %v1697, %v2602
        %v2605 = vadd.f32 %v2564, %v2604
        %v2606 = vrot.slane %v2573, 5
        %v2607 = vrot.slane %v2574, 4
        %v2608 = vsel %vm1570, %v2607, %v2606
        %v2609 = vrot.slane %v2575, 3
        %v2610 = vsel %vm1573, %v2609, %v2608
        %v2611 = vrot.slane %v2576, 2
        %v2612 = vsel %vm1576, %v2611, %v2610
        %v2613 = vrot.slane %v2577, 1
        %v2614 = vsel %vm1579, %v2613, %v2612
        %v2615 = vsel %vm1582, %v2578, %v2614
        %v2616 = vrot.slane %v2579, 7
        %v2617 = vsel %vm1585, %v2616, %v2615
        %v2618 = vrot.slane %v2580, 6
        %v2619 = vsel %vm1588, %v2618, %v2617
        %v2621 = vmul.f32 %v1726, %v2619
        %v2622 = vadd.f32 %v2605, %v2621
        %v2623 = vld [vmem:[#allocation6] sm:$0x8]
        %v2624 = vld [vmem:[#allocation6 + $0x8] sm:$0x8]
        %v2625 = vld [vmem:[#allocation6 + $0x10] sm:$0x8]
        %v2626 = vld [vmem:[#allocation6 + $0x18] sm:$0x8]
        %v2627 = vld [vmem:[#allocation6 + $0x20] sm:$0x8]
        %v2628 = vld [vmem:[#allocation6 + $0x28] sm:$0x8]
        %v2629 = vld [vmem:[#allocation6 + $0x30] sm:$0x8]
        %v2630 = vld [vmem:[#allocation6 + $0x38] sm:$0x8]
        %v2631 = vunpack.c.l.bf16 %v2623
        %v2632 = vunpack.c.l.bf16 %v2624
        %v2633 = vunpack.c.l.bf16 %v2625
        %v2634 = vunpack.c.l.bf16 %v2626
        %v2635 = vunpack.c.l.bf16 %v2627
        %v2636 = vunpack.c.l.bf16 %v2628
        %v2637 = vunpack.c.l.bf16 %v2629
        %v2638 = vunpack.c.l.bf16 %v2630
        %v2647 = vrot.slane %v2631, 6
        %v2648 = vrot.slane %v2632, 5
        %v2649 = vsel %vm1570, %v2648, %v2647
        %v2650 = vrot.slane %v2633, 4
        %v2651 = vsel %vm1573, %v2650, %v2649
        %v2652 = vrot.slane %v2634, 3
        %v2653 = vsel %vm1576, %v2652, %v2651
        %v2654 = vrot.slane %v2635, 2
        %v2655 = vsel %vm1579, %v2654, %v2653
        %v2656 = vrot.slane %v2636, 1
        %v2657 = vsel %vm1582, %v2656, %v2655
        %v2658 = vsel %vm1585, %v2637, %v2657
        %v2659 = vrot.slane %v2638, 7
        %v2660 = vsel %vm1588, %v2659, %v2658
        %v2662 = vmul.f32 %v1763, %v2660
        %v2663 = vadd.f32 %v2622, %v2662
        %v2664 = vrot.slane %v2631, 7
        %v2665 = vrot.slane %v2632, 6
        %v2666 = vsel %vm1570, %v2665, %v2664
        %v2667 = vrot.slane %v2633, 5
        %v2668 = vsel %vm1573, %v2667, %v2666
        %v2669 = vrot.slane %v2634, 4
        %v2670 = vsel %vm1576, %v2669, %v2668
        %v2671 = vrot.slane %v2635, 3
        %v2672 = vsel %vm1579, %v2671, %v2670
        %v2673 = vrot.slane %v2636, 2
        %v2674 = vsel %vm1582, %v2673, %v2672
        %v2675 = vrot.slane %v2637, 1
        %v2676 = vsel %vm1585, %v2675, %v2674
        %v2677 = vsel %vm1588, %v2638, %v2676
        %v2679 = vmul.f32 %v1792, %v2677
        %v2680 = vadd.f32 %v2663, %v2679
        %v2681 = vld [vmem:[#allocation6 + $0x4] sm:$0x1]
        %v2682 = vld [vmem:[#allocation6 + $0xc] sm:$0x1]
        %v2683 = vld [vmem:[#allocation6 + $0x14] sm:$0x1]
        %v2684 = vld [vmem:[#allocation6 + $0x1c] sm:$0x1]
        %v2685 = vld [vmem:[#allocation6 + $0x24] sm:$0x1]
        %v2686 = vld [vmem:[#allocation6 + $0x2c] sm:$0x1]
        %v2687 = vld [vmem:[#allocation6 + $0x34] sm:$0x1]
        %v2688 = vld [vmem:[#allocation6 + $0x3c] sm:$0x1]
        %v2689 = vunpack.c.l.bf16 %v2681
        %v2690 = vunpack.c.l.bf16 %v2682
        %v2691 = vunpack.c.l.bf16 %v2683
        %v2692 = vunpack.c.l.bf16 %v2684
        %v2693 = vunpack.c.l.bf16 %v2685
        %v2694 = vunpack.c.l.bf16 %v2686
        %v2695 = vunpack.c.l.bf16 %v2687
        %v2696 = vunpack.c.l.bf16 %v2688
        %v2705 = vrot.slane %v2690, 7
        %v2706 = vsel %vm1570, %v2705, %v2689
        %v2707 = vrot.slane %v2691, 6
        %v2708 = vsel %vm1573, %v2707, %v2706
        %v2709 = vrot.slane %v2692, 5
        %v2710 = vsel %vm1576, %v2709, %v2708
        %v2711 = vrot.slane %v2693, 4
        %v2712 = vsel %vm1579, %v2711, %v2710
        %v2713 = vrot.slane %v2694, 3
        %v2714 = vsel %vm1582, %v2713, %v2712
        %v2715 = vrot.slane %v2695, 2
        %v2716 = vsel %vm1585, %v2715, %v2714
        %v2717 = vrot.slane %v2696, 1
        %v2718 = vsel %vm1588, %v2717, %v2716
        %v2720 = vmul.f32 %v1829, %v2718
        %v2721 = vadd.f32 %v2680, %v2720
        %v2722 = vrot.slane %v2689, 1
        %v2723 = vsel %vm1570, %v2690, %v2722
        %v2724 = vrot.slane %v2691, 7
        %v2725 = vsel %vm1573, %v2724, %v2723
        %v2726 = vrot.slane %v2692, 6
        %v2727 = vsel %vm1576, %v2726, %v2725
        %v2728 = vrot.slane %v2693, 5
        %v2729 = vsel %vm1579, %v2728, %v2727
        %v2730 = vrot.slane %v2694, 4
        %v2731 = vsel %vm1582, %v2730, %v2729
        %v2732 = vrot.slane %v2695, 3
        %v2733 = vsel %vm1585, %v2732, %v2731
        %v2734 = vrot.slane %v2696, 2
        %v2735 = vsel %vm1588, %v2734, %v2733
        %v2737 = vmul.f32 %v1858, %v2735
        %v2738 = vadd.f32 %v2721, %v2737
        %v2739 = vld [vmem:[#allocation6 + $0x4] sm:$0x2]
        %v2740 = vld [vmem:[#allocation6 + $0xc] sm:$0x2]
        %v2741 = vld [vmem:[#allocation6 + $0x14] sm:$0x2]
        %v2742 = vld [vmem:[#allocation6 + $0x1c] sm:$0x2]
        %v2743 = vld [vmem:[#allocation6 + $0x24] sm:$0x2]
        %v2744 = vld [vmem:[#allocation6 + $0x2c] sm:$0x2]
        %v2745 = vld [vmem:[#allocation6 + $0x34] sm:$0x2]
        %v2746 = vld [vmem:[#allocation6 + $0x3c] sm:$0x2]
        %v2747 = vunpack.c.l.bf16 %v2739
        %v2748 = vunpack.c.l.bf16 %v2740
        %v2749 = vunpack.c.l.bf16 %v2741
        %v2750 = vunpack.c.l.bf16 %v2742
        %v2751 = vunpack.c.l.bf16 %v2743
        %v2752 = vunpack.c.l.bf16 %v2744
        %v2753 = vunpack.c.l.bf16 %v2745
        %v2754 = vunpack.c.l.bf16 %v2746
        %v2763 = vrot.slane %v2747, 2
        %v2764 = vrot.slane %v2748, 1
        %v2765 = vsel %vm1570, %v2764, %v2763
        %v2766 = vsel %vm1573, %v2749, %v2765
        %v2767 = vrot.slane %v2750, 7
        %v2768 = vsel %vm1576, %v2767, %v2766
        %v2769 = vrot.slane %v2751, 6
        %v2770 = vsel %vm1579, %v2769, %v2768
        %v2771 = vrot.slane %v2752, 5
        %v2772 = vsel %vm1582, %v2771, %v2770
        %v2773 = vrot.slane %v2753, 4
        %v2774 = vsel %vm1585, %v2773, %v2772
        %v2775 = vrot.slane %v2754, 3
        %v2776 = vsel %vm1588, %v2775, %v2774
        %v2778 = vmul.f32 %v1895, %v2776
        %v2779 = vadd.f32 %v2738, %v2778
        %v2780 = vrot.slane %v2747, 3
        %v2781 = vrot.slane %v2748, 2
        %v2782 = vsel %vm1570, %v2781, %v2780
        %v2783 = vrot.slane %v2749, 1
        %v2784 = vsel %vm1573, %v2783, %v2782
        %v2785 = vsel %vm1576, %v2750, %v2784
        %v2786 = vrot.slane %v2751, 7
        %v2787 = vsel %vm1579, %v2786, %v2785
        %v2788 = vrot.slane %v2752, 6
        %v2789 = vsel %vm1582, %v2788, %v2787
        %v2790 = vrot.slane %v2753, 5
        %v2791 = vsel %vm1585, %v2790, %v2789
        %v2792 = vrot.slane %v2754, 4
        %v2793 = vsel %vm1588, %v2792, %v2791
        %v2795 = vmul.f32 %v1924, %v2793
        %v2796 = vadd.f32 %v2779, %v2795
        %v2797 = vld [vmem:[#allocation6 + $0x4] sm:$0x4]
        %v2798 = vld [vmem:[#allocation6 + $0xc] sm:$0x4]
        %v2799 = vld [vmem:[#allocation6 + $0x14] sm:$0x4]
        %v2800 = vld [vmem:[#allocation6 + $0x1c] sm:$0x4]
        %v2801 = vld [vmem:[#allocation6 + $0x24] sm:$0x4]
        %v2802 = vld [vmem:[#allocation6 + $0x2c] sm:$0x4]
        %v2803 = vld [vmem:[#allocation6 + $0x34] sm:$0x4]
        %v2804 = vld [vmem:[#allocation6 + $0x3c] sm:$0x4]
        %v2805 = vunpack.c.l.bf16 %v2797
        %v2806 = vunpack.c.l.bf16 %v2798
        %v2807 = vunpack.c.l.bf16 %v2799
        %v2808 = vunpack.c.l.bf16 %v2800
        %v2809 = vunpack.c.l.bf16 %v2801
        %v2810 = vunpack.c.l.bf16 %v2802
        %v2811 = vunpack.c.l.bf16 %v2803
        %v2812 = vunpack.c.l.bf16 %v2804
        %v2821 = vrot.slane %v2805, 4
        %v2822 = vrot.slane %v2806, 3
        %v2823 = vsel %vm1570, %v2822, %v2821
        %v2824 = vrot.slane %v2807, 2
        %v2825 = vsel %vm1573, %v2824, %v2823
        %v2826 = vrot.slane %v2808, 1
        %v2827 = vsel %vm1576, %v2826, %v2825
        %v2828 = vsel %vm1579, %v2809, %v2827
        %v2829 = vrot.slane %v2810, 7
        %v2830 = vsel %vm1582, %v2829, %v2828
        %v2831 = vrot.slane %v2811, 6
        %v2832 = vsel %vm1585, %v2831, %v2830
        %v2833 = vrot.slane %v2812, 5
        %v2834 = vsel %vm1588, %v2833, %v2832
        %v2836 = vmul.f32 %v1961, %v2834
        %v2837 = vadd.f32 %v2796, %v2836
        %v2838 = vrot.slane %v2805, 5
        %v2839 = vrot.slane %v2806, 4
        %v2840 = vsel %vm1570, %v2839, %v2838
        %v2841 = vrot.slane %v2807, 3
        %v2842 = vsel %vm1573, %v2841, %v2840
        %v2843 = vrot.slane %v2808, 2
        %v2844 = vsel %vm1576, %v2843, %v2842
        %v2845 = vrot.slane %v2809, 1
        %v2846 = vsel %vm1579, %v2845, %v2844
        %v2847 = vsel %vm1582, %v2810, %v2846
        %v2848 = vrot.slane %v2811, 7
        %v2849 = vsel %vm1585, %v2848, %v2847
        %v2850 = vrot.slane %v2812, 6
        %v2851 = vsel %vm1588, %v2850, %v2849
        %v2853 = vmul.f32 %v1990, %v2851
        %v2854 = vadd.f32 %v2837, %v2853
        %v2855 = vld [vmem:[#allocation6 + $0x4] sm:$0x8]
        %v2856 = vld [vmem:[#allocation6 + $0xc] sm:$0x8]
        %v2857 = vld [vmem:[#allocation6 + $0x14] sm:$0x8]
        %v2858 = vld [vmem:[#allocation6 + $0x1c] sm:$0x8]
        %v2859 = vld [vmem:[#allocation6 + $0x24] sm:$0x8]
        %v2860 = vld [vmem:[#allocation6 + $0x2c] sm:$0x8]
        %v2861 = vld [vmem:[#allocation6 + $0x34] sm:$0x8]
        %v2862 = vld [vmem:[#allocation6 + $0x3c] sm:$0x8]
        %v2863 = vunpack.c.l.bf16 %v2855
        %v2864 = vunpack.c.l.bf16 %v2856
        %v2865 = vunpack.c.l.bf16 %v2857
        %v2866 = vunpack.c.l.bf16 %v2858
        %v2867 = vunpack.c.l.bf16 %v2859
        %v2868 = vunpack.c.l.bf16 %v2860
        %v2869 = vunpack.c.l.bf16 %v2861
        %v2870 = vunpack.c.l.bf16 %v2862
        %v2879 = vrot.slane %v2863, 6
        %v2880 = vrot.slane %v2864, 5
        %v2881 = vsel %vm1570, %v2880, %v2879
        %v2882 = vrot.slane %v2865, 4
        %v2883 = vsel %vm1573, %v2882, %v2881
        %v2884 = vrot.slane %v2866, 3
        %v2885 = vsel %vm1576, %v2884, %v2883
        %v2886 = vrot.slane %v2867, 2
        %v2887 = vsel %vm1579, %v2886, %v2885
        %v2888 = vrot.slane %v2868, 1
        %v2889 = vsel %vm1582, %v2888, %v2887
        %v2890 = vsel %vm1585, %v2869, %v2889
        %v2891 = vrot.slane %v2870, 7
        %v2892 = vsel %vm1588, %v2891, %v2890
        %v2894 = vmul.f32 %v2027, %v2892
        %v2895 = vadd.f32 %v2854, %v2894
        %v2896 = vrot.slane %v2863, 7
        %v2897 = vrot.slane %v2864, 6
        %v2898 = vsel %vm1570, %v2897, %v2896
        %v2899 = vrot.slane %v2865, 5
        %v2900 = vsel %vm1573, %v2899, %v2898
        %v2901 = vrot.slane %v2866, 4
        %v2902 = vsel %vm1576, %v2901, %v2900
        %v2903 = vrot.slane %v2867, 3
        %v2904 = vsel %vm1579, %v2903, %v2902
        %v2905 = vrot.slane %v2868, 2
        %v2906 = vsel %vm1582, %v2905, %v2904
        %v2907 = vrot.slane %v2869, 1
        %v2908 = vsel %vm1585, %v2907, %v2906
        %v2909 = vsel %vm1588, %v2870, %v2908
        %v2911 = vmul.f32 %v2056, %v2909
        %v2912 = vadd.f32 %v2895, %v2911
        %v2913 = vld [vmem:[#allocation15 + $0x1] sm:$0x1]
        %v2915 = vperm.slane %v2913, 0
        %v2917 = vmul.f32 %v2915, %v853
        %v2918 = vmul.f32 %v2915, %v855
        %v2921 = vrot.slane %v2917, 5
        %v2922 = vrot.slane %v2918, 5
        %v2923 = vsel %vm1128, %v2921, %v2922
        %v2925 = vadd.f32 %v2912, %v2923
        %v2926 = vsub.f32 0.0, %v714
        %v2927 = vmul.f32 %v2926, 1.442695
        %v2928 = vpow.pop %v2927
        %v2929 = vadd.f32 %v2928, 1.0
        %v2930 = vrcp.pop %v2929
        %v2931 = vmul.f32 %v714, %v2930
        %v2932 = vmul.f32 %v2925, %v2931
        %v2933 = vpack.c.bf16 %v2932, %v2932
        %v2934 = vld [vmem:[%s9 + $0x40] sm:$0xf]
        %v2935 = vld [vmem:[%s9 + $0x44] sm:$0xf]
        %v2936 = vld [vmem:[%s9 + $0x48] sm:$0xf]
        %v2937 = vld [vmem:[%s9 + $0x4c] sm:$0xf]
        %v2938 = vld [vmem:[%s9 + $0x50] sm:$0xf]
        %v2939 = vld [vmem:[%s9 + $0x54] sm:$0xf]
        %v2940 = vld [vmem:[%s9 + $0x58] sm:$0xf]
        %v2941 = vld [vmem:[%s9 + $0x5c] sm:$0xf]
        %v2942 = vld [vmem:[%s9 + $0x60] sm:$0xf]
        %v2943 = vld [vmem:[%s9 + $0x64] sm:$0xf]
        %v2944 = vld [vmem:[%s9 + $0x68] sm:$0xf]
        %v2945 = vld [vmem:[%s9 + $0x6c] sm:$0xf]
        %v2946 = vld [vmem:[%s9 + $0x70] sm:$0xf]
        %v2947 = vld [vmem:[%s9 + $0x74] sm:$0xf]
        %v2948 = vld [vmem:[%s9 + $0x78] sm:$0xf]
        %v2949 = vld [vmem:[%s9 + $0x7c] sm:$0xf]
        %v2966 = vunpack.c.l.b16 %v2934
        %v2967 = vunpack.c.l.b16 %v2935
        %v2968 = vunpack.c.l.b16 %v2936
        %v2969 = vunpack.c.l.b16 %v2937
        %v2970 = vunpack.c.l.b16 %v2938
        %v2971 = vunpack.c.l.b16 %v2939
        %v2972 = vunpack.c.l.b16 %v2940
        %v2973 = vunpack.c.l.b16 %v2941
        %v2974 = vunpack.c.l.b16 %v2942
        %v2975 = vunpack.c.l.b16 %v2943
        %v2976 = vunpack.c.l.b16 %v2944
        %v2977 = vunpack.c.l.b16 %v2945
        %v2978 = vunpack.c.l.b16 %v2946
        %v2979 = vunpack.c.l.b16 %v2947
        %v2980 = vunpack.c.l.b16 %v2948
        %v2981 = vunpack.c.l.b16 %v2949
        %v2982 = vpack.c.b16 %v2967, %v2966
        %v2983 = vpack.c.b16 %v2969, %v2968
        %v2984 = vpack.c.b16 %v2971, %v2970
        %v2985 = vpack.c.b16 %v2973, %v2972
        %v2986 = vpack.c.b16 %v2975, %v2974
        %v2987 = vpack.c.b16 %v2977, %v2976
        %v2988 = vpack.c.b16 %v2979, %v2978
        %v2989 = vpack.c.b16 %v2981, %v2980
        %2998 = vmatpush.bf16.msra.mxu0 %v2989
        %2999 = vmatpush.bf16.msra.mxu0 %v2988
        %3000 = vmatpush.bf16.msra.mxu0 %v2987
        %3001 = vmatpush.bf16.msra.mxu0 %v2986
        %3002 = vmatpush.bf16.msra.mxu0 %v2985
        %3003 = vmatpush.bf16.msra.mxu0 %v2984
        %3004 = vmatpush.bf16.msra.mxu0 %v2983
        %3005 = vmatpush.bf16.msra.mxu0 %v2982
        %3006 = vmatmul.bf16.gmra.mxu0 %v2933
        %v3007 = vpop.f32.mrf.mxu0
        %v3008 = vadd.f32 0.0, %v3007
        %v3009 = vpop.f32.mrf.mxu0
        %3010 = vdwg.mxu0
        %v3011 = vld [vmem:[%s451] sm:$0xff]
        %v3012 = vadd.f32 %v3011, %v3008
        %3013 = vst [vmem:[%s451] sm:$0xff] %v3012
        %s3014 = sand.u32 %s266, 1
        %s3015 = scalar_lea.sflag [#allocation9], %s3014
        %s3016 = sand.u32 %s266, 1
        %s3017 = smul.addr %s3016, 8
        %s3018 = scalar_lea.vmem [#allocation16], %s3017
        // Predicated region
        $region85: #{tpu_custom_call.1} parent=59 // pred_check
          %p3019 = pneg %p276
        $region86: #{tpu_custom_call.1} parent=59 // pred_check_branch
          %3021 = sbr.rel (%p3019) target = $region88
        $region87: #{tpu_custom_call.1} parent=59 // pred_region
          %3023 = vsyncadd %s3015, 0
          %s3024 = smul.addr %s31, 2
          %s3025 = sadd.s32 %s32, %s3024
          %s3026 = smul.addr %s3025, 8
          %s3027 = scalar_lea.hbm %s10, %s3026
          %s3029 = sshll.u32 %s3018, 4
          %s3030 = int_to_ptr.vmem [resolvable:$true] %s3029
          %s3031 = sshll.u32 %s3027, 4
          %s3032 = int_to_ptr.hbm [resolvable:$true] %s3031
          %3034 = dma.vmem_to_hbm [thread:$0]  %s3030, 128, %s3032, %s3015
        $region88: #{tpu_custom_call.1} parent=59 // pred_fallthru
          _
      $region60: #{tpu_custom_call.1} parent=5 // pred_fallthru
        _
      %p3035 = scmp.le.s32.totalorder 2, %s22
      // Predicated region
      $region89: #{tpu_custom_call.1} parent=5 // pred_check
        %p3036 = pneg %p3035
      $region90: #{tpu_custom_call.1} parent=5 // pred_check_branch
        %3038 = sbr.rel (%p3036) target = $region92
      $region91: #{tpu_custom_call.1} parent=5 // pred_region
        %s3039 = ssub.s32 %s22, 2
        // Predicated region
        $region93: #{tpu_custom_call.1} parent=91 // pred_check
          %p3040 = pneg %p282
        $region94: #{tpu_custom_call.1} parent=91 // pred_check_branch
          %3042 = sbr.rel (%p3040) target = $region96
        $region95: #{tpu_custom_call.1} parent=91 // pred_region
          %s3043 = sand.u32 %s267, 1
          %s3044 = scalar_lea.sflag [#allocation9], %s3043
          %s3045 = sand.u32 %s267, 1
          %s3046 = smul.addr %s3045, 8
          %s3047 = scalar_lea.vmem [#allocation16], %s3046
          %3049 = dma.done %s3044, 128
        $region96: #{tpu_custom_call.1} parent=91 // pred_fallthru
          _
      $region92: #{tpu_custom_call.1} parent=5 // pred_fallthru
        _
    $region6: #{tpu_custom_call.1} parent=1 // loop_footer
      %s26 = sadd.s32 1, %s22
    $region7: #{tpu_custom_call.1} parent=1 // loop_footer_branch
      %21 = sbr.rel target = $region3
    $region8: #{tpu_custom_call.1} parent=1 // loop_exit
      _
    %3050 = vsyncpa [#allocation8], 1
    %s3051 = scalar_lea.sflag [#allocation8], 1
    %3052 = vsyncpa %s3051, 1
    %3053 = vsyncpa [#allocation11], 1
    %3054 = vsyncpa [#allocation14], 1
    %3055 = vsyncpa [#allocation9], 1
    %s3056 = scalar_lea.sflag [#allocation9], 1
    %3057 = vsyncpa %s3056, 1

</llo_original>
